<compile_context>
chip_gen: v6e
topology: v6e:2x2x1
jax: 0.10.0
libtpu: 0.0.40
codegen_flags: <defaults>
</compile_context>

<pallas_src>
import jax
import jax.numpy as jnp
from jax import lax
from jax.experimental import pallas as pl
from jax.experimental.pallas import tpu as pltpu

NUM_LAYERS = 2


def lstm_kernel(x_ref, wih0_ref, whh0_ref, b0_ref, w1_hbm_ref, b1_ref,
                out_ref, xp1_scr, w1_vmem, w1_sem):
    """Fused 2-layer LSTM over the full sequence, batch=1.

    x_ref:      (T, H)    bf16  input sequence
    wih0_ref:   (H, 4H)   bf16  layer-0 input->gates weights (gate order i,f,g,o)
    whh0_ref:   (H, 4H)   bf16  layer-0 hidden->gates weights
    b0_ref:     (1, 4H)   f32   layer-0 bias_ih + bias_hh
    w1_hbm_ref: (2H, 4H)  bf16  layer-1 stacked [wih1; whh1], lives in HBM
    b1_ref:     (1, 4H)   f32   layer-1 bias_ih + bias_hh
    out_ref:    (T - time_step, H) f32  last-layer hidden states for t >= time_step
    xp1_scr:    (T, 4H)   f32 scratch   layer-0 batched input projection
    w1_vmem:    (2H, 4H)  bf16 scratch  VMEM copy of the stacked layer-1 weights
    w1_sem:     DMA semaphore for the layer-1 weight copy
    """
    T, H = x_ref.shape
    time_step = T - out_ref.shape[0]

    # Kick off the layer-1 weight DMA immediately; it overlaps the batched
    # layer-0 input projection and layer-0's first step below.
    w1_cp = pltpu.make_async_copy(w1_hbm_ref, w1_vmem, w1_sem)
    w1_cp.start()

    # Layer-0 input projection for all timesteps in one bf16 MXU matmul
    # (f32 accumulation), fused with the bias.
    xp1_scr[...] = (
        jnp.dot(x_ref[...], wih0_ref[...], preferred_element_type=jnp.float32)
        + b0_ref[...]
    )

    def gates_to_hc(gates, c):
        # gates: (1, 4H) f32, PyTorch gate order [i, f, g, o]
        i = jax.nn.sigmoid(gates[:, 0 * H:1 * H])
        f = jax.nn.sigmoid(gates[:, 1 * H:2 * H])
        g = jnp.tanh(gates[:, 2 * H:3 * H])
        o = jax.nn.sigmoid(gates[:, 3 * H:4 * H])
        c_new = f * c + i * g
        h_new = o * jnp.tanh(c_new)
        return h_new, c_new

    def layer0_step(t, h, c):
        gates = xp1_scr[pl.ds(t, 1), :] + jnp.dot(
            h.astype(jnp.bfloat16), whh0_ref[...],
            preferred_element_type=jnp.float32)
        return gates_to_hc(gates, c)

    def layer1_step(h_in, h, c):
        # Single fused mat-vec: [h_in | h] @ [wih1; whh1]  (one MXU push,
        # one result read; on v7x the MRB accumulates the full contraction).
        hh = jnp.concatenate([h_in, h], axis=1).astype(jnp.bfloat16)  # (1, 2H)
        gates = jnp.dot(hh, w1_vmem[...],
                        preferred_element_type=jnp.float32) + b1_ref[...]
        return gates_to_hc(gates, c)

    zeros = jnp.zeros((1, H), jnp.float32)

    # Prologue: layer-0 step 0 (h0 = c0 = 0, so the recurrent term vanishes).
    h1, c1 = gates_to_hc(xp1_scr[pl.ds(0, 1), :], zeros)

    # Layer-1 weights must be resident before the first layer-1 step.
    w1_cp.wait()

    h2, c2 = zeros, zeros

    # Wavefront main loop, fully unrolled (Python loop => static indices, so
    # the output-row guard and row offsets are resolved at trace time and the
    # whole recurrence is visible to the LLO scheduler).  At index t, layer-1
    # consumes layer-0's output from step t-1 while layer-0 advances to step
    # t; both depend only on the incoming carry, so their MXU/EUP/VPU work
    # interleaves across VLIW slots.
    # NOTE: at the real T (~35+), switch to lax.fori_loop with unroll in
    # {2,4,8} to bound vreg pressure (v5e is most sensitive).
    for t in range(1, T):
        h2n, c2n = layer1_step(h1, h2, c2)            # layer-1, step t-1
        if t - 1 >= time_step:                        # static guard
            out_ref[pl.ds(t - 1 - time_step, 1), :] = h2n
        h1, c1 = layer0_step(t, h1, c1)               # layer-0, step t
        h2, c2 = h2n, c2n

    # Epilogue: layer-1 step T-1 (always >= time_step since time_step < T).
    h2, c2 = layer1_step(h1, h2, c2)
    out_ref[pl.ds(T - 1 - time_step, 1), :] = h2


def lstm_forward(x, wih, whh, b, time_step):
    """x: (T, 1, H) f32 (seq-major, batch=1) -> (T - time_step, H) f32."""
    T, B, H = x.shape
    assert B == 1, "module implies batch=1 (h0 is (2, 1, H))"
    assert 0 < time_step < T

    # bf16 operands for the MXU; accumulation / state / nonlinearities are f32.
    x_bf = x.reshape(T, H).astype(jnp.bfloat16)
    wih_bf = wih.astype(jnp.bfloat16)
    whh_bf = whh.astype(jnp.bfloat16)
    # Fused layer-1 weights: gates1 = [h_layer0 | h_layer1] @ [wih1; whh1] + b1
    w1_stacked = jnp.concatenate([wih_bf[1], whh_bf[1]], axis=0)  # (2H, 4H)

    n_out = T - time_step

    # Advisory cost estimate (latency-bound mat-vec recurrence):
    #   layer-0 projection 2*T*H*4H, layer-0 recurrent 2*T*H*4H,
    #   layer-1 fused      2*T*2H*4H  -> 32*T*H^2 total.
    flops = int(32 * T * H * H)
    transcendentals = int(2 * T * 5 * H)          # 3 sigmoid + 2 tanh per layer/step
    bytes_accessed = int(
        (x_bf.size + wih_bf[0].size + whh_bf[0].size + w1_stacked.size) * 2
        + b.size * 4 + n_out * H * 4)

    return pl.pallas_call(
        lstm_kernel,
        out_shape=jax.ShapeDtypeStruct((n_out, H), jnp.float32),
        in_specs=[
            pl.BlockSpec(memory_space=pltpu.MemorySpace.VMEM),  # x
            pl.BlockSpec(memory_space=pltpu.MemorySpace.VMEM),  # wih0
            pl.BlockSpec(memory_space=pltpu.MemorySpace.VMEM),  # whh0
            pl.BlockSpec(memory_space=pltpu.MemorySpace.VMEM),  # b0
            pl.BlockSpec(memory_space=pl.ANY),                  # w1 stacked (HBM, manual DMA)
            pl.BlockSpec(memory_space=pltpu.MemorySpace.VMEM),  # b1
        ],
        out_specs=pl.BlockSpec(memory_space=pltpu.MemorySpace.VMEM),
        scratch_shapes=[
            pltpu.VMEM((T, 4 * H), jnp.float32),        # layer-0 input projection
            pltpu.VMEM((2 * H, 4 * H), jnp.bfloat16),   # VMEM home for stacked layer-1 weights
            pltpu.SemaphoreType.DMA,                    # layer-1 weight DMA completion
        ],
        compiler_params=pltpu.CompilerParams(
            # At the real module size (H padded to 640) the bf16 weights are
            # ~13 MB; 32 MiB keeps whole-array residency viable on v5e (16 MiB
            # default) and equals v7x's default scoped limit (do not raise
            # further on the 64 MiB part).
            vmem_limit_bytes=32 * 1024 * 1024,
        ),
        cost_estimate=pl.CostEstimate(
            flops=flops,
            transcendentals=transcendentals,
            bytes_accessed=bytes_accessed,
        ),
    )(x_bf, wih_bf[0], whh_bf[0], b[0], w1_stacked, b[1])


def lstm_ref(x, wih, whh, b, time_step):
    """Pure-JAX reference mirroring the kernel numerics (bf16 operands,
    f32 accumulation / state / nonlinearities)."""
    T, H = x.shape
    hp = lax.Precision.HIGHEST
    q = lambda a: a.astype(jnp.bfloat16).astype(jnp.float32)
    seq = x
    for layer in range(NUM_LAYERS):
        xp = jnp.dot(q(seq), wih[layer], precision=hp) + b[layer]  # (T, 4H)

        def step(carry, xp_t):
            h, c = carry
            gates = xp_t + jnp.dot(q(h), whh[layer], precision=hp)
            i = jax.nn.sigmoid(gates[0 * H:1 * H])
            f = jax.nn.sigmoid(gates[1 * H:2 * H])
            g = jnp.tanh(gates[2 * H:3 * H])
            o = jax.nn.sigmoid(gates[3 * H:4 * H])
            c = f * c + i * g
            h = o * jnp.tanh(c)
            return (h, c), h

        (_, _), seq = lax.scan(step, (jnp.zeros(H), jnp.zeros(H)), xp)
    return seq[time_step:]


if __name__ == "__main__":
    # Small shapes consistent with the module (module itself uses H=sum_h=525,
    # seq>35, batch=1, time_step=35; scaled down here).
    H = 128        # hidden / input size (module: sum_h = 525)
    T = 8          # sequence length
    TIME_STEP = 5  # module: time_step = 35

    key = jax.random.PRNGKey(0)
    kx, kw1, kw2, kb = jax.random.split(key, 4)
    k = 1.0 / jnp.sqrt(jnp.float32(H))  # PyTorch LSTM init range

    x = jax.random.normal(kx, (T, 1, H), jnp.float32)
    wih = jax.random.uniform(kw1, (NUM_LAYERS, H, 4 * H), jnp.float32, -k, k)
    whh = jax.random.uniform(kw2, (NUM_LAYERS, H, 4 * H), jnp.float32, -k, k)
    b = jax.random.uniform(kb, (NUM_LAYERS, 1, 4 * H), jnp.float32, -k, k)

    out = lstm_forward(x, wih, whh, b, TIME_STEP)
    jax.block_until_ready(out)

    # Reference on the same bf16-quantized operands (weights / sequence input).
    q = lambda a: a.astype(jnp.bfloat16).astype(jnp.float32)
    ref = lstm_ref(q(x.reshape(T, H)), q(wih), q(whh), b, TIME_STEP)

    assert out.shape == (T - TIME_STEP, H)
    assert jnp.allclose(out, ref, atol=2e-4, rtol=2e-3), "mismatch vs JAX reference"

    print("KERNEL_OK")
</pallas_src>

<mosaic_0001>
module attributes {stable_mosaic.version = 11 : i64} {
  func.func @lstm_kernel(%arg0: memref<8x128xbf16, #tpu.memory_space<vmem>>, %arg1: memref<128x512xbf16, #tpu.memory_space<vmem>>, %arg2: memref<128x512xbf16, #tpu.memory_space<vmem>>, %arg3: memref<1x512xf32, #tpu.memory_space<vmem>>, %arg4: memref<256x512xbf16, #tpu.memory_space<any>>, %arg5: memref<1x512xf32, #tpu.memory_space<vmem>>, %arg6: memref<3x128xf32, #tpu.memory_space<vmem>>, %arg7: memref<8x512xf32, #tpu.memory_space<vmem>>, %arg8: memref<256x512xbf16, #tpu.memory_space<vmem>>, %arg9: memref<!tpu.dma_semaphore, #tpu.memory_space<semaphore_mem>>) attributes {dimension_semantics = [], scalar_prefetch = 0 : i64, scratch_operands = 3 : i64, tpu.core_type = #tpu.core_type<tc>} {
    tpu.enqueue_dma source(%arg4 : memref<256x512xbf16, #tpu.memory_space<any>>) target(%arg8 : memref<256x512xbf16, #tpu.memory_space<vmem>>) target_semaphore(%arg9 : memref<!tpu.dma_semaphore, #tpu.memory_space<semaphore_mem>>)
    %c0 = arith.constant 0 : index
    %c0_0 = arith.constant 0 : index
    %0 = vector.load %arg0[%c0, %c0_0] : memref<8x128xbf16, #tpu.memory_space<vmem>>, vector<8x128xbf16>
    %c0_1 = arith.constant 0 : index
    %c0_2 = arith.constant 0 : index
    %1 = vector.load %arg1[%c0_1, %c0_2] : memref<128x512xbf16, #tpu.memory_space<vmem>>, vector<128x512xbf16>
    %cst = arith.constant dense<0.000000e+00> : vector<8x512xf32>
    %2 = tpu.matmul %0, %1, %cst {dimension_numbers = #tpu.dot_dimension_numbers<[1], [0], [0], [1], [0, 0, 1, 1], [], []>} : vector<8x128xbf16>, vector<128x512xbf16>, vector<8x512xf32> -> vector<8x512xf32>
    %c0_3 = arith.constant 0 : index
    %c0_4 = arith.constant 0 : index
    %3 = vector.load %arg3[%c0_3, %c0_4] : memref<1x512xf32, #tpu.memory_space<vmem>>, vector<1x512xf32>
    %4 = vector.broadcast %3 : vector<1x512xf32> to vector<8x512xf32>
    %5 = arith.addf %2, %4 : vector<8x512xf32>
    %c0_5 = arith.constant 0 : index
    %c0_6 = arith.constant 0 : index
    %6 = vector.load %arg7[%c0_5, %c0_6] : memref<8x512xf32, #tpu.memory_space<vmem>>, vector<8x512xf32>
    tpu.vector_store %arg7[%c0_5, %c0_6], %5 {strides = array<i32>} : memref<8x512xf32, #tpu.memory_space<vmem>>, vector<8x512xf32>,
    %cst_7 = arith.constant 0.000000e+00 : f32
    %7 = vector.broadcast %cst_7 : f32 to vector<1x128xf32>
    %c0_8 = arith.constant 0 : index
    %c0_9 = arith.constant 0 : index
    %8 = vector.load %arg7[%c0_8, %c0_9] : memref<8x512xf32, #tpu.memory_space<vmem>>, vector<1x512xf32>
    %9 = vector.extract_strided_slice %8 {offsets = [0, 0], sizes = [1, 128], strides = [1, 1]} : vector<1x512xf32> to vector<1x128xf32>
    %10 = arith.negf %9 : vector<1x128xf32>
    %11 = math.exp %10 : vector<1x128xf32>
    %cst_10 = arith.constant 1.000000e+00 : f32
    %12 = vector.broadcast %cst_10 : f32 to vector<1x128xf32>
    %13 = arith.addf %12, %11 : vector<1x128xf32>
    %14 = arith.divf %12, %13 : vector<1x128xf32>
    %15 = vector.extract_strided_slice %8 {offsets = [0, 128], sizes = [1, 128], strides = [1, 1]} : vector<1x512xf32> to vector<1x128xf32>
    %16 = arith.negf %15 : vector<1x128xf32>
    %17 = math.exp %16 : vector<1x128xf32>
    %cst_11 = arith.constant 1.000000e+00 : f32
    %18 = vector.broadcast %cst_11 : f32 to vector<1x128xf32>
    %19 = arith.addf %18, %17 : vector<1x128xf32>
    %20 = arith.divf %18, %19 : vector<1x128xf32>
    %21 = vector.extract_strided_slice %8 {offsets = [0, 256], sizes = [1, 128], strides = [1, 1]} : vector<1x512xf32> to vector<1x128xf32>
    %22 = math.tanh %21 : vector<1x128xf32>
    %23 = vector.extract_strided_slice %8 {offsets = [0, 384], sizes = [1, 128], strides = [1, 1]} : vector<1x512xf32> to vector<1x128xf32>
    %24 = arith.negf %23 : vector<1x128xf32>
    %25 = math.exp %24 : vector<1x128xf32>
    %cst_12 = arith.constant 1.000000e+00 : f32
    %26 = vector.broadcast %cst_12 : f32 to vector<1x128xf32>
    %27 = arith.addf %26, %25 : vector<1x128xf32>
    %28 = arith.divf %26, %27 : vector<1x128xf32>
    %29 = arith.mulf %20, %7 : vector<1x128xf32>
    %30 = arith.mulf %14, %22 : vector<1x128xf32>
    %31 = arith.addf %29, %30 : vector<1x128xf32>
    %32 = math.tanh %31 : vector<1x128xf32>
    %33 = arith.mulf %28, %32 : vector<1x128xf32>
    tpu.wait_dma2 semaphore(%arg9 : memref<!tpu.dma_semaphore, #tpu.memory_space<semaphore_mem>>) src(%arg4 : memref<256x512xbf16, #tpu.memory_space<any>>) dst(%arg8 : memref<256x512xbf16, #tpu.memory_space<vmem>>)
    %34 = tpu.concatenate %33, %7 in 1 : vector<1x128xf32>, vector<1x128xf32> -> vector<1x256xf32>
    %35 = arith.truncf %34 : vector<1x256xf32> to vector<1x256xbf16>
    %c0_13 = arith.constant 0 : index
    %c0_14 = arith.constant 0 : index
    %36 = vector.load %arg8[%c0_13, %c0_14] : memref<256x512xbf16, #tpu.memory_space<vmem>>, vector<256x512xbf16>
    %cst_15 = arith.constant dense<0.000000e+00> : vector<1x512xf32>
    %37 = tpu.matmul %35, %36, %cst_15 {dimension_numbers = #tpu.dot_dimension_numbers<[1], [0], [0], [1], [0, 0, 1, 1], [], []>} : vector<1x256xbf16>, vector<256x512xbf16>, vector<1x512xf32> -> vector<1x512xf32>
    %c0_16 = arith.constant 0 : index
    %c0_17 = arith.constant 0 : index
    %38 = vector.load %arg5[%c0_16, %c0_17] : memref<1x512xf32, #tpu.memory_space<vmem>>, vector<1x512xf32>
    %39 = arith.addf %37, %38 : vector<1x512xf32>
    %40 = vector.extract_strided_slice %39 {offsets = [0, 0], sizes = [1, 128], strides = [1, 1]} : vector<1x512xf32> to vector<1x128xf32>
    %41 = arith.negf %40 : vector<1x128xf32>
    %42 = math.exp %41 : vector<1x128xf32>
    %cst_18 = arith.constant 1.000000e+00 : f32
    %43 = vector.broadcast %cst_18 : f32 to vector<1x128xf32>
    %44 = arith.addf %43, %42 : vector<1x128xf32>
    %45 = arith.divf %43, %44 : vector<1x128xf32>
    %46 = vector.extract_strided_slice %39 {offsets = [0, 128], sizes = [1, 128], strides = [1, 1]} : vector<1x512xf32> to vector<1x128xf32>
    %47 = arith.negf %46 : vector<1x128xf32>
    %48 = math.exp %47 : vector<1x128xf32>
    %cst_19 = arith.constant 1.000000e+00 : f32
    %49 = vector.broadcast %cst_19 : f32 to vector<1x128xf32>
    %50 = arith.addf %49, %48 : vector<1x128xf32>
    %51 = arith.divf %49, %50 : vector<1x128xf32>
    %52 = vector.extract_strided_slice %39 {offsets = [0, 256], sizes = [1, 128], strides = [1, 1]} : vector<1x512xf32> to vector<1x128xf32>
    %53 = math.tanh %52 : vector<1x128xf32>
    %54 = vector.extract_strided_slice %39 {offsets = [0, 384], sizes = [1, 128], strides = [1, 1]} : vector<1x512xf32> to vector<1x128xf32>
    %55 = arith.negf %54 : vector<1x128xf32>
    %56 = math.exp %55 : vector<1x128xf32>
    %cst_20 = arith.constant 1.000000e+00 : f32
    %57 = vector.broadcast %cst_20 : f32 to vector<1x128xf32>
    %58 = arith.addf %57, %56 : vector<1x128xf32>
    %59 = arith.divf %57, %58 : vector<1x128xf32>
    %60 = arith.mulf %51, %7 : vector<1x128xf32>
    %61 = arith.mulf %45, %53 : vector<1x128xf32>
    %62 = arith.addf %60, %61 : vector<1x128xf32>
    %63 = math.tanh %62 : vector<1x128xf32>
    %64 = arith.mulf %59, %63 : vector<1x128xf32>
    %c1 = arith.constant 1 : index
    %c0_21 = arith.constant 0 : index
    %65 = vector.load %arg7[%c1, %c0_21] : memref<8x512xf32, #tpu.memory_space<vmem>>, vector<1x512xf32>
    %66 = arith.truncf %33 : vector<1x128xf32> to vector<1x128xbf16>
    %c0_22 = arith.constant 0 : index
    %c0_23 = arith.constant 0 : index
    %67 = vector.load %arg2[%c0_22, %c0_23] : memref<128x512xbf16, #tpu.memory_space<vmem>>, vector<128x512xbf16>
    %cst_24 = arith.constant dense<0.000000e+00> : vector<1x512xf32>
    %68 = tpu.matmul %66, %67, %cst_24 {dimension_numbers = #tpu.dot_dimension_numbers<[1], [0], [0], [1], [0, 0, 1, 1], [], []>} : vector<1x128xbf16>, vector<128x512xbf16>, vector<1x512xf32> -> vector<1x512xf32>
    %69 = arith.addf %65, %68 : vector<1x512xf32>
    %70 = vector.extract_strided_slice %69 {offsets = [0, 0], sizes = [1, 128], strides = [1, 1]} : vector<1x512xf32> to vector<1x128xf32>
    %71 = arith.negf %70 : vector<1x128xf32>
    %72 = math.exp %71 : vector<1x128xf32>
    %cst_25 = arith.constant 1.000000e+00 : f32
    %73 = vector.broadcast %cst_25 : f32 to vector<1x128xf32>
    %74 = arith.addf %73, %72 : vector<1x128xf32>
    %75 = arith.divf %73, %74 : vector<1x128xf32>
    %76 = vector.extract_strided_slice %69 {offsets = [0, 128], sizes = [1, 128], strides = [1, 1]} : vector<1x512xf32> to vector<1x128xf32>
    %77 = arith.negf %76 : vector<1x128xf32>
    %78 = math.exp %77 : vector<1x128xf32>
    %cst_26 = arith.constant 1.000000e+00 : f32
    %79 = vector.broadcast %cst_26 : f32 to vector<1x128xf32>
    %80 = arith.addf %79, %78 : vector<1x128xf32>
    %81 = arith.divf %79, %80 : vector<1x128xf32>
    %82 = vector.extract_strided_slice %69 {offsets = [0, 256], sizes = [1, 128], strides = [1, 1]} : vector<1x512xf32> to vector<1x128xf32>
    %83 = math.tanh %82 : vector<1x128xf32>
    %84 = vector.extract_strided_slice %69 {offsets = [0, 384], sizes = [1, 128], strides = [1, 1]} : vector<1x512xf32> to vector<1x128xf32>
    %85 = arith.negf %84 : vector<1x128xf32>
    %86 = math.exp %85 : vector<1x128xf32>
    %cst_27 = arith.constant 1.000000e+00 : f32
    %87 = vector.broadcast %cst_27 : f32 to vector<1x128xf32>
    %88 = arith.addf %87, %86 : vector<1x128xf32>
    %89 = arith.divf %87, %88 : vector<1x128xf32>
    %90 = arith.mulf %81, %31 : vector<1x128xf32>
    %91 = arith.mulf %75, %83 : vector<1x128xf32>
    %92 = arith.addf %90, %91 : vector<1x128xf32>
    %93 = math.tanh %92 : vector<1x128xf32>
    %94 = arith.mulf %89, %93 : vector<1x128xf32>
    %95 = tpu.concatenate %94, %64 in 1 : vector<1x128xf32>, vector<1x128xf32> -> vector<1x256xf32>
    %96 = arith.truncf %95 : vector<1x256xf32> to vector<1x256xbf16>
    %c0_28 = arith.constant 0 : index
    %c0_29 = arith.constant 0 : index
    %97 = vector.load %arg8[%c0_28, %c0_29] : memref<256x512xbf16, #tpu.memory_space<vmem>>, vector<256x512xbf16>
    %cst_30 = arith.constant dense<0.000000e+00> : vector<1x512xf32>
    %98 = tpu.matmul %96, %97, %cst_30 {dimension_numbers = #tpu.dot_dimension_numbers<[1], [0], [0], [1], [0, 0, 1, 1], [], []>} : vector<1x256xbf16>, vector<256x512xbf16>, vector<1x512xf32> -> vector<1x512xf32>
    %c0_31 = arith.constant 0 : index
    %c0_32 = arith.constant 0 : index
    %99 = vector.load %arg5[%c0_31, %c0_32] : memref<1x512xf32, #tpu.memory_space<vmem>>, vector<1x512xf32>
    %100 = arith.addf %98, %99 : vector<1x512xf32>
    %101 = vector.extract_strided_slice %100 {offsets = [0, 0], sizes = [1, 128], strides = [1, 1]} : vector<1x512xf32> to vector<1x128xf32>
    %102 = arith.negf %101 : vector<1x128xf32>
    %103 = math.exp %102 : vector<1x128xf32>
    %cst_33 = arith.constant 1.000000e+00 : f32
    %104 = vector.broadcast %cst_33 : f32 to vector<1x128xf32>
    %105 = arith.addf %104, %103 : vector<1x128xf32>
    %106 = arith.divf %104, %105 : vector<1x128xf32>
    %107 = vector.extract_strided_slice %100 {offsets = [0, 128], sizes = [1, 128], strides = [1, 1]} : vector<1x512xf32> to vector<1x128xf32>
    %108 = arith.negf %107 : vector<1x128xf32>
    %109 = math.exp %108 : vector<1x128xf32>
    %cst_34 = arith.constant 1.000000e+00 : f32
    %110 = vector.broadcast %cst_34 : f32 to vector<1x128xf32>
    %111 = arith.addf %110, %109 : vector<1x128xf32>
    %112 = arith.divf %110, %111 : vector<1x128xf32>
    %113 = vector.extract_strided_slice %100 {offsets = [0, 256], sizes = [1, 128], strides = [1, 1]} : vector<1x512xf32> to vector<1x128xf32>
    %114 = math.tanh %113 : vector<1x128xf32>
    %115 = vector.extract_strided_slice %100 {offsets = [0, 384], sizes = [1, 128], strides = [1, 1]} : vector<1x512xf32> to vector<1x128xf32>
    %116 = arith.negf %115 : vector<1x128xf32>
    %117 = math.exp %116 : vector<1x128xf32>
    %cst_35 = arith.constant 1.000000e+00 : f32
    %118 = vector.broadcast %cst_35 : f32 to vector<1x128xf32>
    %119 = arith.addf %118, %117 : vector<1x128xf32>
    %120 = arith.divf %118, %119 : vector<1x128xf32>
    %121 = arith.mulf %112, %62 : vector<1x128xf32>
    %122 = arith.mulf %106, %114 : vector<1x128xf32>
    %123 = arith.addf %121, %122 : vector<1x128xf32>
    %124 = math.tanh %123 : vector<1x128xf32>
    %125 = arith.mulf %120, %124 : vector<1x128xf32>
    %c2 = arith.constant 2 : index
    %c0_36 = arith.constant 0 : index
    %126 = vector.load %arg7[%c2, %c0_36] : memref<8x512xf32, #tpu.memory_space<vmem>>, vector<1x512xf32>
    %127 = arith.truncf %94 : vector<1x128xf32> to vector<1x128xbf16>
    %c0_37 = arith.constant 0 : index
    %c0_38 = arith.constant 0 : index
    %128 = vector.load %arg2[%c0_37, %c0_38] : memref<128x512xbf16, #tpu.memory_space<vmem>>, vector<128x512xbf16>
    %cst_39 = arith.constant dense<0.000000e+00> : vector<1x512xf32>
    %129 = tpu.matmul %127, %128, %cst_39 {dimension_numbers = #tpu.dot_dimension_numbers<[1], [0], [0], [1], [0, 0, 1, 1], [], []>} : vector<1x128xbf16>, vector<128x512xbf16>, vector<1x512xf32> -> vector<1x512xf32>
    %130 = arith.addf %126, %129 : vector<1x512xf32>
    %131 = vector.extract_strided_slice %130 {offsets = [0, 0], sizes = [1, 128], strides = [1, 1]} : vector<1x512xf32> to vector<1x128xf32>
    %132 = arith.negf %131 : vector<1x128xf32>
    %133 = math.exp %132 : vector<1x128xf32>
    %cst_40 = arith.constant 1.000000e+00 : f32
    %134 = vector.broadcast %cst_40 : f32 to vector<1x128xf32>
    %135 = arith.addf %134, %133 : vector<1x128xf32>
    %136 = arith.divf %134, %135 : vector<1x128xf32>
    %137 = vector.extract_strided_slice %130 {offsets = [0, 128], sizes = [1, 128], strides = [1, 1]} : vector<1x512xf32> to vector<1x128xf32>
    %138 = arith.negf %137 : vector<1x128xf32>
    %139 = math.exp %138 : vector<1x128xf32>
    %cst_41 = arith.constant 1.000000e+00 : f32
    %140 = vector.broadcast %cst_41 : f32 to vector<1x128xf32>
    %141 = arith.addf %140, %139 : vector<1x128xf32>
    %142 = arith.divf %140, %141 : vector<1x128xf32>
    %143 = vector.extract_strided_slice %130 {offsets = [0, 256], sizes = [1, 128], strides = [1, 1]} : vector<1x512xf32> to vector<1x128xf32>
    %144 = math.tanh %143 : vector<1x128xf32>
    %145 = vector.extract_strided_slice %130 {offsets = [0, 384], sizes = [1, 128], strides = [1, 1]} : vector<1x512xf32> to vector<1x128xf32>
    %146 = arith.negf %145 : vector<1x128xf32>
    %147 = math.exp %146 : vector<1x128xf32>
    %cst_42 = arith.constant 1.000000e+00 : f32
    %148 = vector.broadcast %cst_42 : f32 to vector<1x128xf32>
    %149 = arith.addf %148, %147 : vector<1x128xf32>
    %150 = arith.divf %148, %149 : vector<1x128xf32>
    %151 = arith.mulf %142, %92 : vector<1x128xf32>
    %152 = arith.mulf %136, %144 : vector<1x128xf32>
    %153 = arith.addf %151, %152 : vector<1x128xf32>
    %154 = math.tanh %153 : vector<1x128xf32>
    %155 = arith.mulf %150, %154 : vector<1x128xf32>
    %156 = tpu.concatenate %155, %125 in 1 : vector<1x128xf32>, vector<1x128xf32> -> vector<1x256xf32>
    %157 = arith.truncf %156 : vector<1x256xf32> to vector<1x256xbf16>
    %c0_43 = arith.constant 0 : index
    %c0_44 = arith.constant 0 : index
    %158 = vector.load %arg8[%c0_43, %c0_44] : memref<256x512xbf16, #tpu.memory_space<vmem>>, vector<256x512xbf16>
    %cst_45 = arith.constant dense<0.000000e+00> : vector<1x512xf32>
    %159 = tpu.matmul %157, %158, %cst_45 {dimension_numbers = #tpu.dot_dimension_numbers<[1], [0], [0], [1], [0, 0, 1, 1], [], []>} : vector<1x256xbf16>, vector<256x512xbf16>, vector<1x512xf32> -> vector<1x512xf32>
    %c0_46 = arith.constant 0 : index
    %c0_47 = arith.constant 0 : index
    %160 = vector.load %arg5[%c0_46, %c0_47] : memref<1x512xf32, #tpu.memory_space<vmem>>, vector<1x512xf32>
    %161 = arith.addf %159, %160 : vector<1x512xf32>
    %162 = vector.extract_strided_slice %161 {offsets = [0, 0], sizes = [1, 128], strides = [1, 1]} : vector<1x512xf32> to vector<1x128xf32>
    %163 = arith.negf %162 : vector<1x128xf32>
    %164 = math.exp %163 : vector<1x128xf32>
    %cst_48 = arith.constant 1.000000e+00 : f32
    %165 = vector.broadcast %cst_48 : f32 to vector<1x128xf32>
    %166 = arith.addf %165, %164 : vector<1x128xf32>
    %167 = arith.divf %165, %166 : vector<1x128xf32>
    %168 = vector.extract_strided_slice %161 {offsets = [0, 128], sizes = [1, 128], strides = [1, 1]} : vector<1x512xf32> to vector<1x128xf32>
    %169 = arith.negf %168 : vector<1x128xf32>
    %170 = math.exp %169 : vector<1x128xf32>
    %cst_49 = arith.constant 1.000000e+00 : f32
    %171 = vector.broadcast %cst_49 : f32 to vector<1x128xf32>
    %172 = arith.addf %171, %170 : vector<1x128xf32>
    %173 = arith.divf %171, %172 : vector<1x128xf32>
    %174 = vector.extract_strided_slice %161 {offsets = [0, 256], sizes = [1, 128], strides = [1, 1]} : vector<1x512xf32> to vector<1x128xf32>
    %175 = math.tanh %174 : vector<1x128xf32>
    %176 = vector.extract_strided_slice %161 {offsets = [0, 384], sizes = [1, 128], strides = [1, 1]} : vector<1x512xf32> to vector<1x128xf32>
    %177 = arith.negf %176 : vector<1x128xf32>
    %178 = math.exp %177 : vector<1x128xf32>
    %cst_50 = arith.constant 1.000000e+00 : f32
    %179 = vector.broadcast %cst_50 : f32 to vector<1x128xf32>
    %180 = arith.addf %179, %178 : vector<1x128xf32>
    %181 = arith.divf %179, %180 : vector<1x128xf32>
    %182 = arith.mulf %173, %123 : vector<1x128xf32>
    %183 = arith.mulf %167, %175 : vector<1x128xf32>
    %184 = arith.addf %182, %183 : vector<1x128xf32>
    %185 = math.tanh %184 : vector<1x128xf32>
    %186 = arith.mulf %181, %185 : vector<1x128xf32>
    %c3 = arith.constant 3 : index
    %c0_51 = arith.constant 0 : index
    %187 = vector.load %arg7[%c3, %c0_51] : memref<8x512xf32, #tpu.memory_space<vmem>>, vector<1x512xf32>
    %188 = arith.truncf %155 : vector<1x128xf32> to vector<1x128xbf16>
    %c0_52 = arith.constant 0 : index
    %c0_53 = arith.constant 0 : index
    %189 = vector.load %arg2[%c0_52, %c0_53] : memref<128x512xbf16, #tpu.memory_space<vmem>>, vector<128x512xbf16>
    %cst_54 = arith.constant dense<0.000000e+00> : vector<1x512xf32>
    %190 = tpu.matmul %188, %189, %cst_54 {dimension_numbers = #tpu.dot_dimension_numbers<[1], [0], [0], [1], [0, 0, 1, 1], [], []>} : vector<1x128xbf16>, vector<128x512xbf16>, vector<1x512xf32> -> vector<1x512xf32>
    %191 = arith.addf %187, %190 : vector<1x512xf32>
    %192 = vector.extract_strided_slice %191 {offsets = [0, 0], sizes = [1, 128], strides = [1, 1]} : vector<1x512xf32> to vector<1x128xf32>
    %193 = arith.negf %192 : vector<1x128xf32>
    %194 = math.exp %193 : vector<1x128xf32>
    %cst_55 = arith.constant 1.000000e+00 : f32
    %195 = vector.broadcast %cst_55 : f32 to vector<1x128xf32>
    %196 = arith.addf %195, %194 : vector<1x128xf32>
    %197 = arith.divf %195, %196 : vector<1x128xf32>
    %198 = vector.extract_strided_slice %191 {offsets = [0, 128], sizes = [1, 128], strides = [1, 1]} : vector<1x512xf32> to vector<1x128xf32>
    %199 = arith.negf %198 : vector<1x128xf32>
    %200 = math.exp %199 : vector<1x128xf32>
    %cst_56 = arith.constant 1.000000e+00 : f32
    %201 = vector.broadcast %cst_56 : f32 to vector<1x128xf32>
    %202 = arith.addf %201, %200 : vector<1x128xf32>
    %203 = arith.divf %201, %202 : vector<1x128xf32>
    %204 = vector.extract_strided_slice %191 {offsets = [0, 256], sizes = [1, 128], strides = [1, 1]} : vector<1x512xf32> to vector<1x128xf32>
    %205 = math.tanh %204 : vector<1x128xf32>
    %206 = vector.extract_strided_slice %191 {offsets = [0, 384], sizes = [1, 128], strides = [1, 1]} : vector<1x512xf32> to vector<1x128xf32>
    %207 = arith.negf %206 : vector<1x128xf32>
    %208 = math.exp %207 : vector<1x128xf32>
    %cst_57 = arith.constant 1.000000e+00 : f32
    %209 = vector.broadcast %cst_57 : f32 to vector<1x128xf32>
    %210 = arith.addf %209, %208 : vector<1x128xf32>
    %211 = arith.divf %209, %210 : vector<1x128xf32>
    %212 = arith.mulf %203, %153 : vector<1x128xf32>
    %213 = arith.mulf %197, %205 : vector<1x128xf32>
    %214 = arith.addf %212, %213 : vector<1x128xf32>
    %215 = math.tanh %214 : vector<1x128xf32>
    %216 = arith.mulf %211, %215 : vector<1x128xf32>
    %217 = tpu.concatenate %216, %186 in 1 : vector<1x128xf32>, vector<1x128xf32> -> vector<1x256xf32>
    %218 = arith.truncf %217 : vector<1x256xf32> to vector<1x256xbf16>
    %c0_58 = arith.constant 0 : index
    %c0_59 = arith.constant 0 : index
    %219 = vector.load %arg8[%c0_58, %c0_59] : memref<256x512xbf16, #tpu.memory_space<vmem>>, vector<256x512xbf16>
    %cst_60 = arith.constant dense<0.000000e+00> : vector<1x512xf32>
    %220 = tpu.matmul %218, %219, %cst_60 {dimension_numbers = #tpu.dot_dimension_numbers<[1], [0], [0], [1], [0, 0, 1, 1], [], []>} : vector<1x256xbf16>, vector<256x512xbf16>, vector<1x512xf32> -> vector<1x512xf32>
    %c0_61 = arith.constant 0 : index
    %c0_62 = arith.constant 0 : index
    %221 = vector.load %arg5[%c0_61, %c0_62] : memref<1x512xf32, #tpu.memory_space<vmem>>, vector<1x512xf32>
    %222 = arith.addf %220, %221 : vector<1x512xf32>
    %223 = vector.extract_strided_slice %222 {offsets = [0, 0], sizes = [1, 128], strides = [1, 1]} : vector<1x512xf32> to vector<1x128xf32>
    %224 = arith.negf %223 : vector<1x128xf32>
    %225 = math.exp %224 : vector<1x128xf32>
    %cst_63 = arith.constant 1.000000e+00 : f32
    %226 = vector.broadcast %cst_63 : f32 to vector<1x128xf32>
    %227 = arith.addf %226, %225 : vector<1x128xf32>
    %228 = arith.divf %226, %227 : vector<1x128xf32>
    %229 = vector.extract_strided_slice %222 {offsets = [0, 128], sizes = [1, 128], strides = [1, 1]} : vector<1x512xf32> to vector<1x128xf32>
    %230 = arith.negf %229 : vector<1x128xf32>
    %231 = math.exp %230 : vector<1x128xf32>
    %cst_64 = arith.constant 1.000000e+00 : f32
    %232 = vector.broadcast %cst_64 : f32 to vector<1x128xf32>
    %233 = arith.addf %232, %231 : vector<1x128xf32>
    %234 = arith.divf %232, %233 : vector<1x128xf32>
    %235 = vector.extract_strided_slice %222 {offsets = [0, 256], sizes = [1, 128], strides = [1, 1]} : vector<1x512xf32> to vector<1x128xf32>
    %236 = math.tanh %235 : vector<1x128xf32>
    %237 = vector.extract_strided_slice %222 {offsets = [0, 384], sizes = [1, 128], strides = [1, 1]} : vector<1x512xf32> to vector<1x128xf32>
    %238 = arith.negf %237 : vector<1x128xf32>
    %239 = math.exp %238 : vector<1x128xf32>
    %cst_65 = arith.constant 1.000000e+00 : f32
    %240 = vector.broadcast %cst_65 : f32 to vector<1x128xf32>
    %241 = arith.addf %240, %239 : vector<1x128xf32>
    %242 = arith.divf %240, %241 : vector<1x128xf32>
    %243 = arith.mulf %234, %184 : vector<1x128xf32>
    %244 = arith.mulf %228, %236 : vector<1x128xf32>
    %245 = arith.addf %243, %244 : vector<1x128xf32>
    %246 = math.tanh %245 : vector<1x128xf32>
    %247 = arith.mulf %242, %246 : vector<1x128xf32>
    %c4 = arith.constant 4 : index
    %c0_66 = arith.constant 0 : index
    %248 = vector.load %arg7[%c4, %c0_66] : memref<8x512xf32, #tpu.memory_space<vmem>>, vector<1x512xf32>
    %249 = arith.truncf %216 : vector<1x128xf32> to vector<1x128xbf16>
    %c0_67 = arith.constant 0 : index
    %c0_68 = arith.constant 0 : index
    %250 = vector.load %arg2[%c0_67, %c0_68] : memref<128x512xbf16, #tpu.memory_space<vmem>>, vector<128x512xbf16>
    %cst_69 = arith.constant dense<0.000000e+00> : vector<1x512xf32>
    %251 = tpu.matmul %249, %250, %cst_69 {dimension_numbers = #tpu.dot_dimension_numbers<[1], [0], [0], [1], [0, 0, 1, 1], [], []>} : vector<1x128xbf16>, vector<128x512xbf16>, vector<1x512xf32> -> vector<1x512xf32>
    %252 = arith.addf %248, %251 : vector<1x512xf32>
    %253 = vector.extract_strided_slice %252 {offsets = [0, 0], sizes = [1, 128], strides = [1, 1]} : vector<1x512xf32> to vector<1x128xf32>
    %254 = arith.negf %253 : vector<1x128xf32>
    %255 = math.exp %254 : vector<1x128xf32>
    %cst_70 = arith.constant 1.000000e+00 : f32
    %256 = vector.broadcast %cst_70 : f32 to vector<1x128xf32>
    %257 = arith.addf %256, %255 : vector<1x128xf32>
    %258 = arith.divf %256, %257 : vector<1x128xf32>
    %259 = vector.extract_strided_slice %252 {offsets = [0, 128], sizes = [1, 128], strides = [1, 1]} : vector<1x512xf32> to vector<1x128xf32>
    %260 = arith.negf %259 : vector<1x128xf32>
    %261 = math.exp %260 : vector<1x128xf32>
    %cst_71 = arith.constant 1.000000e+00 : f32
    %262 = vector.broadcast %cst_71 : f32 to vector<1x128xf32>
    %263 = arith.addf %262, %261 : vector<1x128xf32>
    %264 = arith.divf %262, %263 : vector<1x128xf32>
    %265 = vector.extract_strided_slice %252 {offsets = [0, 256], sizes = [1, 128], strides = [1, 1]} : vector<1x512xf32> to vector<1x128xf32>
    %266 = math.tanh %265 : vector<1x128xf32>
    %267 = vector.extract_strided_slice %252 {offsets = [0, 384], sizes = [1, 128], strides = [1, 1]} : vector<1x512xf32> to vector<1x128xf32>
    %268 = arith.negf %267 : vector<1x128xf32>
    %269 = math.exp %268 : vector<1x128xf32>
    %cst_72 = arith.constant 1.000000e+00 : f32
    %270 = vector.broadcast %cst_72 : f32 to vector<1x128xf32>
    %271 = arith.addf %270, %269 : vector<1x128xf32>
    %272 = arith.divf %270, %271 : vector<1x128xf32>
    %273 = arith.mulf %264, %214 : vector<1x128xf32>
    %274 = arith.mulf %258, %266 : vector<1x128xf32>
    %275 = arith.addf %273, %274 : vector<1x128xf32>
    %276 = math.tanh %275 : vector<1x128xf32>
    %277 = arith.mulf %272, %276 : vector<1x128xf32>
    %278 = tpu.concatenate %277, %247 in 1 : vector<1x128xf32>, vector<1x128xf32> -> vector<1x256xf32>
    %279 = arith.truncf %278 : vector<1x256xf32> to vector<1x256xbf16>
    %c0_73 = arith.constant 0 : index
    %c0_74 = arith.constant 0 : index
    %280 = vector.load %arg8[%c0_73, %c0_74] : memref<256x512xbf16, #tpu.memory_space<vmem>>, vector<256x512xbf16>
    %cst_75 = arith.constant dense<0.000000e+00> : vector<1x512xf32>
    %281 = tpu.matmul %279, %280, %cst_75 {dimension_numbers = #tpu.dot_dimension_numbers<[1], [0], [0], [1], [0, 0, 1, 1], [], []>} : vector<1x256xbf16>, vector<256x512xbf16>, vector<1x512xf32> -> vector<1x512xf32>
    %c0_76 = arith.constant 0 : index
    %c0_77 = arith.constant 0 : index
    %282 = vector.load %arg5[%c0_76, %c0_77] : memref<1x512xf32, #tpu.memory_space<vmem>>, vector<1x512xf32>
    %283 = arith.addf %281, %282 : vector<1x512xf32>
    %284 = vector.extract_strided_slice %283 {offsets = [0, 0], sizes = [1, 128], strides = [1, 1]} : vector<1x512xf32> to vector<1x128xf32>
    %285 = arith.negf %284 : vector<1x128xf32>
    %286 = math.exp %285 : vector<1x128xf32>
    %cst_78 = arith.constant 1.000000e+00 : f32
    %287 = vector.broadcast %cst_78 : f32 to vector<1x128xf32>
    %288 = arith.addf %287, %286 : vector<1x128xf32>
    %289 = arith.divf %287, %288 : vector<1x128xf32>
    %290 = vector.extract_strided_slice %283 {offsets = [0, 128], sizes = [1, 128], strides = [1, 1]} : vector<1x512xf32> to vector<1x128xf32>
    %291 = arith.negf %290 : vector<1x128xf32>
    %292 = math.exp %291 : vector<1x128xf32>
    %cst_79 = arith.constant 1.000000e+00 : f32
    %293 = vector.broadcast %cst_79 : f32 to vector<1x128xf32>
    %294 = arith.addf %293, %292 : vector<1x128xf32>
    %295 = arith.divf %293, %294 : vector<1x128xf32>
    %296 = vector.extract_strided_slice %283 {offsets = [0, 256], sizes = [1, 128], strides = [1, 1]} : vector<1x512xf32> to vector<1x128xf32>
    %297 = math.tanh %296 : vector<1x128xf32>
    %298 = vector.extract_strided_slice %283 {offsets = [0, 384], sizes = [1, 128], strides = [1, 1]} : vector<1x512xf32> to vector<1x128xf32>
    %299 = arith.negf %298 : vector<1x128xf32>
    %300 = math.exp %299 : vector<1x128xf32>
    %cst_80 = arith.constant 1.000000e+00 : f32
    %301 = vector.broadcast %cst_80 : f32 to vector<1x128xf32>
    %302 = arith.addf %301, %300 : vector<1x128xf32>
    %303 = arith.divf %301, %302 : vector<1x128xf32>
    %304 = arith.mulf %295, %245 : vector<1x128xf32>
    %305 = arith.mulf %289, %297 : vector<1x128xf32>
    %306 = arith.addf %304, %305 : vector<1x128xf32>
    %307 = math.tanh %306 : vector<1x128xf32>
    %308 = arith.mulf %303, %307 : vector<1x128xf32>
    %c5 = arith.constant 5 : index
    %c0_81 = arith.constant 0 : index
    %309 = vector.load %arg7[%c5, %c0_81] : memref<8x512xf32, #tpu.memory_space<vmem>>, vector<1x512xf32>
    %310 = arith.truncf %277 : vector<1x128xf32> to vector<1x128xbf16>
    %c0_82 = arith.constant 0 : index
    %c0_83 = arith.constant 0 : index
    %311 = vector.load %arg2[%c0_82, %c0_83] : memref<128x512xbf16, #tpu.memory_space<vmem>>, vector<128x512xbf16>
    %cst_84 = arith.constant dense<0.000000e+00> : vector<1x512xf32>
    %312 = tpu.matmul %310, %311, %cst_84 {dimension_numbers = #tpu.dot_dimension_numbers<[1], [0], [0], [1], [0, 0, 1, 1], [], []>} : vector<1x128xbf16>, vector<128x512xbf16>, vector<1x512xf32> -> vector<1x512xf32>
    %313 = arith.addf %309, %312 : vector<1x512xf32>
    %314 = vector.extract_strided_slice %313 {offsets = [0, 0], sizes = [1, 128], strides = [1, 1]} : vector<1x512xf32> to vector<1x128xf32>
    %315 = arith.negf %314 : vector<1x128xf32>
    %316 = math.exp %315 : vector<1x128xf32>
    %cst_85 = arith.constant 1.000000e+00 : f32
    %317 = vector.broadcast %cst_85 : f32 to vector<1x128xf32>
    %318 = arith.addf %317, %316 : vector<1x128xf32>
    %319 = arith.divf %317, %318 : vector<1x128xf32>
    %320 = vector.extract_strided_slice %313 {offsets = [0, 128], sizes = [1, 128], strides = [1, 1]} : vector<1x512xf32> to vector<1x128xf32>
    %321 = arith.negf %320 : vector<1x128xf32>
    %322 = math.exp %321 : vector<1x128xf32>
    %cst_86 = arith.constant 1.000000e+00 : f32
    %323 = vector.broadcast %cst_86 : f32 to vector<1x128xf32>
    %324 = arith.addf %323, %322 : vector<1x128xf32>
    %325 = arith.divf %323, %324 : vector<1x128xf32>
    %326 = vector.extract_strided_slice %313 {offsets = [0, 256], sizes = [1, 128], strides = [1, 1]} : vector<1x512xf32> to vector<1x128xf32>
    %327 = math.tanh %326 : vector<1x128xf32>
    %328 = vector.extract_strided_slice %313 {offsets = [0, 384], sizes = [1, 128], strides = [1, 1]} : vector<1x512xf32> to vector<1x128xf32>
    %329 = arith.negf %328 : vector<1x128xf32>
    %330 = math.exp %329 : vector<1x128xf32>
    %cst_87 = arith.constant 1.000000e+00 : f32
    %331 = vector.broadcast %cst_87 : f32 to vector<1x128xf32>
    %332 = arith.addf %331, %330 : vector<1x128xf32>
    %333 = arith.divf %331, %332 : vector<1x128xf32>
    %334 = arith.mulf %325, %275 : vector<1x128xf32>
    %335 = arith.mulf %319, %327 : vector<1x128xf32>
    %336 = arith.addf %334, %335 : vector<1x128xf32>
    %337 = math.tanh %336 : vector<1x128xf32>
    %338 = arith.mulf %333, %337 : vector<1x128xf32>
    %339 = tpu.concatenate %338, %308 in 1 : vector<1x128xf32>, vector<1x128xf32> -> vector<1x256xf32>
    %340 = arith.truncf %339 : vector<1x256xf32> to vector<1x256xbf16>
    %c0_88 = arith.constant 0 : index
    %c0_89 = arith.constant 0 : index
    %341 = vector.load %arg8[%c0_88, %c0_89] : memref<256x512xbf16, #tpu.memory_space<vmem>>, vector<256x512xbf16>
    %cst_90 = arith.constant dense<0.000000e+00> : vector<1x512xf32>
    %342 = tpu.matmul %340, %341, %cst_90 {dimension_numbers = #tpu.dot_dimension_numbers<[1], [0], [0], [1], [0, 0, 1, 1], [], []>} : vector<1x256xbf16>, vector<256x512xbf16>, vector<1x512xf32> -> vector<1x512xf32>
    %c0_91 = arith.constant 0 : index
    %c0_92 = arith.constant 0 : index
    %343 = vector.load %arg5[%c0_91, %c0_92] : memref<1x512xf32, #tpu.memory_space<vmem>>, vector<1x512xf32>
    %344 = arith.addf %342, %343 : vector<1x512xf32>
    %345 = vector.extract_strided_slice %344 {offsets = [0, 0], sizes = [1, 128], strides = [1, 1]} : vector<1x512xf32> to vector<1x128xf32>
    %346 = arith.negf %345 : vector<1x128xf32>
    %347 = math.exp %346 : vector<1x128xf32>
    %cst_93 = arith.constant 1.000000e+00 : f32
    %348 = vector.broadcast %cst_93 : f32 to vector<1x128xf32>
    %349 = arith.addf %348, %347 : vector<1x128xf32>
    %350 = arith.divf %348, %349 : vector<1x128xf32>
    %351 = vector.extract_strided_slice %344 {offsets = [0, 128], sizes = [1, 128], strides = [1, 1]} : vector<1x512xf32> to vector<1x128xf32>
    %352 = arith.negf %351 : vector<1x128xf32>
    %353 = math.exp %352 : vector<1x128xf32>
    %cst_94 = arith.constant 1.000000e+00 : f32
    %354 = vector.broadcast %cst_94 : f32 to vector<1x128xf32>
    %355 = arith.addf %354, %353 : vector<1x128xf32>
    %356 = arith.divf %354, %355 : vector<1x128xf32>
    %357 = vector.extract_strided_slice %344 {offsets = [0, 256], sizes = [1, 128], strides = [1, 1]} : vector<1x512xf32> to vector<1x128xf32>
    %358 = math.tanh %357 : vector<1x128xf32>
    %359 = vector.extract_strided_slice %344 {offsets = [0, 384], sizes = [1, 128], strides = [1, 1]} : vector<1x512xf32> to vector<1x128xf32>
    %360 = arith.negf %359 : vector<1x128xf32>
    %361 = math.exp %360 : vector<1x128xf32>
    %cst_95 = arith.constant 1.000000e+00 : f32
    %362 = vector.broadcast %cst_95 : f32 to vector<1x128xf32>
    %363 = arith.addf %362, %361 : vector<1x128xf32>
    %364 = arith.divf %362, %363 : vector<1x128xf32>
    %365 = arith.mulf %356, %306 : vector<1x128xf32>
    %366 = arith.mulf %350, %358 : vector<1x128xf32>
    %367 = arith.addf %365, %366 : vector<1x128xf32>
    %368 = math.tanh %367 : vector<1x128xf32>
    %369 = arith.mulf %364, %368 : vector<1x128xf32>
    %c0_96 = arith.constant 0 : index
    %c0_97 = arith.constant 0 : index
    %370 = vector.load %arg6[%c0_96, %c0_97] : memref<3x128xf32, #tpu.memory_space<vmem>>, vector<1x128xf32>
    tpu.vector_store %arg6[%c0_96, %c0_97], %369 {strides = array<i32>} : memref<3x128xf32, #tpu.memory_space<vmem>>, vector<1x128xf32>,
    %c6 = arith.constant 6 : index
    %c0_98 = arith.constant 0 : index
    %371 = vector.load %arg7[%c6, %c0_98] : memref<8x512xf32, #tpu.memory_space<vmem>>, vector<1x512xf32>
    %372 = arith.truncf %338 : vector<1x128xf32> to vector<1x128xbf16>
    %c0_99 = arith.constant 0 : index
    %c0_100 = arith.constant 0 : index
    %373 = vector.load %arg2[%c0_99, %c0_100] : memref<128x512xbf16, #tpu.memory_space<vmem>>, vector<128x512xbf16>
    %cst_101 = arith.constant dense<0.000000e+00> : vector<1x512xf32>
    %374 = tpu.matmul %372, %373, %cst_101 {dimension_numbers = #tpu.dot_dimension_numbers<[1], [0], [0], [1], [0, 0, 1, 1], [], []>} : vector<1x128xbf16>, vector<128x512xbf16>, vector<1x512xf32> -> vector<1x512xf32>
    %375 = arith.addf %371, %374 : vector<1x512xf32>
    %376 = vector.extract_strided_slice %375 {offsets = [0, 0], sizes = [1, 128], strides = [1, 1]} : vector<1x512xf32> to vector<1x128xf32>
    %377 = arith.negf %376 : vector<1x128xf32>
    %378 = math.exp %377 : vector<1x128xf32>
    %cst_102 = arith.constant 1.000000e+00 : f32
    %379 = vector.broadcast %cst_102 : f32 to vector<1x128xf32>
    %380 = arith.addf %379, %378 : vector<1x128xf32>
    %381 = arith.divf %379, %380 : vector<1x128xf32>
    %382 = vector.extract_strided_slice %375 {offsets = [0, 128], sizes = [1, 128], strides = [1, 1]} : vector<1x512xf32> to vector<1x128xf32>
    %383 = arith.negf %382 : vector<1x128xf32>
    %384 = math.exp %383 : vector<1x128xf32>
    %cst_103 = arith.constant 1.000000e+00 : f32
    %385 = vector.broadcast %cst_103 : f32 to vector<1x128xf32>
    %386 = arith.addf %385, %384 : vector<1x128xf32>
    %387 = arith.divf %385, %386 : vector<1x128xf32>
    %388 = vector.extract_strided_slice %375 {offsets = [0, 256], sizes = [1, 128], strides = [1, 1]} : vector<1x512xf32> to vector<1x128xf32>
    %389 = math.tanh %388 : vector<1x128xf32>
    %390 = vector.extract_strided_slice %375 {offsets = [0, 384], sizes = [1, 128], strides = [1, 1]} : vector<1x512xf32> to vector<1x128xf32>
    %391 = arith.negf %390 : vector<1x128xf32>
    %392 = math.exp %391 : vector<1x128xf32>
    %cst_104 = arith.constant 1.000000e+00 : f32
    %393 = vector.broadcast %cst_104 : f32 to vector<1x128xf32>
    %394 = arith.addf %393, %392 : vector<1x128xf32>
    %395 = arith.divf %393, %394 : vector<1x128xf32>
    %396 = arith.mulf %387, %336 : vector<1x128xf32>
    %397 = arith.mulf %381, %389 : vector<1x128xf32>
    %398 = arith.addf %396, %397 : vector<1x128xf32>
    %399 = math.tanh %398 : vector<1x128xf32>
    %400 = arith.mulf %395, %399 : vector<1x128xf32>
    %401 = tpu.concatenate %400, %369 in 1 : vector<1x128xf32>, vector<1x128xf32> -> vector<1x256xf32>
    %402 = arith.truncf %401 : vector<1x256xf32> to vector<1x256xbf16>
    %c0_105 = arith.constant 0 : index
    %c0_106 = arith.constant 0 : index
    %403 = vector.load %arg8[%c0_105, %c0_106] : memref<256x512xbf16, #tpu.memory_space<vmem>>, vector<256x512xbf16>
    %cst_107 = arith.constant dense<0.000000e+00> : vector<1x512xf32>
    %404 = tpu.matmul %402, %403, %cst_107 {dimension_numbers = #tpu.dot_dimension_numbers<[1], [0], [0], [1], [0, 0, 1, 1], [], []>} : vector<1x256xbf16>, vector<256x512xbf16>, vector<1x512xf32> -> vector<1x512xf32>
    %c0_108 = arith.constant 0 : index
    %c0_109 = arith.constant 0 : index
    %405 = vector.load %arg5[%c0_108, %c0_109] : memref<1x512xf32, #tpu.memory_space<vmem>>, vector<1x512xf32>
    %406 = arith.addf %404, %405 : vector<1x512xf32>
    %407 = vector.extract_strided_slice %406 {offsets = [0, 0], sizes = [1, 128], strides = [1, 1]} : vector<1x512xf32> to vector<1x128xf32>
    %408 = arith.negf %407 : vector<1x128xf32>
    %409 = math.exp %408 : vector<1x128xf32>
    %cst_110 = arith.constant 1.000000e+00 : f32
    %410 = vector.broadcast %cst_110 : f32 to vector<1x128xf32>
    %411 = arith.addf %410, %409 : vector<1x128xf32>
    %412 = arith.divf %410, %411 : vector<1x128xf32>
    %413 = vector.extract_strided_slice %406 {offsets = [0, 128], sizes = [1, 128], strides = [1, 1]} : vector<1x512xf32> to vector<1x128xf32>
    %414 = arith.negf %413 : vector<1x128xf32>
    %415 = math.exp %414 : vector<1x128xf32>
    %cst_111 = arith.constant 1.000000e+00 : f32
    %416 = vector.broadcast %cst_111 : f32 to vector<1x128xf32>
    %417 = arith.addf %416, %415 : vector<1x128xf32>
    %418 = arith.divf %416, %417 : vector<1x128xf32>
    %419 = vector.extract_strided_slice %406 {offsets = [0, 256], sizes = [1, 128], strides = [1, 1]} : vector<1x512xf32> to vector<1x128xf32>
    %420 = math.tanh %419 : vector<1x128xf32>
    %421 = vector.extract_strided_slice %406 {offsets = [0, 384], sizes = [1, 128], strides = [1, 1]} : vector<1x512xf32> to vector<1x128xf32>
    %422 = arith.negf %421 : vector<1x128xf32>
    %423 = math.exp %422 : vector<1x128xf32>
    %cst_112 = arith.constant 1.000000e+00 : f32
    %424 = vector.broadcast %cst_112 : f32 to vector<1x128xf32>
    %425 = arith.addf %424, %423 : vector<1x128xf32>
    %426 = arith.divf %424, %425 : vector<1x128xf32>
    %427 = arith.mulf %418, %367 : vector<1x128xf32>
    %428 = arith.mulf %412, %420 : vector<1x128xf32>
    %429 = arith.addf %427, %428 : vector<1x128xf32>
    %430 = math.tanh %429 : vector<1x128xf32>
    %431 = arith.mulf %426, %430 : vector<1x128xf32>
    %c1_113 = arith.constant 1 : index
    %c0_114 = arith.constant 0 : index
    %432 = vector.load %arg6[%c1_113, %c0_114] : memref<3x128xf32, #tpu.memory_space<vmem>>, vector<1x128xf32>
    tpu.vector_store %arg6[%c1_113, %c0_114], %431 {strides = array<i32>} : memref<3x128xf32, #tpu.memory_space<vmem>>, vector<1x128xf32>,
    %c7 = arith.constant 7 : index
    %c0_115 = arith.constant 0 : index
    %433 = vector.load %arg7[%c7, %c0_115] : memref<8x512xf32, #tpu.memory_space<vmem>>, vector<1x512xf32>
    %434 = arith.truncf %400 : vector<1x128xf32> to vector<1x128xbf16>
    %c0_116 = arith.constant 0 : index
    %c0_117 = arith.constant 0 : index
    %435 = vector.load %arg2[%c0_116, %c0_117] : memref<128x512xbf16, #tpu.memory_space<vmem>>, vector<128x512xbf16>
    %cst_118 = arith.constant dense<0.000000e+00> : vector<1x512xf32>
    %436 = tpu.matmul %434, %435, %cst_118 {dimension_numbers = #tpu.dot_dimension_numbers<[1], [0], [0], [1], [0, 0, 1, 1], [], []>} : vector<1x128xbf16>, vector<128x512xbf16>, vector<1x512xf32> -> vector<1x512xf32>
    %437 = arith.addf %433, %436 : vector<1x512xf32>
    %438 = vector.extract_strided_slice %437 {offsets = [0, 0], sizes = [1, 128], strides = [1, 1]} : vector<1x512xf32> to vector<1x128xf32>
    %439 = arith.negf %438 : vector<1x128xf32>
    %440 = math.exp %439 : vector<1x128xf32>
    %cst_119 = arith.constant 1.000000e+00 : f32
    %441 = vector.broadcast %cst_119 : f32 to vector<1x128xf32>
    %442 = arith.addf %441, %440 : vector<1x128xf32>
    %443 = arith.divf %441, %442 : vector<1x128xf32>
    %444 = vector.extract_strided_slice %437 {offsets = [0, 128], sizes = [1, 128], strides = [1, 1]} : vector<1x512xf32> to vector<1x128xf32>
    %445 = arith.negf %444 : vector<1x128xf32>
    %446 = math.exp %445 : vector<1x128xf32>
    %cst_120 = arith.constant 1.000000e+00 : f32
    %447 = vector.broadcast %cst_120 : f32 to vector<1x128xf32>
    %448 = arith.addf %447, %446 : vector<1x128xf32>
    %449 = arith.divf %447, %448 : vector<1x128xf32>
    %450 = vector.extract_strided_slice %437 {offsets = [0, 256], sizes = [1, 128], strides = [1, 1]} : vector<1x512xf32> to vector<1x128xf32>
    %451 = math.tanh %450 : vector<1x128xf32>
    %452 = vector.extract_strided_slice %437 {offsets = [0, 384], sizes = [1, 128], strides = [1, 1]} : vector<1x512xf32> to vector<1x128xf32>
    %453 = arith.negf %452 : vector<1x128xf32>
    %454 = math.exp %453 : vector<1x128xf32>
    %cst_121 = arith.constant 1.000000e+00 : f32
    %455 = vector.broadcast %cst_121 : f32 to vector<1x128xf32>
    %456 = arith.addf %455, %454 : vector<1x128xf32>
    %457 = arith.divf %455, %456 : vector<1x128xf32>
    %458 = arith.mulf %449, %398 : vector<1x128xf32>
    %459 = arith.mulf %443, %451 : vector<1x128xf32>
    %460 = arith.addf %458, %459 : vector<1x128xf32>
    %461 = math.tanh %460 : vector<1x128xf32>
    %462 = arith.mulf %457, %461 : vector<1x128xf32>
    %463 = tpu.concatenate %462, %431 in 1 : vector<1x128xf32>, vector<1x128xf32> -> vector<1x256xf32>
    %464 = arith.truncf %463 : vector<1x256xf32> to vector<1x256xbf16>
    %c0_122 = arith.constant 0 : index
    %c0_123 = arith.constant 0 : index
    %465 = vector.load %arg8[%c0_122, %c0_123] : memref<256x512xbf16, #tpu.memory_space<vmem>>, vector<256x512xbf16>
    %cst_124 = arith.constant dense<0.000000e+00> : vector<1x512xf32>
    %466 = tpu.matmul %464, %465, %cst_124 {dimension_numbers = #tpu.dot_dimension_numbers<[1], [0], [0], [1], [0, 0, 1, 1], [], []>} : vector<1x256xbf16>, vector<256x512xbf16>, vector<1x512xf32> -> vector<1x512xf32>
    %c0_125 = arith.constant 0 : index
    %c0_126 = arith.constant 0 : index
    %467 = vector.load %arg5[%c0_125, %c0_126] : memref<1x512xf32, #tpu.memory_space<vmem>>, vector<1x512xf32>
    %468 = arith.addf %466, %467 : vector<1x512xf32>
    %469 = vector.extract_strided_slice %468 {offsets = [0, 0], sizes = [1, 128], strides = [1, 1]} : vector<1x512xf32> to vector<1x128xf32>
    %470 = arith.negf %469 : vector<1x128xf32>
    %471 = math.exp %470 : vector<1x128xf32>
    %cst_127 = arith.constant 1.000000e+00 : f32
    %472 = vector.broadcast %cst_127 : f32 to vector<1x128xf32>
    %473 = arith.addf %472, %471 : vector<1x128xf32>
    %474 = arith.divf %472, %473 : vector<1x128xf32>
    %475 = vector.extract_strided_slice %468 {offsets = [0, 128], sizes = [1, 128], strides = [1, 1]} : vector<1x512xf32> to vector<1x128xf32>
    %476 = arith.negf %475 : vector<1x128xf32>
    %477 = math.exp %476 : vector<1x128xf32>
    %cst_128 = arith.constant 1.000000e+00 : f32
    %478 = vector.broadcast %cst_128 : f32 to vector<1x128xf32>
    %479 = arith.addf %478, %477 : vector<1x128xf32>
    %480 = arith.divf %478, %479 : vector<1x128xf32>
    %481 = vector.extract_strided_slice %468 {offsets = [0, 256], sizes = [1, 128], strides = [1, 1]} : vector<1x512xf32> to vector<1x128xf32>
    %482 = math.tanh %481 : vector<1x128xf32>
    %483 = vector.extract_strided_slice %468 {offsets = [0, 384], sizes = [1, 128], strides = [1, 1]} : vector<1x512xf32> to vector<1x128xf32>
    %484 = arith.negf %483 : vector<1x128xf32>
    %485 = math.exp %484 : vector<1x128xf32>
    %cst_129 = arith.constant 1.000000e+00 : f32
    %486 = vector.broadcast %cst_129 : f32 to vector<1x128xf32>
    %487 = arith.addf %486, %485 : vector<1x128xf32>
    %488 = arith.divf %486, %487 : vector<1x128xf32>
    %489 = arith.mulf %480, %429 : vector<1x128xf32>
    %490 = arith.mulf %474, %482 : vector<1x128xf32>
    %491 = arith.addf %489, %490 : vector<1x128xf32>
    %492 = math.tanh %491 : vector<1x128xf32>
    %493 = arith.mulf %488, %492 : vector<1x128xf32>
    %c2_130 = arith.constant 2 : index
    %c0_131 = arith.constant 0 : index
    %494 = vector.load %arg6[%c2_130, %c0_131] : memref<3x128xf32, #tpu.memory_space<vmem>>, vector<1x128xf32>
    tpu.vector_store %arg6[%c2_130, %c0_131], %493 {strides = array<i32>} : memref<3x128xf32, #tpu.memory_space<vmem>>, vector<1x128xf32>,
    return
  }
}

</mosaic_0001>

<llo_original>
// kernel: tpu_custom_call.1
$region0: #{tpu_custom_call.1}
  #allocation0 [shape = 'u32[]', space=smem, size = 0x4, offset = 0x4, fixed_abs, tag = 'smem constant byte address 0x4 - core index']
  #allocation1 [shape = 'u32[144,128]{1,0:T(1,128)}', space=vmem, size = 0x12000, scoped, tag = 'internal scratch']
  #allocation2 [shape = 'f32[8,512]{1,0:T(8,128)}', space=vmem, size = 0x4000, scoped, tag = 'scratch operand']
  #allocation3 [shape = 'bf16[256,512]{1,0:T(8,128)(2,1)}', space=vmem, size = 0x40000, scoped, tag = 'scratch operand']
  #allocation4 [shape = 's32[1]{0}', space=sflag, size = 0x4, scoped, tag = 'scratch operand']
  #allocation12 [shape = 's32[]', space=sflag, size = 0x4, offset = 0, fixed_abs, tag = 'sflag constant byte address 0x0 - dummy sync flag']
  #allocation13 [shape = 's32[]', space=sflag, size = 0x4, offset = 0, fixed_abs, tag = 'sflag constant byte address 0x0 - dummy sync flag']
  #allocation14 [shape = 'u32[]', space=smem, size = 0x4, offset = 0x44, fixed_abs, tag = 'smem constant byte address 0x44 - assertion arg 0']
  #allocation15 [shape = 'u32[]', space=smem, size = 0x4, offset = 0x48, fixed_abs, tag = 'smem constant byte address 0x48 - assertion arg 1']
  %s0 = inlined_call_operand.hbm [shape: bf16[8,128], index: 0, kind: input, shape index: {}]
  %s1 = inlined_call_operand.hbm [shape: bf16[128,512], index: 1, kind: input, shape index: {}]
  %s2 = inlined_call_operand.hbm [shape: bf16[128,512], index: 2, kind: input, shape index: {}]
  %s3 = inlined_call_operand.vmem [shape: f32[1,512], index: 3, kind: input, shape index: {}]
  %s4 = inlined_call_operand.hbm [shape: bf16[256,512], index: 4, kind: input, shape index: {}]
  %s5 = inlined_call_operand.vmem [shape: f32[1,512], index: 5, kind: input, shape index: {}]
  %s6 = inlined_call_operand.hbm [shape: f32[3,128], index: 6, kind: output, shape index: {}]
  %s7 = sld [smem:[#allocation0]]
  $region46: #{tpu_custom_call.1} parent=0
    _
  %s9 = ssub.s32 1, %s7
  %s10 = scalar_select 0, %s9, %s7
  $region1: #{tpu_custom_call.1} parent=0
    #allocation5 [shape = 'u8[2048]{0}', space=vmem, size = 0x800, scoped, tag = 'input window, operand 0, single buffered']
    #allocation6 [shape = 's32[1]{0}', space=sflag, size = 0x4, scoped, tag = 'scoped memory for tpu_custom_call.1']
    #allocation7 [shape = 's32[1]{0}', space=sflag, size = 0x4, scoped, tag = 'scoped memory for tpu_custom_call.1']
    #allocation8 [shape = 'u8[131072]{0}', space=vmem, size = 0x20000, scoped, tag = 'input window, operand 1, single buffered']
    #allocation9 [shape = 's32[1]{0}', space=sflag, size = 0x4, scoped, tag = 'scoped memory for tpu_custom_call.1']
    #allocation10 [shape = 'u8[131072]{0}', space=vmem, size = 0x20000, scoped, tag = 'input window, operand 2, single buffered']
    #allocation11 [shape = 'u8[2048]{0}', space=vmem, size = 0x800, scoped, tag = 'output window, operand 0, single buffered']
    %11 = vsyncpa [#allocation6], 0
    %12 = vsyncpa [#allocation9], 0
    %13 = vsyncpa [#allocation7], 0
    // Predicated region
    $region2: #{tpu_custom_call.1} parent=1 // pred_check
      _
    $region3: #{tpu_custom_call.1} parent=1 // pred_check_branch
      %15 = sbr.rel (0) target = $region5
    $region4: #{tpu_custom_call.1} parent=1 // pred_region
      %s17 = ssub.s32 64, 64
      %18 = vsyncadd [#allocation6], %s17
      %s20 = sshll.u32 [#allocation5], 4
      %s21 = int_to_ptr.vmem [resolvable:$true] %s20
      %23 = dma.hbm_to_vmem [thread:$0]  %s0, 64, %s21, [#allocation6]
    $region5: #{tpu_custom_call.1} parent=1 // pred_fallthru
      _
    // Predicated region
    $region6: #{tpu_custom_call.1} parent=1 // pred_check
      _
    $region7: #{tpu_custom_call.1} parent=1 // pred_check_branch
      %25 = sbr.rel (0) target = $region9
    $region8: #{tpu_custom_call.1} parent=1 // pred_region
      %s27 = ssub.s32 4096, 4096
      %28 = vsyncadd [#allocation9], %s27
      %s29 = sshll.u32 [#allocation8], 4
      %s30 = int_to_ptr.vmem [resolvable:$true] %s29
      %35 = dma.hbm_to_vmem [thread:$0]  %s1, 4096, %s30, [#allocation9], 256, 256, 16
    $region9: #{tpu_custom_call.1} parent=1 // pred_fallthru
      _
    // Predicated region
    $region10: #{tpu_custom_call.1} parent=1 // pred_check
      _
    $region11: #{tpu_custom_call.1} parent=1 // pred_check_branch
      %37 = sbr.rel (0) target = $region13
    $region12: #{tpu_custom_call.1} parent=1 // pred_region
      %s39 = ssub.s32 4096, 4096
      %40 = vsyncadd [#allocation9], %s39
      %s41 = sshll.u32 [#allocation10], 4
      %s42 = int_to_ptr.vmem [resolvable:$true] %s41
      %47 = dma.hbm_to_vmem [thread:$0]  %s2, 4096, %s42, [#allocation9], 256, 256, 16
    $region13: #{tpu_custom_call.1} parent=1 // pred_fallthru
      _
    // Predicated region
    $region14: #{tpu_custom_call.1} parent=1 // pred_check
      _
    $region15: #{tpu_custom_call.1} parent=1 // pred_check_branch
      %49 = sbr.rel (0) target = $region17
    $region16: #{tpu_custom_call.1} parent=1 // pred_region
      _
    $region17: #{tpu_custom_call.1} parent=1 // pred_fallthru
      _
    // Predicated region
    $region18: #{tpu_custom_call.1} parent=1 // pred_check
      _
    $region19: #{tpu_custom_call.1} parent=1 // pred_check_branch
      %51 = sbr.rel (0) target = $region21
    $region20: #{tpu_custom_call.1} parent=1 // pred_region
      _
    $region21: #{tpu_custom_call.1} parent=1 // pred_fallthru
      _
    // Predicated region
    $region22: #{tpu_custom_call.1} parent=1 // pred_check
      _
    $region23: #{tpu_custom_call.1} parent=1 // pred_check_branch
      %53 = sbr.rel (0) target = $region25
    $region24: #{tpu_custom_call.1} parent=1 // pred_region
      %54 = dma.done [#allocation6], 64
    $region25: #{tpu_custom_call.1} parent=1 // pred_fallthru
      _
    // Predicated region
    $region26: #{tpu_custom_call.1} parent=1 // pred_check
      _
    $region27: #{tpu_custom_call.1} parent=1 // pred_check_branch
      %56 = sbr.rel (0) target = $region29
    $region28: #{tpu_custom_call.1} parent=1 // pred_region
      %57 = dma.done [#allocation9], 4096
    $region29: #{tpu_custom_call.1} parent=1 // pred_fallthru
      _
    // Predicated region
    $region30: #{tpu_custom_call.1} parent=1 // pred_check
      _
    $region31: #{tpu_custom_call.1} parent=1 // pred_check_branch
      %59 = sbr.rel (0) target = $region33
    $region32: #{tpu_custom_call.1} parent=1 // pred_region
      %60 = dma.done [#allocation9], 4096
    $region33: #{tpu_custom_call.1} parent=1 // pred_fallthru
      _
    // Predicated region
    $region34: #{tpu_custom_call.1} parent=1 // pred_check
      _
    $region35: #{tpu_custom_call.1} parent=1 // pred_check_branch
      %63 = sbr.rel target = $region37
    $region36: #{tpu_custom_call.1} parent=1 // pred_region
      %64 = sst [smem:[#allocation14]] [#allocation13]
      %65 = sst [smem:[#allocation15]] [#allocation12]
    $region37: #{tpu_custom_call.1} parent=1 // pred_fallthru
      _
    %67 = shalt.err (0)
    %s69 = sshll.u32 [#allocation3], 4
    %s70 = int_to_ptr.vmem [resolvable:$true] %s69
    %72 = dma.hbm_to_vmem [thread:$0]  %s4, 8192, %s70, [#allocation4]
    %v73 = vld [vmem:[#allocation5] sm:$0xf]
    %v74 = vld [vmem:[#allocation8] sm:$0xff]
    %v75 = vld [vmem:[#allocation8 + $0x8] sm:$0xff]
    %v76 = vld [vmem:[#allocation8 + $0x10] sm:$0xff]
    %v77 = vld [vmem:[#allocation8 + $0x18] sm:$0xff]
    %v78 = vld [vmem:[#allocation8 + $0x20] sm:$0xff]
    %v79 = vld [vmem:[#allocation8 + $0x28] sm:$0xff]
    %v80 = vld [vmem:[#allocation8 + $0x30] sm:$0xff]
    %v81 = vld [vmem:[#allocation8 + $0x38] sm:$0xff]
    %v82 = vld [vmem:[#allocation8 + $0x40] sm:$0xff]
    %v83 = vld [vmem:[#allocation8 + $0x48] sm:$0xff]
    %v84 = vld [vmem:[#allocation8 + $0x50] sm:$0xff]
    %v85 = vld [vmem:[#allocation8 + $0x58] sm:$0xff]
    %v86 = vld [vmem:[#allocation8 + $0x60] sm:$0xff]
    %v87 = vld [vmem:[#allocation8 + $0x68] sm:$0xff]
    %v88 = vld [vmem:[#allocation8 + $0x70] sm:$0xff]
    %v89 = vld [vmem:[#allocation8 + $0x78] sm:$0xff]
    %v90 = vld [vmem:[#allocation8 + $0x80] sm:$0xff]
    %v91 = vld [vmem:[#allocation8 + $0x88] sm:$0xff]
    %v92 = vld [vmem:[#allocation8 + $0x90] sm:$0xff]
    %v93 = vld [vmem:[#allocation8 + $0x98] sm:$0xff]
    %v94 = vld [vmem:[#allocation8 + $0xa0] sm:$0xff]
    %v95 = vld [vmem:[#allocation8 + $0xa8] sm:$0xff]
    %v96 = vld [vmem:[#allocation8 + $0xb0] sm:$0xff]
    %v97 = vld [vmem:[#allocation8 + $0xb8] sm:$0xff]
    %v98 = vld [vmem:[#allocation8 + $0xc0] sm:$0xff]
    %v99 = vld [vmem:[#allocation8 + $0xc8] sm:$0xff]
    %v100 = vld [vmem:[#allocation8 + $0xd0] sm:$0xff]
    %v101 = vld [vmem:[#allocation8 + $0xd8] sm:$0xff]
    %v102 = vld [vmem:[#allocation8 + $0xe0] sm:$0xff]
    %v103 = vld [vmem:[#allocation8 + $0xe8] sm:$0xff]
    %v104 = vld [vmem:[#allocation8 + $0xf0] sm:$0xff]
    %v105 = vld [vmem:[#allocation8 + $0xf8] sm:$0xff]
    %v106 = vld [vmem:[%s3] sm:$0xf]
    %v108 = vlaneseq
    %v109 = vshrl.u32 %v108, 7
    %v110 = vsub.s32 0, %v109
    %v111 = vrot.slane %v106, %v110
    %v112 = vlaneseq
    %v113 = vshrl.u32 %v112, 7
    %v114 = vsub.s32 1, %v113
    %v115 = vrot.slane %v106, %v114
    %v116 = vlaneseq
    %v117 = vshrl.u32 %v116, 7
    %v118 = vsub.s32 2, %v117
    %v119 = vrot.slane %v106, %v118
    %v120 = vlaneseq
    %v121 = vshrl.u32 %v120, 7
    %v122 = vsub.s32 3, %v121
    %v123 = vrot.slane %v106, %v122
    %v160 = vunpack.c.l.b16 %v74
    %v161 = vunpack.c.h.b16 %v74
    %v162 = vunpack.c.l.b16 %v75
    %v163 = vunpack.c.h.b16 %v75
    %v164 = vunpack.c.l.b16 %v76
    %v165 = vunpack.c.h.b16 %v76
    %v166 = vunpack.c.l.b16 %v77
    %v167 = vunpack.c.h.b16 %v77
    %v168 = vunpack.c.l.b16 %v78
    %v169 = vunpack.c.h.b16 %v78
    %v170 = vunpack.c.l.b16 %v79
    %v171 = vunpack.c.h.b16 %v79
    %v172 = vunpack.c.l.b16 %v80
    %v173 = vunpack.c.h.b16 %v80
    %v174 = vunpack.c.l.b16 %v81
    %v175 = vunpack.c.h.b16 %v81
    %v176 = vunpack.c.l.b16 %v82
    %v177 = vunpack.c.h.b16 %v82
    %v178 = vunpack.c.l.b16 %v83
    %v179 = vunpack.c.h.b16 %v83
    %v180 = vunpack.c.l.b16 %v84
    %v181 = vunpack.c.h.b16 %v84
    %v182 = vunpack.c.l.b16 %v85
    %v183 = vunpack.c.h.b16 %v85
    %v184 = vunpack.c.l.b16 %v86
    %v185 = vunpack.c.h.b16 %v86
    %v186 = vunpack.c.l.b16 %v87
    %v187 = vunpack.c.h.b16 %v87
    %v188 = vunpack.c.l.b16 %v88
    %v189 = vunpack.c.h.b16 %v88
    %v190 = vunpack.c.l.b16 %v89
    %v191 = vunpack.c.h.b16 %v89
    %v192 = vunpack.c.l.b16 %v90
    %v193 = vunpack.c.h.b16 %v90
    %v194 = vunpack.c.l.b16 %v91
    %v195 = vunpack.c.h.b16 %v91
    %v196 = vunpack.c.l.b16 %v92
    %v197 = vunpack.c.h.b16 %v92
    %v198 = vunpack.c.l.b16 %v93
    %v199 = vunpack.c.h.b16 %v93
    %v200 = vunpack.c.l.b16 %v94
    %v201 = vunpack.c.h.b16 %v94
    %v202 = vunpack.c.l.b16 %v95
    %v203 = vunpack.c.h.b16 %v95
    %v204 = vunpack.c.l.b16 %v96
    %v205 = vunpack.c.h.b16 %v96
    %v206 = vunpack.c.l.b16 %v97
    %v207 = vunpack.c.h.b16 %v97
    %v208 = vunpack.c.l.b16 %v98
    %v209 = vunpack.c.h.b16 %v98
    %v210 = vunpack.c.l.b16 %v99
    %v211 = vunpack.c.h.b16 %v99
    %v212 = vunpack.c.l.b16 %v100
    %v213 = vunpack.c.h.b16 %v100
    %v214 = vunpack.c.l.b16 %v101
    %v215 = vunpack.c.h.b16 %v101
    %v216 = vunpack.c.l.b16 %v102
    %v217 = vunpack.c.h.b16 %v102
    %v218 = vunpack.c.l.b16 %v103
    %v219 = vunpack.c.h.b16 %v103
    %v220 = vunpack.c.l.b16 %v104
    %v221 = vunpack.c.h.b16 %v104
    %v222 = vunpack.c.l.b16 %v105
    %v223 = vunpack.c.h.b16 %v105
    %v224 = vpack.c.b16 %v164, %v160
    %v225 = vpack.c.b16 %v165, %v161
    %v226 = vpack.c.b16 %v166, %v162
    %v227 = vpack.c.b16 %v167, %v163
    %v228 = vpack.c.b16 %v172, %v168
    %v229 = vpack.c.b16 %v173, %v169
    %v230 = vpack.c.b16 %v174, %v170
    %v231 = vpack.c.b16 %v175, %v171
    %v232 = vpack.c.b16 %v180, %v176
    %v233 = vpack.c.b16 %v181, %v177
    %v234 = vpack.c.b16 %v182, %v178
    %v235 = vpack.c.b16 %v183, %v179
    %v236 = vpack.c.b16 %v188, %v184
    %v237 = vpack.c.b16 %v189, %v185
    %v238 = vpack.c.b16 %v190, %v186
    %v239 = vpack.c.b16 %v191, %v187
    %v240 = vpack.c.b16 %v196, %v192
    %v241 = vpack.c.b16 %v197, %v193
    %v242 = vpack.c.b16 %v198, %v194
    %v243 = vpack.c.b16 %v199, %v195
    %v244 = vpack.c.b16 %v204, %v200
    %v245 = vpack.c.b16 %v205, %v201
    %v246 = vpack.c.b16 %v206, %v202
    %v247 = vpack.c.b16 %v207, %v203
    %v248 = vpack.c.b16 %v212, %v208
    %v249 = vpack.c.b16 %v213, %v209
    %v250 = vpack.c.b16 %v214, %v210
    %v251 = vpack.c.b16 %v215, %v211
    %v252 = vpack.c.b16 %v220, %v216
    %v253 = vpack.c.b16 %v221, %v217
    %v254 = vpack.c.b16 %v222, %v218
    %v255 = vpack.c.b16 %v223, %v219
    %288 = vmatprep.subr.bf16.mxu0 %v253
    %289 = vmatpush1.bf16.msra.mxu0 %v252
    %290 = vmatprep.subr.bf16.mxu0 %v249
    %291 = vmatpush1.bf16.msra.mxu0 %v248
    %292 = vmatprep.subr.bf16.mxu0 %v245
    %293 = vmatpush1.bf16.msra.mxu0 %v244
    %294 = vmatprep.subr.bf16.mxu0 %v241
    %295 = vmatpush1.bf16.msra.mxu0 %v240
    %296 = vmatprep.subr.bf16.mxu0 %v237
    %297 = vmatpush1.bf16.msra.mxu0 %v236
    %298 = vmatprep.subr.bf16.mxu0 %v233
    %299 = vmatpush1.bf16.msra.mxu0 %v232
    %300 = vmatprep.subr.bf16.mxu0 %v229
    %301 = vmatpush1.bf16.msra.mxu0 %v228
    %302 = vmatprep.subr.bf16.mxu0 %v225
    %303 = vmatpush1.bf16.msra.mxu0 %v224
    %304 = vmatprep.subr.bf16.mxu0 0
    %305 = vmatpush2.bf16.msra.mxu0 0
    %306 = vmatprep.subr.bf16.mxu0 0
    %307 = vmatpush2.bf16.msra.mxu0 0
    %308 = vmatprep.subr.bf16.mxu0 0
    %309 = vmatpush2.bf16.msra.mxu0 0
    %310 = vmatprep.subr.bf16.mxu0 0
    %311 = vmatpush2.bf16.msra.mxu0 0
    %312 = vmatprep.subr.bf16.mxu0 0
    %313 = vmatpush2.bf16.msra.mxu0 0
    %314 = vmatprep.subr.bf16.mxu0 0
    %315 = vmatpush2.bf16.msra.mxu0 0
    %316 = vmatprep.subr.bf16.mxu0 0
    %317 = vmatpush2.bf16.msra.mxu0 0
    %318 = vmatprep.subr.bf16.mxu0 0
    %319 = vmatpush2.bf16.msra.mxu0 0
    %320 = vmatprep.mubr.bf16.mxu0 0
    %321 = vmatmul.mubr.bf16.gmra.mxu0 %v73
    %v322 = vpop.f32.mrf.mxu0
    %v323 = vadd.f32 %v111, %v322
    %v324 = vpop.f32.mrf.mxu0
    %v325 = vadd.f32 %v115, %v324
    %v326 = vpop.f32.mrf.mxu0
    %v327 = vpop.f32.mrf.mxu0
    %328 = vdwg.mxu0
    %329 = vmatprep.subr.bf16.mxu0 %v255
    %330 = vmatpush1.bf16.msra.mxu0 %v254
    %331 = vmatprep.subr.bf16.mxu0 %v251
    %332 = vmatpush1.bf16.msra.mxu0 %v250
    %333 = vmatprep.subr.bf16.mxu0 %v247
    %334 = vmatpush1.bf16.msra.mxu0 %v246
    %335 = vmatprep.subr.bf16.mxu0 %v243
    %336 = vmatpush1.bf16.msra.mxu0 %v242
    %337 = vmatprep.subr.bf16.mxu0 %v239
    %338 = vmatpush1.bf16.msra.mxu0 %v238
    %339 = vmatprep.subr.bf16.mxu0 %v235
    %340 = vmatpush1.bf16.msra.mxu0 %v234
    %341 = vmatprep.subr.bf16.mxu0 %v231
    %342 = vmatpush1.bf16.msra.mxu0 %v230
    %343 = vmatprep.subr.bf16.mxu0 %v227
    %344 = vmatpush1.bf16.msra.mxu0 %v226
    %345 = vmatprep.subr.bf16.mxu0 0
    %346 = vmatpush2.bf16.msra.mxu0 0
    %347 = vmatprep.subr.bf16.mxu0 0
    %348 = vmatpush2.bf16.msra.mxu0 0
    %349 = vmatprep.subr.bf16.mxu0 0
    %350 = vmatpush2.bf16.msra.mxu0 0
    %351 = vmatprep.subr.bf16.mxu0 0
    %352 = vmatpush2.bf16.msra.mxu0 0
    %353 = vmatprep.subr.bf16.mxu0 0
    %354 = vmatpush2.bf16.msra.mxu0 0
    %355 = vmatprep.subr.bf16.mxu0 0
    %356 = vmatpush2.bf16.msra.mxu0 0
    %357 = vmatprep.subr.bf16.mxu0 0
    %358 = vmatpush2.bf16.msra.mxu0 0
    %359 = vmatprep.subr.bf16.mxu0 0
    %360 = vmatpush2.bf16.msra.mxu0 0
    %361 = vmatprep.mubr.bf16.mxu0 0
    %362 = vmatmul.mubr.bf16.gmra.mxu0 %v73
    %v363 = vpop.f32.mrf.mxu0
    %v364 = vadd.f32 %v119, %v363
    %v365 = vpop.f32.mrf.mxu0
    %v366 = vadd.f32 %v123, %v365
    %v367 = vpop.f32.mrf.mxu0
    %v368 = vpop.f32.mrf.mxu0
    %369 = vdwg.mxu0
    %370 = vst [vmem:[#allocation2] sm:$0xff] %v323
    %371 = vst [vmem:[#allocation2 + $0x8] sm:$0xff] %v325
    %372 = vst [vmem:[#allocation2 + $0x10] sm:$0xff] %v364
    %373 = vst [vmem:[#allocation2 + $0x18] sm:$0xff] %v366
    %v374 = vld [vmem:[#allocation2] ss:$8 sm:$0xf]
    %v375 = vxor.u32 %v374, 2147483648
    %v376 = vmul.f32 %v375, 1.442695
    %v377 = vpow.pop %v376
    %v378 = vadd.f32 %v377, 1.0
    %v379 = vrcp.pop %v378
    %v380 = vmul.f32 1.0, %v379
    %v382 = vrot.slane %v374, 1
    %v384 = vxor.u32 %v382, 2147483648
    %v385 = vmul.f32 %v384, 1.442695
    %v386 = vpow.pop %v385
    %v387 = vadd.f32 %v386, 1.0
    %v388 = vrcp.pop %v387
    %v389 = vmul.f32 1.0, %v388
    %v390 = vrot.slane %v374, 2
    %v392 = vtanh.pop %v390
    %v393 = vrot.slane %v374, 3
    %v395 = vxor.u32 %v393, 2147483648
    %v396 = vmul.f32 %v395, 1.442695
    %v397 = vpow.pop %v396
    %v398 = vadd.f32 %v397, 1.0
    %v399 = vrcp.pop %v398
    %v400 = vmul.f32 1.0, %v399
    %v401 = vmul.f32 %v389, 0.0
    %v402 = vmul.f32 %v380, %v392
    %v403 = vadd.f32 %v401, %v402
    %v404 = vtanh.pop %v403
    %v405 = vmul.f32 %v400, %v404
    %s406 = smul.u32 4, 32
    %s407 = smul.u32 %s406, 4
    %s408 = sshll.u32 %s407, 4
    %409 = dma.done [#allocation4], %s408
    %v410 = vpack.c.bf16 %v405, %v405
    %v411 = vpack.c.bf16 0.0, 0.0
    %v412 = vld [vmem:[#allocation3] sm:$0xff]
    %v413 = vld [vmem:[#allocation3 + $0x8] sm:$0xff]
    %v414 = vld [vmem:[#allocation3 + $0x10] sm:$0xff]
    %v415 = vld [vmem:[#allocation3 + $0x18] sm:$0xff]
    %v416 = vld [vmem:[#allocation3 + $0x20] sm:$0xff]
    %v417 = vld [vmem:[#allocation3 + $0x28] sm:$0xff]
    %v418 = vld [vmem:[#allocation3 + $0x30] sm:$0xff]
    %v419 = vld [vmem:[#allocation3 + $0x38] sm:$0xff]
    %v420 = vld [vmem:[#allocation3 + $0x40] sm:$0xff]
    %v421 = vld [vmem:[#allocation3 + $0x48] sm:$0xff]
    %v422 = vld [vmem:[#allocation3 + $0x50] sm:$0xff]
    %v423 = vld [vmem:[#allocation3 + $0x58] sm:$0xff]
    %v424 = vld [vmem:[#allocation3 + $0x60] sm:$0xff]
    %v425 = vld [vmem:[#allocation3 + $0x68] sm:$0xff]
    %v426 = vld [vmem:[#allocation3 + $0x70] sm:$0xff]
    %v427 = vld [vmem:[#allocation3 + $0x78] sm:$0xff]
    %v428 = vld [vmem:[#allocation3 + $0x80] sm:$0xff]
    %v429 = vld [vmem:[#allocation3 + $0x88] sm:$0xff]
    %v430 = vld [vmem:[#allocation3 + $0x90] sm:$0xff]
    %v431 = vld [vmem:[#allocation3 + $0x98] sm:$0xff]
    %v432 = vld [vmem:[#allocation3 + $0xa0] sm:$0xff]
    %v433 = vld [vmem:[#allocation3 + $0xa8] sm:$0xff]
    %v434 = vld [vmem:[#allocation3 + $0xb0] sm:$0xff]
    %v435 = vld [vmem:[#allocation3 + $0xb8] sm:$0xff]
    %v436 = vld [vmem:[#allocation3 + $0xc0] sm:$0xff]
    %v437 = vld [vmem:[#allocation3 + $0xc8] sm:$0xff]
    %v438 = vld [vmem:[#allocation3 + $0xd0] sm:$0xff]
    %v439 = vld [vmem:[#allocation3 + $0xd8] sm:$0xff]
    %v440 = vld [vmem:[#allocation3 + $0xe0] sm:$0xff]
    %v441 = vld [vmem:[#allocation3 + $0xe8] sm:$0xff]
    %v442 = vld [vmem:[#allocation3 + $0xf0] sm:$0xff]
    %v443 = vld [vmem:[#allocation3 + $0xf8] sm:$0xff]
    %v444 = vld [vmem:[#allocation3 + $0x100] sm:$0xff]
    %v445 = vld [vmem:[#allocation3 + $0x108] sm:$0xff]
    %v446 = vld [vmem:[#allocation3 + $0x110] sm:$0xff]
    %v447 = vld [vmem:[#allocation3 + $0x118] sm:$0xff]
    %v448 = vld [vmem:[#allocation3 + $0x120] sm:$0xff]
    %v449 = vld [vmem:[#allocation3 + $0x128] sm:$0xff]
    %v450 = vld [vmem:[#allocation3 + $0x130] sm:$0xff]
    %v451 = vld [vmem:[#allocation3 + $0x138] sm:$0xff]
    %v452 = vld [vmem:[#allocation3 + $0x140] sm:$0xff]
    %v453 = vld [vmem:[#allocation3 + $0x148] sm:$0xff]
    %v454 = vld [vmem:[#allocation3 + $0x150] sm:$0xff]
    %v455 = vld [vmem:[#allocation3 + $0x158] sm:$0xff]
    %v456 = vld [vmem:[#allocation3 + $0x160] sm:$0xff]
    %v457 = vld [vmem:[#allocation3 + $0x168] sm:$0xff]
    %v458 = vld [vmem:[#allocation3 + $0x170] sm:$0xff]
    %v459 = vld [vmem:[#allocation3 + $0x178] sm:$0xff]
    %v460 = vld [vmem:[#allocation3 + $0x180] sm:$0xff]
    %v461 = vld [vmem:[#allocation3 + $0x188] sm:$0xff]
    %v462 = vld [vmem:[#allocation3 + $0x190] sm:$0xff]
    %v463 = vld [vmem:[#allocation3 + $0x198] sm:$0xff]
    %v464 = vld [vmem:[#allocation3 + $0x1a0] sm:$0xff]
    %v465 = vld [vmem:[#allocation3 + $0x1a8] sm:$0xff]
    %v466 = vld [vmem:[#allocation3 + $0x1b0] sm:$0xff]
    %v467 = vld [vmem:[#allocation3 + $0x1b8] sm:$0xff]
    %v468 = vld [vmem:[#allocation3 + $0x1c0] sm:$0xff]
    %v469 = vld [vmem:[#allocation3 + $0x1c8] sm:$0xff]
    %v470 = vld [vmem:[#allocation3 + $0x1d0] sm:$0xff]
    %v471 = vld [vmem:[#allocation3 + $0x1d8] sm:$0xff]
    %v472 = vld [vmem:[#allocation3 + $0x1e0] sm:$0xff]
    %v473 = vld [vmem:[#allocation3 + $0x1e8] sm:$0xff]
    %v474 = vld [vmem:[#allocation3 + $0x1f0] sm:$0xff]
    %v475 = vld [vmem:[#allocation3 + $0x1f8] sm:$0xff]
    %v476 = vld [vmem:[%s5] sm:$0xf]
    %v541 = vunpack.c.l.b16 %v412
    %v542 = vunpack.c.h.b16 %v412
    %v543 = vunpack.c.l.b16 %v413
    %v544 = vunpack.c.h.b16 %v413
    %v545 = vunpack.c.l.b16 %v414
    %v546 = vunpack.c.h.b16 %v414
    %v547 = vunpack.c.l.b16 %v415
    %v548 = vunpack.c.h.b16 %v415
    %v549 = vunpack.c.l.b16 %v416
    %v550 = vunpack.c.h.b16 %v416
    %v551 = vunpack.c.l.b16 %v417
    %v552 = vunpack.c.h.b16 %v417
    %v553 = vunpack.c.l.b16 %v418
    %v554 = vunpack.c.h.b16 %v418
    %v555 = vunpack.c.l.b16 %v419
    %v556 = vunpack.c.h.b16 %v419
    %v557 = vunpack.c.l.b16 %v420
    %v558 = vunpack.c.h.b16 %v420
    %v559 = vunpack.c.l.b16 %v421
    %v560 = vunpack.c.h.b16 %v421
    %v561 = vunpack.c.l.b16 %v422
    %v562 = vunpack.c.h.b16 %v422
    %v563 = vunpack.c.l.b16 %v423
    %v564 = vunpack.c.h.b16 %v423
    %v565 = vunpack.c.l.b16 %v424
    %v566 = vunpack.c.h.b16 %v424
    %v567 = vunpack.c.l.b16 %v425
    %v568 = vunpack.c.h.b16 %v425
    %v569 = vunpack.c.l.b16 %v426
    %v570 = vunpack.c.h.b16 %v426
    %v571 = vunpack.c.l.b16 %v427
    %v572 = vunpack.c.h.b16 %v427
    %v573 = vunpack.c.l.b16 %v428
    %v574 = vunpack.c.h.b16 %v428
    %v575 = vunpack.c.l.b16 %v429
    %v576 = vunpack.c.h.b16 %v429
    %v577 = vunpack.c.l.b16 %v430
    %v578 = vunpack.c.h.b16 %v430
    %v579 = vunpack.c.l.b16 %v431
    %v580 = vunpack.c.h.b16 %v431
    %v581 = vunpack.c.l.b16 %v432
    %v582 = vunpack.c.h.b16 %v432
    %v583 = vunpack.c.l.b16 %v433
    %v584 = vunpack.c.h.b16 %v433
    %v585 = vunpack.c.l.b16 %v434
    %v586 = vunpack.c.h.b16 %v434
    %v587 = vunpack.c.l.b16 %v435
    %v588 = vunpack.c.h.b16 %v435
    %v589 = vunpack.c.l.b16 %v436
    %v590 = vunpack.c.h.b16 %v436
    %v591 = vunpack.c.l.b16 %v437
    %v592 = vunpack.c.h.b16 %v437
    %v593 = vunpack.c.l.b16 %v438
    %v594 = vunpack.c.h.b16 %v438
    %v595 = vunpack.c.l.b16 %v439
    %v596 = vunpack.c.h.b16 %v439
    %v597 = vunpack.c.l.b16 %v440
    %v598 = vunpack.c.h.b16 %v440
    %v599 = vunpack.c.l.b16 %v441
    %v600 = vunpack.c.h.b16 %v441
    %v601 = vunpack.c.l.b16 %v442
    %v602 = vunpack.c.h.b16 %v442
    %v603 = vunpack.c.l.b16 %v443
    %v604 = vunpack.c.h.b16 %v443
    %v605 = vunpack.c.l.b16 %v444
    %v606 = vunpack.c.h.b16 %v444
    %v607 = vunpack.c.l.b16 %v445
    %v608 = vunpack.c.h.b16 %v445
    %v609 = vunpack.c.l.b16 %v446
    %v610 = vunpack.c.h.b16 %v446
    %v611 = vunpack.c.l.b16 %v447
    %v612 = vunpack.c.h.b16 %v447
    %v613 = vunpack.c.l.b16 %v448
    %v614 = vunpack.c.h.b16 %v448
    %v615 = vunpack.c.l.b16 %v449
    %v616 = vunpack.c.h.b16 %v449
    %v617 = vunpack.c.l.b16 %v450
    %v618 = vunpack.c.h.b16 %v450
    %v619 = vunpack.c.l.b16 %v451
    %v620 = vunpack.c.h.b16 %v451
    %v621 = vunpack.c.l.b16 %v452
    %v622 = vunpack.c.h.b16 %v452
    %v623 = vunpack.c.l.b16 %v453
    %v624 = vunpack.c.h.b16 %v453
    %v625 = vunpack.c.l.b16 %v454
    %v626 = vunpack.c.h.b16 %v454
    %v627 = vunpack.c.l.b16 %v455
    %v628 = vunpack.c.h.b16 %v455
    %v629 = vunpack.c.l.b16 %v456
    %v630 = vunpack.c.h.b16 %v456
    %v631 = vunpack.c.l.b16 %v457
    %v632 = vunpack.c.h.b16 %v457
    %v633 = vunpack.c.l.b16 %v458
    %v634 = vunpack.c.h.b16 %v458
    %v635 = vunpack.c.l.b16 %v459
    %v636 = vunpack.c.h.b16 %v459
    %v637 = vunpack.c.l.b16 %v460
    %v638 = vunpack.c.h.b16 %v460
    %v639 = vunpack.c.l.b16 %v461
    %v640 = vunpack.c.h.b16 %v461
    %v641 = vunpack.c.l.b16 %v462
    %v642 = vunpack.c.h.b16 %v462
    %v643 = vunpack.c.l.b16 %v463
    %v644 = vunpack.c.h.b16 %v463
    %v645 = vunpack.c.l.b16 %v464
    %v646 = vunpack.c.h.b16 %v464
    %v647 = vunpack.c.l.b16 %v465
    %v648 = vunpack.c.h.b16 %v465
    %v649 = vunpack.c.l.b16 %v466
    %v650 = vunpack.c.h.b16 %v466
    %v651 = vunpack.c.l.b16 %v467
    %v652 = vunpack.c.h.b16 %v467
    %v653 = vunpack.c.l.b16 %v468
    %v654 = vunpack.c.h.b16 %v468
    %v655 = vunpack.c.l.b16 %v469
    %v656 = vunpack.c.h.b16 %v469
    %v657 = vunpack.c.l.b16 %v470
    %v658 = vunpack.c.h.b16 %v470
    %v659 = vunpack.c.l.b16 %v471
    %v660 = vunpack.c.h.b16 %v471
    %v661 = vunpack.c.l.b16 %v472
    %v662 = vunpack.c.h.b16 %v472
    %v663 = vunpack.c.l.b16 %v473
    %v664 = vunpack.c.h.b16 %v473
    %v665 = vunpack.c.l.b16 %v474
    %v666 = vunpack.c.h.b16 %v474
    %v667 = vunpack.c.l.b16 %v475
    %v668 = vunpack.c.h.b16 %v475
    %v669 = vpack.c.b16 %v545, %v541
    %v670 = vpack.c.b16 %v546, %v542
    %v671 = vpack.c.b16 %v547, %v543
    %v672 = vpack.c.b16 %v548, %v544
    %v673 = vpack.c.b16 %v553, %v549
    %v674 = vpack.c.b16 %v554, %v550
    %v675 = vpack.c.b16 %v555, %v551
    %v676 = vpack.c.b16 %v556, %v552
    %v677 = vpack.c.b16 %v561, %v557
    %v678 = vpack.c.b16 %v562, %v558
    %v679 = vpack.c.b16 %v563, %v559
    %v680 = vpack.c.b16 %v564, %v560
    %v681 = vpack.c.b16 %v569, %v565
    %v682 = vpack.c.b16 %v570, %v566
    %v683 = vpack.c.b16 %v571, %v567
    %v684 = vpack.c.b16 %v572, %v568
    %v685 = vpack.c.b16 %v577, %v573
    %v686 = vpack.c.b16 %v578, %v574
    %v687 = vpack.c.b16 %v579, %v575
    %v688 = vpack.c.b16 %v580, %v576
    %v689 = vpack.c.b16 %v585, %v581
    %v690 = vpack.c.b16 %v586, %v582
    %v691 = vpack.c.b16 %v587, %v583
    %v692 = vpack.c.b16 %v588, %v584
    %v693 = vpack.c.b16 %v593, %v589
    %v694 = vpack.c.b16 %v594, %v590
    %v695 = vpack.c.b16 %v595, %v591
    %v696 = vpack.c.b16 %v596, %v592
    %v697 = vpack.c.b16 %v601, %v597
    %v698 = vpack.c.b16 %v602, %v598
    %v699 = vpack.c.b16 %v603, %v599
    %v700 = vpack.c.b16 %v604, %v600
    %v701 = vpack.c.b16 %v609, %v605
    %v702 = vpack.c.b16 %v610, %v606
    %v703 = vpack.c.b16 %v611, %v607
    %v704 = vpack.c.b16 %v612, %v608
    %v705 = vpack.c.b16 %v617, %v613
    %v706 = vpack.c.b16 %v618, %v614
    %v707 = vpack.c.b16 %v619, %v615
    %v708 = vpack.c.b16 %v620, %v616
    %v709 = vpack.c.b16 %v625, %v621
    %v710 = vpack.c.b16 %v626, %v622
    %v711 = vpack.c.b16 %v627, %v623
    %v712 = vpack.c.b16 %v628, %v624
    %v713 = vpack.c.b16 %v633, %v629
    %v714 = vpack.c.b16 %v634, %v630
    %v715 = vpack.c.b16 %v635, %v631
    %v716 = vpack.c.b16 %v636, %v632
    %v717 = vpack.c.b16 %v641, %v637
    %v718 = vpack.c.b16 %v642, %v638
    %v719 = vpack.c.b16 %v643, %v639
    %v720 = vpack.c.b16 %v644, %v640
    %v721 = vpack.c.b16 %v649, %v645
    %v722 = vpack.c.b16 %v650, %v646
    %v723 = vpack.c.b16 %v651, %v647
    %v724 = vpack.c.b16 %v652, %v648
    %v725 = vpack.c.b16 %v657, %v653
    %v726 = vpack.c.b16 %v658, %v654
    %v727 = vpack.c.b16 %v659, %v655
    %v728 = vpack.c.b16 %v660, %v656
    %v729 = vpack.c.b16 %v665, %v661
    %v730 = vpack.c.b16 %v666, %v662
    %v731 = vpack.c.b16 %v667, %v663
    %v732 = vpack.c.b16 %v668, %v664
    %v798 = vlaneseq
    %v799 = vshrl.u32 %v798, 7
    %v800 = vsub.s32 0, %v799
    %v801 = vrot.slane %v476, %v800
    %v802 = vlaneseq
    %v803 = vshrl.u32 %v802, 7
    %v804 = vsub.s32 1, %v803
    %v805 = vrot.slane %v476, %v804
    %v806 = vlaneseq
    %v807 = vshrl.u32 %v806, 7
    %v808 = vsub.s32 2, %v807
    %v809 = vrot.slane %v476, %v808
    %v810 = vlaneseq
    %v811 = vshrl.u32 %v810, 7
    %v812 = vsub.s32 3, %v811
    %v813 = vrot.slane %v476, %v812
    %818 = vmatprep.subr.bf16.mxu0 %v698
    %819 = vmatpush1.bf16.msra.mxu0 %v697
    %820 = vmatprep.subr.bf16.mxu0 %v694
    %821 = vmatpush1.bf16.msra.mxu0 %v693
    %822 = vmatprep.subr.bf16.mxu0 %v690
    %823 = vmatpush1.bf16.msra.mxu0 %v689
    %824 = vmatprep.subr.bf16.mxu0 %v686
    %825 = vmatpush1.bf16.msra.mxu0 %v685
    %826 = vmatprep.subr.bf16.mxu0 %v682
    %827 = vmatpush1.bf16.msra.mxu0 %v681
    %828 = vmatprep.subr.bf16.mxu0 %v678
    %829 = vmatpush1.bf16.msra.mxu0 %v677
    %830 = vmatprep.subr.bf16.mxu0 %v674
    %831 = vmatpush1.bf16.msra.mxu0 %v673
    %832 = vmatprep.subr.bf16.mxu0 %v670
    %833 = vmatpush1.bf16.msra.mxu0 %v669
    %834 = vmatprep.subr.bf16.mxu0 %v730
    %835 = vmatpush2.bf16.msra.mxu0 %v729
    %836 = vmatprep.subr.bf16.mxu0 %v726
    %837 = vmatpush2.bf16.msra.mxu0 %v725
    %838 = vmatprep.subr.bf16.mxu0 %v722
    %839 = vmatpush2.bf16.msra.mxu0 %v721
    %840 = vmatprep.subr.bf16.mxu0 %v718
    %841 = vmatpush2.bf16.msra.mxu0 %v717
    %842 = vmatprep.subr.bf16.mxu0 %v714
    %843 = vmatpush2.bf16.msra.mxu0 %v713
    %844 = vmatprep.subr.bf16.mxu0 %v710
    %845 = vmatpush2.bf16.msra.mxu0 %v709
    %846 = vmatprep.subr.bf16.mxu0 %v706
    %847 = vmatpush2.bf16.msra.mxu0 %v705
    %848 = vmatprep.subr.bf16.mxu0 %v702
    %849 = vmatpush2.bf16.msra.mxu0 %v701
    %850 = vmatprep.mubr.bf16.mxu0 %v411
    %851 = vmatmul.mubr.bf16.gmra.mxu0 %v410
    %v852 = vpop.f32.mrf.mxu0
    %v853 = vadd.f32 %v801, %v852
    %v854 = vpop.f32.mrf.mxu0
    %v855 = vadd.f32 %v805, %v854
    %v856 = vpop.f32.mrf.mxu0
    %v857 = vpop.f32.mrf.mxu0
    %858 = vdwg.mxu0
    %859 = vmatprep.subr.bf16.mxu0 %v700
    %860 = vmatpush1.bf16.msra.mxu0 %v699
    %861 = vmatprep.subr.bf16.mxu0 %v696
    %862 = vmatpush1.bf16.msra.mxu0 %v695
    %863 = vmatprep.subr.bf16.mxu0 %v692
    %864 = vmatpush1.bf16.msra.mxu0 %v691
    %865 = vmatprep.subr.bf16.mxu0 %v688
    %866 = vmatpush1.bf16.msra.mxu0 %v687
    %867 = vmatprep.subr.bf16.mxu0 %v684
    %868 = vmatpush1.bf16.msra.mxu0 %v683
    %869 = vmatprep.subr.bf16.mxu0 %v680
    %870 = vmatpush1.bf16.msra.mxu0 %v679
    %871 = vmatprep.subr.bf16.mxu0 %v676
    %872 = vmatpush1.bf16.msra.mxu0 %v675
    %873 = vmatprep.subr.bf16.mxu0 %v672
    %874 = vmatpush1.bf16.msra.mxu0 %v671
    %875 = vmatprep.subr.bf16.mxu0 %v732
    %876 = vmatpush2.bf16.msra.mxu0 %v731
    %877 = vmatprep.subr.bf16.mxu0 %v728
    %878 = vmatpush2.bf16.msra.mxu0 %v727
    %879 = vmatprep.subr.bf16.mxu0 %v724
    %880 = vmatpush2.bf16.msra.mxu0 %v723
    %881 = vmatprep.subr.bf16.mxu0 %v720
    %882 = vmatpush2.bf16.msra.mxu0 %v719
    %883 = vmatprep.subr.bf16.mxu0 %v716
    %884 = vmatpush2.bf16.msra.mxu0 %v715
    %885 = vmatprep.subr.bf16.mxu0 %v712
    %886 = vmatpush2.bf16.msra.mxu0 %v711
    %887 = vmatprep.subr.bf16.mxu0 %v708
    %888 = vmatpush2.bf16.msra.mxu0 %v707
    %889 = vmatprep.subr.bf16.mxu0 %v704
    %890 = vmatpush2.bf16.msra.mxu0 %v703
    %891 = vmatprep.mubr.bf16.mxu0 %v411
    %892 = vmatmul.mubr.bf16.gmra.mxu0 %v410
    %v893 = vpop.f32.mrf.mxu0
    %v894 = vadd.f32 %v809, %v893
    %v895 = vpop.f32.mrf.mxu0
    %v896 = vadd.f32 %v813, %v895
    %v897 = vpop.f32.mrf.mxu0
    %v898 = vpop.f32.mrf.mxu0
    %899 = vdwg.mxu0
    %v900 = vxor.u32 %v853, 2147483648
    %v901 = vmul.f32 %v900, 1.442695
    %v902 = vpow.pop %v901
    %v903 = vadd.f32 %v902, 1.0
    %v904 = vrcp.pop %v903
    %v905 = vmul.f32 1.0, %v904
    %v906 = vxor.u32 %v855, 2147483648
    %v907 = vmul.f32 %v906, 1.442695
    %v908 = vpow.pop %v907
    %v909 = vadd.f32 %v908, 1.0
    %v910 = vrcp.pop %v909
    %v911 = vmul.f32 1.0, %v910
    %v912 = vtanh.pop %v894
    %v913 = vxor.u32 %v896, 2147483648
    %v914 = vmul.f32 %v913, 1.442695
    %v915 = vpow.pop %v914
    %v916 = vadd.f32 %v915, 1.0
    %v917 = vrcp.pop %v916
    %v918 = vmul.f32 1.0, %v917
    %v919 = vmul.f32 %v911, 0.0
    %v920 = vmul.f32 %v905, %v912
    %v921 = vadd.f32 %v919, %v920
    %v922 = vtanh.pop %v921
    %v923 = vmul.f32 %v918, %v922
    %s924 = scalar_lea.vmem [#allocation2], 1
    %v925 = vld [vmem:[%s924] ss:$8 sm:$0xf]
    %v926 = vld [vmem:[#allocation10] sm:$0xff]
    %v927 = vld [vmem:[#allocation10 + $0x8] sm:$0xff]
    %v928 = vld [vmem:[#allocation10 + $0x10] sm:$0xff]
    %v929 = vld [vmem:[#allocation10 + $0x18] sm:$0xff]
    %v930 = vld [vmem:[#allocation10 + $0x20] sm:$0xff]
    %v931 = vld [vmem:[#allocation10 + $0x28] sm:$0xff]
    %v932 = vld [vmem:[#allocation10 + $0x30] sm:$0xff]
    %v933 = vld [vmem:[#allocation10 + $0x38] sm:$0xff]
    %v934 = vld [vmem:[#allocation10 + $0x40] sm:$0xff]
    %v935 = vld [vmem:[#allocation10 + $0x48] sm:$0xff]
    %v936 = vld [vmem:[#allocation10 + $0x50] sm:$0xff]
    %v937 = vld [vmem:[#allocation10 + $0x58] sm:$0xff]
    %v938 = vld [vmem:[#allocation10 + $0x60] sm:$0xff]
    %v939 = vld [vmem:[#allocation10 + $0x68] sm:$0xff]
    %v940 = vld [vmem:[#allocation10 + $0x70] sm:$0xff]
    %v941 = vld [vmem:[#allocation10 + $0x78] sm:$0xff]
    %v942 = vld [vmem:[#allocation10 + $0x80] sm:$0xff]
    %v943 = vld [vmem:[#allocation10 + $0x88] sm:$0xff]
    %v944 = vld [vmem:[#allocation10 + $0x90] sm:$0xff]
    %v945 = vld [vmem:[#allocation10 + $0x98] sm:$0xff]
    %v946 = vld [vmem:[#allocation10 + $0xa0] sm:$0xff]
    %v947 = vld [vmem:[#allocation10 + $0xa8] sm:$0xff]
    %v948 = vld [vmem:[#allocation10 + $0xb0] sm:$0xff]
    %v949 = vld [vmem:[#allocation10 + $0xb8] sm:$0xff]
    %v950 = vld [vmem:[#allocation10 + $0xc0] sm:$0xff]
    %v951 = vld [vmem:[#allocation10 + $0xc8] sm:$0xff]
    %v952 = vld [vmem:[#allocation10 + $0xd0] sm:$0xff]
    %v953 = vld [vmem:[#allocation10 + $0xd8] sm:$0xff]
    %v954 = vld [vmem:[#allocation10 + $0xe0] sm:$0xff]
    %v955 = vld [vmem:[#allocation10 + $0xe8] sm:$0xff]
    %v956 = vld [vmem:[#allocation10 + $0xf0] sm:$0xff]
    %v957 = vld [vmem:[#allocation10 + $0xf8] sm:$0xff]
    %v990 = vunpack.c.l.b16 %v926
    %v991 = vunpack.c.h.b16 %v926
    %v992 = vunpack.c.l.b16 %v927
    %v993 = vunpack.c.h.b16 %v927
    %v994 = vunpack.c.l.b16 %v928
    %v995 = vunpack.c.h.b16 %v928
    %v996 = vunpack.c.l.b16 %v929
    %v997 = vunpack.c.h.b16 %v929
    %v998 = vunpack.c.l.b16 %v930
    %v999 = vunpack.c.h.b16 %v930
    %v1000 = vunpack.c.l.b16 %v931
    %v1001 = vunpack.c.h.b16 %v931
    %v1002 = vunpack.c.l.b16 %v932
    %v1003 = vunpack.c.h.b16 %v932
    %v1004 = vunpack.c.l.b16 %v933
    %v1005 = vunpack.c.h.b16 %v933
    %v1006 = vunpack.c.l.b16 %v934
    %v1007 = vunpack.c.h.b16 %v934
    %v1008 = vunpack.c.l.b16 %v935
    %v1009 = vunpack.c.h.b16 %v935
    %v1010 = vunpack.c.l.b16 %v936
    %v1011 = vunpack.c.h.b16 %v936
    %v1012 = vunpack.c.l.b16 %v937
    %v1013 = vunpack.c.h.b16 %v937
    %v1014 = vunpack.c.l.b16 %v938
    %v1015 = vunpack.c.h.b16 %v938
    %v1016 = vunpack.c.l.b16 %v939
    %v1017 = vunpack.c.h.b16 %v939
    %v1018 = vunpack.c.l.b16 %v940
    %v1019 = vunpack.c.h.b16 %v940
    %v1020 = vunpack.c.l.b16 %v941
    %v1021 = vunpack.c.h.b16 %v941
    %v1022 = vunpack.c.l.b16 %v942
    %v1023 = vunpack.c.h.b16 %v942
    %v1024 = vunpack.c.l.b16 %v943
    %v1025 = vunpack.c.h.b16 %v943
    %v1026 = vunpack.c.l.b16 %v944
    %v1027 = vunpack.c.h.b16 %v944
    %v1028 = vunpack.c.l.b16 %v945
    %v1029 = vunpack.c.h.b16 %v945
    %v1030 = vunpack.c.l.b16 %v946
    %v1031 = vunpack.c.h.b16 %v946
    %v1032 = vunpack.c.l.b16 %v947
    %v1033 = vunpack.c.h.b16 %v947
    %v1034 = vunpack.c.l.b16 %v948
    %v1035 = vunpack.c.h.b16 %v948
    %v1036 = vunpack.c.l.b16 %v949
    %v1037 = vunpack.c.h.b16 %v949
    %v1038 = vunpack.c.l.b16 %v950
    %v1039 = vunpack.c.h.b16 %v950
    %v1040 = vunpack.c.l.b16 %v951
    %v1041 = vunpack.c.h.b16 %v951
    %v1042 = vunpack.c.l.b16 %v952
    %v1043 = vunpack.c.h.b16 %v952
    %v1044 = vunpack.c.l.b16 %v953
    %v1045 = vunpack.c.h.b16 %v953
    %v1046 = vunpack.c.l.b16 %v954
    %v1047 = vunpack.c.h.b16 %v954
    %v1048 = vunpack.c.l.b16 %v955
    %v1049 = vunpack.c.h.b16 %v955
    %v1050 = vunpack.c.l.b16 %v956
    %v1051 = vunpack.c.h.b16 %v956
    %v1052 = vunpack.c.l.b16 %v957
    %v1053 = vunpack.c.h.b16 %v957
    %v1054 = vpack.c.b16 %v994, %v990
    %v1055 = vpack.c.b16 %v995, %v991
    %v1056 = vpack.c.b16 %v996, %v992
    %v1057 = vpack.c.b16 %v997, %v993
    %v1058 = vpack.c.b16 %v1002, %v998
    %v1059 = vpack.c.b16 %v1003, %v999
    %v1060 = vpack.c.b16 %v1004, %v1000
    %v1061 = vpack.c.b16 %v1005, %v1001
    %v1062 = vpack.c.b16 %v1010, %v1006
    %v1063 = vpack.c.b16 %v1011, %v1007
    %v1064 = vpack.c.b16 %v1012, %v1008
    %v1065 = vpack.c.b16 %v1013, %v1009
    %v1066 = vpack.c.b16 %v1018, %v1014
    %v1067 = vpack.c.b16 %v1019, %v1015
    %v1068 = vpack.c.b16 %v1020, %v1016
    %v1069 = vpack.c.b16 %v1021, %v1017
    %v1070 = vpack.c.b16 %v1026, %v1022
    %v1071 = vpack.c.b16 %v1027, %v1023
    %v1072 = vpack.c.b16 %v1028, %v1024
    %v1073 = vpack.c.b16 %v1029, %v1025
    %v1074 = vpack.c.b16 %v1034, %v1030
    %v1075 = vpack.c.b16 %v1035, %v1031
    %v1076 = vpack.c.b16 %v1036, %v1032
    %v1077 = vpack.c.b16 %v1037, %v1033
    %v1078 = vpack.c.b16 %v1042, %v1038
    %v1079 = vpack.c.b16 %v1043, %v1039
    %v1080 = vpack.c.b16 %v1044, %v1040
    %v1081 = vpack.c.b16 %v1045, %v1041
    %v1082 = vpack.c.b16 %v1050, %v1046
    %v1083 = vpack.c.b16 %v1051, %v1047
    %v1084 = vpack.c.b16 %v1052, %v1048
    %v1085 = vpack.c.b16 %v1053, %v1049
    %1118 = vmatprep.subr.bf16.mxu0 %v1083
    %1119 = vmatpush1.bf16.msra.mxu0 %v1082
    %1120 = vmatprep.subr.bf16.mxu0 %v1079
    %1121 = vmatpush1.bf16.msra.mxu0 %v1078
    %1122 = vmatprep.subr.bf16.mxu0 %v1075
    %1123 = vmatpush1.bf16.msra.mxu0 %v1074
    %1124 = vmatprep.subr.bf16.mxu0 %v1071
    %1125 = vmatpush1.bf16.msra.mxu0 %v1070
    %1126 = vmatprep.subr.bf16.mxu0 %v1067
    %1127 = vmatpush1.bf16.msra.mxu0 %v1066
    %1128 = vmatprep.subr.bf16.mxu0 %v1063
    %1129 = vmatpush1.bf16.msra.mxu0 %v1062
    %1130 = vmatprep.subr.bf16.mxu0 %v1059
    %1131 = vmatpush1.bf16.msra.mxu0 %v1058
    %1132 = vmatprep.subr.bf16.mxu0 %v1055
    %1133 = vmatpush1.bf16.msra.mxu0 %v1054
    %1134 = vmatprep.subr.bf16.mxu0 0
    %1135 = vmatpush2.bf16.msra.mxu0 0
    %1136 = vmatprep.subr.bf16.mxu0 0
    %1137 = vmatpush2.bf16.msra.mxu0 0
    %1138 = vmatprep.subr.bf16.mxu0 0
    %1139 = vmatpush2.bf16.msra.mxu0 0
    %1140 = vmatprep.subr.bf16.mxu0 0
    %1141 = vmatpush2.bf16.msra.mxu0 0
    %1142 = vmatprep.subr.bf16.mxu0 0
    %1143 = vmatpush2.bf16.msra.mxu0 0
    %1144 = vmatprep.subr.bf16.mxu0 0
    %1145 = vmatpush2.bf16.msra.mxu0 0
    %1146 = vmatprep.subr.bf16.mxu0 0
    %1147 = vmatpush2.bf16.msra.mxu0 0
    %1148 = vmatprep.subr.bf16.mxu0 0
    %1149 = vmatpush2.bf16.msra.mxu0 0
    %1150 = vmatprep.mubr.bf16.mxu0 0
    %1151 = vmatmul.mubr.bf16.gmra.mxu0 %v410
    %v1152 = vpop.f32.mrf.mxu0
    %v1153 = vadd.f32 0.0, %v1152
    %v1154 = vpop.f32.mrf.mxu0
    %v1155 = vadd.f32 0.0, %v1154
    %v1156 = vpop.f32.mrf.mxu0
    %v1157 = vpop.f32.mrf.mxu0
    %1158 = vdwg.mxu0
    %1159 = vmatprep.subr.bf16.mxu0 %v1085
    %1160 = vmatpush1.bf16.msra.mxu0 %v1084
    %1161 = vmatprep.subr.bf16.mxu0 %v1081
    %1162 = vmatpush1.bf16.msra.mxu0 %v1080
    %1163 = vmatprep.subr.bf16.mxu0 %v1077
    %1164 = vmatpush1.bf16.msra.mxu0 %v1076
    %1165 = vmatprep.subr.bf16.mxu0 %v1073
    %1166 = vmatpush1.bf16.msra.mxu0 %v1072
    %1167 = vmatprep.subr.bf16.mxu0 %v1069
    %1168 = vmatpush1.bf16.msra.mxu0 %v1068
    %1169 = vmatprep.subr.bf16.mxu0 %v1065
    %1170 = vmatpush1.bf16.msra.mxu0 %v1064
    %1171 = vmatprep.subr.bf16.mxu0 %v1061
    %1172 = vmatpush1.bf16.msra.mxu0 %v1060
    %1173 = vmatprep.subr.bf16.mxu0 %v1057
    %1174 = vmatpush1.bf16.msra.mxu0 %v1056
    %1175 = vmatprep.subr.bf16.mxu0 0
    %1176 = vmatpush2.bf16.msra.mxu0 0
    %1177 = vmatprep.subr.bf16.mxu0 0
    %1178 = vmatpush2.bf16.msra.mxu0 0
    %1179 = vmatprep.subr.bf16.mxu0 0
    %1180 = vmatpush2.bf16.msra.mxu0 0
    %1181 = vmatprep.subr.bf16.mxu0 0
    %1182 = vmatpush2.bf16.msra.mxu0 0
    %1183 = vmatprep.subr.bf16.mxu0 0
    %1184 = vmatpush2.bf16.msra.mxu0 0
    %1185 = vmatprep.subr.bf16.mxu0 0
    %1186 = vmatpush2.bf16.msra.mxu0 0
    %1187 = vmatprep.subr.bf16.mxu0 0
    %1188 = vmatpush2.bf16.msra.mxu0 0
    %1189 = vmatprep.subr.bf16.mxu0 0
    %1190 = vmatpush2.bf16.msra.mxu0 0
    %1191 = vmatprep.mubr.bf16.mxu0 0
    %1192 = vmatmul.mubr.bf16.gmra.mxu0 %v410
    %v1193 = vpop.f32.mrf.mxu0
    %v1194 = vadd.f32 0.0, %v1193
    %v1195 = vpop.f32.mrf.mxu0
    %v1196 = vadd.f32 0.0, %v1195
    %v1197 = vpop.f32.mrf.mxu0
    %v1198 = vpop.f32.mrf.mxu0
    %1199 = vdwg.mxu0
    %v1204 = vcombine.low %v1153, %v1155
    %v1205 = vcombine.low %v1194, %v1196
    %v1207 = vunpack.c.l.s4 1966171168
    %v1208 = vunpack.c.0.s8 %v1207
    %v1209 = vlaneseq
    %v1210 = vshrl.u32 %v1209, 7
    %v1211 = vsub.s32 %v1208, %v1210
    %v1212 = vrot.slane %v1204, %v1211
    %v1214 = vunpack.c.l.s4 1966171168
    %v1215 = vunpack.c.0.s8 %v1214
    %v1216 = vlaneseq
    %v1217 = vshrl.u32 %v1216, 7
    %v1218 = vsub.s32 %v1215, %v1217
    %v1219 = vrot.slane %v1205, %v1218
    %v1220 = vcombine.low %v1212, %v1219
    %v1222 = vunpack.c.l.s4 1966171168
    %v1223 = vunpack.c.0.s8 %v1222
    %v1224 = vlaneseq
    %v1225 = vshrl.u32 %v1224, 7
    %v1226 = vsub.s32 %v1223, %v1225
    %v1227 = vrot.slane %v1220, %v1226
    %v1229 = vadd.f32 %v925, %v1227
    %v1230 = vxor.u32 %v1229, 2147483648
    %v1231 = vmul.f32 %v1230, 1.442695
    %v1232 = vpow.pop %v1231
    %v1233 = vadd.f32 %v1232, 1.0
    %v1234 = vrcp.pop %v1233
    %v1235 = vmul.f32 1.0, %v1234
    %v1237 = vrot.slane %v1229, 1
    %v1239 = vxor.u32 %v1237, 2147483648
    %v1240 = vmul.f32 %v1239, 1.442695
    %v1241 = vpow.pop %v1240
    %v1242 = vadd.f32 %v1241, 1.0
    %v1243 = vrcp.pop %v1242
    %v1244 = vmul.f32 1.0, %v1243
    %v1245 = vrot.slane %v1229, 2
    %v1247 = vtanh.pop %v1245
    %v1248 = vrot.slane %v1229, 3
    %v1250 = vxor.u32 %v1248, 2147483648
    %v1251 = vmul.f32 %v1250, 1.442695
    %v1252 = vpow.pop %v1251
    %v1253 = vadd.f32 %v1252, 1.0
    %v1254 = vrcp.pop %v1253
    %v1255 = vmul.f32 1.0, %v1254
    %v1256 = vmul.f32 %v1244, %v403
    %v1257 = vmul.f32 %v1235, %v1247
    %v1258 = vadd.f32 %v1256, %v1257
    %v1259 = vtanh.pop %v1258
    %v1260 = vmul.f32 %v1255, %v1259
    %v1261 = vpack.c.bf16 %v1260, %v1260
    %v1262 = vpack.c.bf16 %v923, %v923
    %1263 = vmatprep.subr.bf16.mxu0 %v698
    %1264 = vmatpush1.bf16.msra.mxu0 %v697
    %1265 = vmatprep.subr.bf16.mxu0 %v694
    %1266 = vmatpush1.bf16.msra.mxu0 %v693
    %1267 = vmatprep.subr.bf16.mxu0 %v690
    %1268 = vmatpush1.bf16.msra.mxu0 %v689
    %1269 = vmatprep.subr.bf16.mxu0 %v686
    %1270 = vmatpush1.bf16.msra.mxu0 %v685
    %1271 = vmatprep.subr.bf16.mxu0 %v682
    %1272 = vmatpush1.bf16.msra.mxu0 %v681
    %1273 = vmatprep.subr.bf16.mxu0 %v678
    %1274 = vmatpush1.bf16.msra.mxu0 %v677
    %1275 = vmatprep.subr.bf16.mxu0 %v674
    %1276 = vmatpush1.bf16.msra.mxu0 %v673
    %1277 = vmatprep.subr.bf16.mxu0 %v670
    %1278 = vmatpush1.bf16.msra.mxu0 %v669
    %1279 = vmatprep.subr.bf16.mxu0 %v730
    %1280 = vmatpush2.bf16.msra.mxu0 %v729
    %1281 = vmatprep.subr.bf16.mxu0 %v726
    %1282 = vmatpush2.bf16.msra.mxu0 %v725
    %1283 = vmatprep.subr.bf16.mxu0 %v722
    %1284 = vmatpush2.bf16.msra.mxu0 %v721
    %1285 = vmatprep.subr.bf16.mxu0 %v718
    %1286 = vmatpush2.bf16.msra.mxu0 %v717
    %1287 = vmatprep.subr.bf16.mxu0 %v714
    %1288 = vmatpush2.bf16.msra.mxu0 %v713
    %1289 = vmatprep.subr.bf16.mxu0 %v710
    %1290 = vmatpush2.bf16.msra.mxu0 %v709
    %1291 = vmatprep.subr.bf16.mxu0 %v706
    %1292 = vmatpush2.bf16.msra.mxu0 %v705
    %1293 = vmatprep.subr.bf16.mxu0 %v702
    %1294 = vmatpush2.bf16.msra.mxu0 %v701
    %1295 = vmatprep.mubr.bf16.mxu0 %v1262
    %1296 = vmatmul.mubr.bf16.gmra.mxu0 %v1261
    %v1297 = vpop.f32.mrf.mxu0
    %v1298 = vadd.f32 %v801, %v1297
    %v1299 = vpop.f32.mrf.mxu0
    %v1300 = vadd.f32 %v805, %v1299
    %v1301 = vpop.f32.mrf.mxu0
    %v1302 = vpop.f32.mrf.mxu0
    %1303 = vdwg.mxu0
    %1304 = vmatprep.subr.bf16.mxu0 %v700
    %1305 = vmatpush1.bf16.msra.mxu0 %v699
    %1306 = vmatprep.subr.bf16.mxu0 %v696
    %1307 = vmatpush1.bf16.msra.mxu0 %v695
    %1308 = vmatprep.subr.bf16.mxu0 %v692
    %1309 = vmatpush1.bf16.msra.mxu0 %v691
    %1310 = vmatprep.subr.bf16.mxu0 %v688
    %1311 = vmatpush1.bf16.msra.mxu0 %v687
    %1312 = vmatprep.subr.bf16.mxu0 %v684
    %1313 = vmatpush1.bf16.msra.mxu0 %v683
    %1314 = vmatprep.subr.bf16.mxu0 %v680
    %1315 = vmatpush1.bf16.msra.mxu0 %v679
    %1316 = vmatprep.subr.bf16.mxu0 %v676
    %1317 = vmatpush1.bf16.msra.mxu0 %v675
    %1318 = vmatprep.subr.bf16.mxu0 %v672
    %1319 = vmatpush1.bf16.msra.mxu0 %v671
    %1320 = vmatprep.subr.bf16.mxu0 %v732
    %1321 = vmatpush2.bf16.msra.mxu0 %v731
    %1322 = vmatprep.subr.bf16.mxu0 %v728
    %1323 = vmatpush2.bf16.msra.mxu0 %v727
    %1324 = vmatprep.subr.bf16.mxu0 %v724
    %1325 = vmatpush2.bf16.msra.mxu0 %v723
    %1326 = vmatprep.subr.bf16.mxu0 %v720
    %1327 = vmatpush2.bf16.msra.mxu0 %v719
    %1328 = vmatprep.subr.bf16.mxu0 %v716
    %1329 = vmatpush2.bf16.msra.mxu0 %v715
    %1330 = vmatprep.subr.bf16.mxu0 %v712
    %1331 = vmatpush2.bf16.msra.mxu0 %v711
    %1332 = vmatprep.subr.bf16.mxu0 %v708
    %1333 = vmatpush2.bf16.msra.mxu0 %v707
    %1334 = vmatprep.subr.bf16.mxu0 %v704
    %1335 = vmatpush2.bf16.msra.mxu0 %v703
    %1336 = vmatprep.mubr.bf16.mxu0 %v1262
    %1337 = vmatmul.mubr.bf16.gmra.mxu0 %v1261
    %v1338 = vpop.f32.mrf.mxu0
    %v1339 = vadd.f32 %v809, %v1338
    %v1340 = vpop.f32.mrf.mxu0
    %v1341 = vadd.f32 %v813, %v1340
    %v1342 = vpop.f32.mrf.mxu0
    %v1343 = vpop.f32.mrf.mxu0
    %1344 = vdwg.mxu0
    %v1345 = vxor.u32 %v1298, 2147483648
    %v1346 = vmul.f32 %v1345, 1.442695
    %v1347 = vpow.pop %v1346
    %v1348 = vadd.f32 %v1347, 1.0
    %v1349 = vrcp.pop %v1348
    %v1350 = vmul.f32 1.0, %v1349
    %v1351 = vxor.u32 %v1300, 2147483648
    %v1352 = vmul.f32 %v1351, 1.442695
    %v1353 = vpow.pop %v1352
    %v1354 = vadd.f32 %v1353, 1.0
    %v1355 = vrcp.pop %v1354
    %v1356 = vmul.f32 1.0, %v1355
    %v1357 = vtanh.pop %v1339
    %v1358 = vxor.u32 %v1341, 2147483648
    %v1359 = vmul.f32 %v1358, 1.442695
    %v1360 = vpow.pop %v1359
    %v1361 = vadd.f32 %v1360, 1.0
    %v1362 = vrcp.pop %v1361
    %v1363 = vmul.f32 1.0, %v1362
    %v1364 = vmul.f32 %v1356, %v921
    %v1365 = vmul.f32 %v1350, %v1357
    %v1366 = vadd.f32 %v1364, %v1365
    %v1367 = vtanh.pop %v1366
    %v1368 = vmul.f32 %v1363, %v1367
    %s1369 = scalar_lea.vmem [#allocation2], 2
    %v1370 = vld [vmem:[%s1369] ss:$8 sm:$0xf]
    %1371 = vmatprep.subr.bf16.mxu0 %v1083
    %1372 = vmatpush1.bf16.msra.mxu0 %v1082
    %1373 = vmatprep.subr.bf16.mxu0 %v1079
    %1374 = vmatpush1.bf16.msra.mxu0 %v1078
    %1375 = vmatprep.subr.bf16.mxu0 %v1075
    %1376 = vmatpush1.bf16.msra.mxu0 %v1074
    %1377 = vmatprep.subr.bf16.mxu0 %v1071
    %1378 = vmatpush1.bf16.msra.mxu0 %v1070
    %1379 = vmatprep.subr.bf16.mxu0 %v1067
    %1380 = vmatpush1.bf16.msra.mxu0 %v1066
    %1381 = vmatprep.subr.bf16.mxu0 %v1063
    %1382 = vmatpush1.bf16.msra.mxu0 %v1062
    %1383 = vmatprep.subr.bf16.mxu0 %v1059
    %1384 = vmatpush1.bf16.msra.mxu0 %v1058
    %1385 = vmatprep.subr.bf16.mxu0 %v1055
    %1386 = vmatpush1.bf16.msra.mxu0 %v1054
    %1387 = vmatprep.subr.bf16.mxu0 0
    %1388 = vmatpush2.bf16.msra.mxu0 0
    %1389 = vmatprep.subr.bf16.mxu0 0
    %1390 = vmatpush2.bf16.msra.mxu0 0
    %1391 = vmatprep.subr.bf16.mxu0 0
    %1392 = vmatpush2.bf16.msra.mxu0 0
    %1393 = vmatprep.subr.bf16.mxu0 0
    %1394 = vmatpush2.bf16.msra.mxu0 0
    %1395 = vmatprep.subr.bf16.mxu0 0
    %1396 = vmatpush2.bf16.msra.mxu0 0
    %1397 = vmatprep.subr.bf16.mxu0 0
    %1398 = vmatpush2.bf16.msra.mxu0 0
    %1399 = vmatprep.subr.bf16.mxu0 0
    %1400 = vmatpush2.bf16.msra.mxu0 0
    %1401 = vmatprep.subr.bf16.mxu0 0
    %1402 = vmatpush2.bf16.msra.mxu0 0
    %1403 = vmatprep.mubr.bf16.mxu0 0
    %1404 = vmatmul.mubr.bf16.gmra.mxu0 %v1261
    %v1405 = vpop.f32.mrf.mxu0
    %v1406 = vadd.f32 0.0, %v1405
    %v1407 = vpop.f32.mrf.mxu0
    %v1408 = vadd.f32 0.0, %v1407
    %v1409 = vpop.f32.mrf.mxu0
    %v1410 = vpop.f32.mrf.mxu0
    %1411 = vdwg.mxu0
    %1412 = vmatprep.subr.bf16.mxu0 %v1085
    %1413 = vmatpush1.bf16.msra.mxu0 %v1084
    %1414 = vmatprep.subr.bf16.mxu0 %v1081
    %1415 = vmatpush1.bf16.msra.mxu0 %v1080
    %1416 = vmatprep.subr.bf16.mxu0 %v1077
    %1417 = vmatpush1.bf16.msra.mxu0 %v1076
    %1418 = vmatprep.subr.bf16.mxu0 %v1073
    %1419 = vmatpush1.bf16.msra.mxu0 %v1072
    %1420 = vmatprep.subr.bf16.mxu0 %v1069
    %1421 = vmatpush1.bf16.msra.mxu0 %v1068
    %1422 = vmatprep.subr.bf16.mxu0 %v1065
    %1423 = vmatpush1.bf16.msra.mxu0 %v1064
    %1424 = vmatprep.subr.bf16.mxu0 %v1061
    %1425 = vmatpush1.bf16.msra.mxu0 %v1060
    %1426 = vmatprep.subr.bf16.mxu0 %v1057
    %1427 = vmatpush1.bf16.msra.mxu0 %v1056
    %1428 = vmatprep.subr.bf16.mxu0 0
    %1429 = vmatpush2.bf16.msra.mxu0 0
    %1430 = vmatprep.subr.bf16.mxu0 0
    %1431 = vmatpush2.bf16.msra.mxu0 0
    %1432 = vmatprep.subr.bf16.mxu0 0
    %1433 = vmatpush2.bf16.msra.mxu0 0
    %1434 = vmatprep.subr.bf16.mxu0 0
    %1435 = vmatpush2.bf16.msra.mxu0 0
    %1436 = vmatprep.subr.bf16.mxu0 0
    %1437 = vmatpush2.bf16.msra.mxu0 0
    %1438 = vmatprep.subr.bf16.mxu0 0
    %1439 = vmatpush2.bf16.msra.mxu0 0
    %1440 = vmatprep.subr.bf16.mxu0 0
    %1441 = vmatpush2.bf16.msra.mxu0 0
    %1442 = vmatprep.subr.bf16.mxu0 0
    %1443 = vmatpush2.bf16.msra.mxu0 0
    %1444 = vmatprep.mubr.bf16.mxu0 0
    %1445 = vmatmul.mubr.bf16.gmra.mxu0 %v1261
    %v1446 = vpop.f32.mrf.mxu0
    %v1447 = vadd.f32 0.0, %v1446
    %v1448 = vpop.f32.mrf.mxu0
    %v1449 = vadd.f32 0.0, %v1448
    %v1450 = vpop.f32.mrf.mxu0
    %v1451 = vpop.f32.mrf.mxu0
    %1452 = vdwg.mxu0
    %v1457 = vcombine.low %v1406, %v1408
    %v1458 = vcombine.low %v1447, %v1449
    %v1460 = vunpack.c.l.s4 1966171168
    %v1461 = vunpack.c.0.s8 %v1460
    %v1462 = vlaneseq
    %v1463 = vshrl.u32 %v1462, 7
    %v1464 = vsub.s32 %v1461, %v1463
    %v1465 = vrot.slane %v1457, %v1464
    %v1467 = vunpack.c.l.s4 1966171168
    %v1468 = vunpack.c.0.s8 %v1467
    %v1469 = vlaneseq
    %v1470 = vshrl.u32 %v1469, 7
    %v1471 = vsub.s32 %v1468, %v1470
    %v1472 = vrot.slane %v1458, %v1471
    %v1473 = vcombine.low %v1465, %v1472
    %v1475 = vunpack.c.l.s4 1966171168
    %v1476 = vunpack.c.0.s8 %v1475
    %v1477 = vlaneseq
    %v1478 = vshrl.u32 %v1477, 7
    %v1479 = vsub.s32 %v1476, %v1478
    %v1480 = vrot.slane %v1473, %v1479
    %v1482 = vadd.f32 %v1370, %v1480
    %v1483 = vxor.u32 %v1482, 2147483648
    %v1484 = vmul.f32 %v1483, 1.442695
    %v1485 = vpow.pop %v1484
    %v1486 = vadd.f32 %v1485, 1.0
    %v1487 = vrcp.pop %v1486
    %v1488 = vmul.f32 1.0, %v1487
    %v1490 = vrot.slane %v1482, 1
    %v1492 = vxor.u32 %v1490, 2147483648
    %v1493 = vmul.f32 %v1492, 1.442695
    %v1494 = vpow.pop %v1493
    %v1495 = vadd.f32 %v1494, 1.0
    %v1496 = vrcp.pop %v1495
    %v1497 = vmul.f32 1.0, %v1496
    %v1498 = vrot.slane %v1482, 2
    %v1500 = vtanh.pop %v1498
    %v1501 = vrot.slane %v1482, 3
    %v1503 = vxor.u32 %v1501, 2147483648
    %v1504 = vmul.f32 %v1503, 1.442695
    %v1505 = vpow.pop %v1504
    %v1506 = vadd.f32 %v1505, 1.0
    %v1507 = vrcp.pop %v1506
    %v1508 = vmul.f32 1.0, %v1507
    %v1509 = vmul.f32 %v1497, %v1258
    %v1510 = vmul.f32 %v1488, %v1500
    %v1511 = vadd.f32 %v1509, %v1510
    %v1512 = vtanh.pop %v1511
    %v1513 = vmul.f32 %v1508, %v1512
    %v1514 = vpack.c.bf16 %v1513, %v1513
    %v1515 = vpack.c.bf16 %v1368, %v1368
    %1516 = vmatprep.subr.bf16.mxu0 %v698
    %1517 = vmatpush1.bf16.msra.mxu0 %v697
    %1518 = vmatprep.subr.bf16.mxu0 %v694
    %1519 = vmatpush1.bf16.msra.mxu0 %v693
    %1520 = vmatprep.subr.bf16.mxu0 %v690
    %1521 = vmatpush1.bf16.msra.mxu0 %v689
    %1522 = vmatprep.subr.bf16.mxu0 %v686
    %1523 = vmatpush1.bf16.msra.mxu0 %v685
    %1524 = vmatprep.subr.bf16.mxu0 %v682
    %1525 = vmatpush1.bf16.msra.mxu0 %v681
    %1526 = vmatprep.subr.bf16.mxu0 %v678
    %1527 = vmatpush1.bf16.msra.mxu0 %v677
    %1528 = vmatprep.subr.bf16.mxu0 %v674
    %1529 = vmatpush1.bf16.msra.mxu0 %v673
    %1530 = vmatprep.subr.bf16.mxu0 %v670
    %1531 = vmatpush1.bf16.msra.mxu0 %v669
    %1532 = vmatprep.subr.bf16.mxu0 %v730
    %1533 = vmatpush2.bf16.msra.mxu0 %v729
    %1534 = vmatprep.subr.bf16.mxu0 %v726
    %1535 = vmatpush2.bf16.msra.mxu0 %v725
    %1536 = vmatprep.subr.bf16.mxu0 %v722
    %1537 = vmatpush2.bf16.msra.mxu0 %v721
    %1538 = vmatprep.subr.bf16.mxu0 %v718
    %1539 = vmatpush2.bf16.msra.mxu0 %v717
    %1540 = vmatprep.subr.bf16.mxu0 %v714
    %1541 = vmatpush2.bf16.msra.mxu0 %v713
    %1542 = vmatprep.subr.bf16.mxu0 %v710
    %1543 = vmatpush2.bf16.msra.mxu0 %v709
    %1544 = vmatprep.subr.bf16.mxu0 %v706
    %1545 = vmatpush2.bf16.msra.mxu0 %v705
    %1546 = vmatprep.subr.bf16.mxu0 %v702
    %1547 = vmatpush2.bf16.msra.mxu0 %v701
    %1548 = vmatprep.mubr.bf16.mxu0 %v1515
    %1549 = vmatmul.mubr.bf16.gmra.mxu0 %v1514
    %v1550 = vpop.f32.mrf.mxu0
    %v1551 = vadd.f32 %v801, %v1550
    %v1552 = vpop.f32.mrf.mxu0
    %v1553 = vadd.f32 %v805, %v1552
    %v1554 = vpop.f32.mrf.mxu0
    %v1555 = vpop.f32.mrf.mxu0
    %1556 = vdwg.mxu0
    %1557 = vmatprep.subr.bf16.mxu0 %v700
    %1558 = vmatpush1.bf16.msra.mxu0 %v699
    %1559 = vmatprep.subr.bf16.mxu0 %v696
    %1560 = vmatpush1.bf16.msra.mxu0 %v695
    %1561 = vmatprep.subr.bf16.mxu0 %v692
    %1562 = vmatpush1.bf16.msra.mxu0 %v691
    %1563 = vmatprep.subr.bf16.mxu0 %v688
    %1564 = vmatpush1.bf16.msra.mxu0 %v687
    %1565 = vmatprep.subr.bf16.mxu0 %v684
    %1566 = vmatpush1.bf16.msra.mxu0 %v683
    %1567 = vmatprep.subr.bf16.mxu0 %v680
    %1568 = vmatpush1.bf16.msra.mxu0 %v679
    %1569 = vmatprep.subr.bf16.mxu0 %v676
    %1570 = vmatpush1.bf16.msra.mxu0 %v675
    %1571 = vmatprep.subr.bf16.mxu0 %v672
    %1572 = vmatpush1.bf16.msra.mxu0 %v671
    %1573 = vmatprep.subr.bf16.mxu0 %v732
    %1574 = vmatpush2.bf16.msra.mxu0 %v731
    %1575 = vmatprep.subr.bf16.mxu0 %v728
    %1576 = vmatpush2.bf16.msra.mxu0 %v727
    %1577 = vmatprep.subr.bf16.mxu0 %v724
    %1578 = vmatpush2.bf16.msra.mxu0 %v723
    %1579 = vmatprep.subr.bf16.mxu0 %v720
    %1580 = vmatpush2.bf16.msra.mxu0 %v719
    %1581 = vmatprep.subr.bf16.mxu0 %v716
    %1582 = vmatpush2.bf16.msra.mxu0 %v715
    %1583 = vmatprep.subr.bf16.mxu0 %v712
    %1584 = vmatpush2.bf16.msra.mxu0 %v711
    %1585 = vmatprep.subr.bf16.mxu0 %v708
    %1586 = vmatpush2.bf16.msra.mxu0 %v707
    %1587 = vmatprep.subr.bf16.mxu0 %v704
    %1588 = vmatpush2.bf16.msra.mxu0 %v703
    %1589 = vmatprep.mubr.bf16.mxu0 %v1515
    %1590 = vmatmul.mubr.bf16.gmra.mxu0 %v1514
    %v1591 = vpop.f32.mrf.mxu0
    %v1592 = vadd.f32 %v809, %v1591
    %v1593 = vpop.f32.mrf.mxu0
    %v1594 = vadd.f32 %v813, %v1593
    %v1595 = vpop.f32.mrf.mxu0
    %v1596 = vpop.f32.mrf.mxu0
    %1597 = vdwg.mxu0
    %v1598 = vxor.u32 %v1551, 2147483648
    %v1599 = vmul.f32 %v1598, 1.442695
    %v1600 = vpow.pop %v1599
    %v1601 = vadd.f32 %v1600, 1.0
    %v1602 = vrcp.pop %v1601
    %v1603 = vmul.f32 1.0, %v1602
    %v1604 = vxor.u32 %v1553, 2147483648
    %v1605 = vmul.f32 %v1604, 1.442695
    %v1606 = vpow.pop %v1605
    %v1607 = vadd.f32 %v1606, 1.0
    %v1608 = vrcp.pop %v1607
    %v1609 = vmul.f32 1.0, %v1608
    %v1610 = vtanh.pop %v1592
    %v1611 = vxor.u32 %v1594, 2147483648
    %v1612 = vmul.f32 %v1611, 1.442695
    %v1613 = vpow.pop %v1612
    %v1614 = vadd.f32 %v1613, 1.0
    %v1615 = vrcp.pop %v1614
    %v1616 = vmul.f32 1.0, %v1615
    %v1617 = vmul.f32 %v1609, %v1366
    %v1618 = vmul.f32 %v1603, %v1610
    %v1619 = vadd.f32 %v1617, %v1618
    %v1620 = vtanh.pop %v1619
    %v1621 = vmul.f32 %v1616, %v1620
    %s1622 = scalar_lea.vmem [#allocation2], 3
    %v1623 = vld [vmem:[%s1622] ss:$8 sm:$0xf]
    %1624 = vmatprep.subr.bf16.mxu0 %v1083
    %1625 = vmatpush1.bf16.msra.mxu0 %v1082
    %1626 = vmatprep.subr.bf16.mxu0 %v1079
    %1627 = vmatpush1.bf16.msra.mxu0 %v1078
    %1628 = vmatprep.subr.bf16.mxu0 %v1075
    %1629 = vmatpush1.bf16.msra.mxu0 %v1074
    %1630 = vmatprep.subr.bf16.mxu0 %v1071
    %1631 = vmatpush1.bf16.msra.mxu0 %v1070
    %1632 = vmatprep.subr.bf16.mxu0 %v1067
    %1633 = vmatpush1.bf16.msra.mxu0 %v1066
    %1634 = vmatprep.subr.bf16.mxu0 %v1063
    %1635 = vmatpush1.bf16.msra.mxu0 %v1062
    %1636 = vmatprep.subr.bf16.mxu0 %v1059
    %1637 = vmatpush1.bf16.msra.mxu0 %v1058
    %1638 = vmatprep.subr.bf16.mxu0 %v1055
    %1639 = vmatpush1.bf16.msra.mxu0 %v1054
    %1640 = vmatprep.subr.bf16.mxu0 0
    %1641 = vmatpush2.bf16.msra.mxu0 0
    %1642 = vmatprep.subr.bf16.mxu0 0
    %1643 = vmatpush2.bf16.msra.mxu0 0
    %1644 = vmatprep.subr.bf16.mxu0 0
    %1645 = vmatpush2.bf16.msra.mxu0 0
    %1646 = vmatprep.subr.bf16.mxu0 0
    %1647 = vmatpush2.bf16.msra.mxu0 0
    %1648 = vmatprep.subr.bf16.mxu0 0
    %1649 = vmatpush2.bf16.msra.mxu0 0
    %1650 = vmatprep.subr.bf16.mxu0 0
    %1651 = vmatpush2.bf16.msra.mxu0 0
    %1652 = vmatprep.subr.bf16.mxu0 0
    %1653 = vmatpush2.bf16.msra.mxu0 0
    %1654 = vmatprep.subr.bf16.mxu0 0
    %1655 = vmatpush2.bf16.msra.mxu0 0
    %1656 = vmatprep.mubr.bf16.mxu0 0
    %1657 = vmatmul.mubr.bf16.gmra.mxu0 %v1514
    %v1658 = vpop.f32.mrf.mxu0
    %v1659 = vadd.f32 0.0, %v1658
    %v1660 = vpop.f32.mrf.mxu0
    %v1661 = vadd.f32 0.0, %v1660
    %v1662 = vpop.f32.mrf.mxu0
    %v1663 = vpop.f32.mrf.mxu0
    %1664 = vdwg.mxu0
    %1665 = vmatprep.subr.bf16.mxu0 %v1085
    %1666 = vmatpush1.bf16.msra.mxu0 %v1084
    %1667 = vmatprep.subr.bf16.mxu0 %v1081
    %1668 = vmatpush1.bf16.msra.mxu0 %v1080
    %1669 = vmatprep.subr.bf16.mxu0 %v1077
    %1670 = vmatpush1.bf16.msra.mxu0 %v1076
    %1671 = vmatprep.subr.bf16.mxu0 %v1073
    %1672 = vmatpush1.bf16.msra.mxu0 %v1072
    %1673 = vmatprep.subr.bf16.mxu0 %v1069
    %1674 = vmatpush1.bf16.msra.mxu0 %v1068
    %1675 = vmatprep.subr.bf16.mxu0 %v1065
    %1676 = vmatpush1.bf16.msra.mxu0 %v1064
    %1677 = vmatprep.subr.bf16.mxu0 %v1061
    %1678 = vmatpush1.bf16.msra.mxu0 %v1060
    %1679 = vmatprep.subr.bf16.mxu0 %v1057
    %1680 = vmatpush1.bf16.msra.mxu0 %v1056
    %1681 = vmatprep.subr.bf16.mxu0 0
    %1682 = vmatpush2.bf16.msra.mxu0 0
    %1683 = vmatprep.subr.bf16.mxu0 0
    %1684 = vmatpush2.bf16.msra.mxu0 0
    %1685 = vmatprep.subr.bf16.mxu0 0
    %1686 = vmatpush2.bf16.msra.mxu0 0
    %1687 = vmatprep.subr.bf16.mxu0 0
    %1688 = vmatpush2.bf16.msra.mxu0 0
    %1689 = vmatprep.subr.bf16.mxu0 0
    %1690 = vmatpush2.bf16.msra.mxu0 0
    %1691 = vmatprep.subr.bf16.mxu0 0
    %1692 = vmatpush2.bf16.msra.mxu0 0
    %1693 = vmatprep.subr.bf16.mxu0 0
    %1694 = vmatpush2.bf16.msra.mxu0 0
    %1695 = vmatprep.subr.bf16.mxu0 0
    %1696 = vmatpush2.bf16.msra.mxu0 0
    %1697 = vmatprep.mubr.bf16.mxu0 0
    %1698 = vmatmul.mubr.bf16.gmra.mxu0 %v1514
    %v1699 = vpop.f32.mrf.mxu0
    %v1700 = vadd.f32 0.0, %v1699
    %v1701 = vpop.f32.mrf.mxu0
    %v1702 = vadd.f32 0.0, %v1701
    %v1703 = vpop.f32.mrf.mxu0
    %v1704 = vpop.f32.mrf.mxu0
    %1705 = vdwg.mxu0
    %v1710 = vcombine.low %v1659, %v1661
    %v1711 = vcombine.low %v1700, %v1702
    %v1713 = vunpack.c.l.s4 1966171168
    %v1714 = vunpack.c.0.s8 %v1713
    %v1715 = vlaneseq
    %v1716 = vshrl.u32 %v1715, 7
    %v1717 = vsub.s32 %v1714, %v1716
    %v1718 = vrot.slane %v1710, %v1717
    %v1720 = vunpack.c.l.s4 1966171168
    %v1721 = vunpack.c.0.s8 %v1720
    %v1722 = vlaneseq
    %v1723 = vshrl.u32 %v1722, 7
    %v1724 = vsub.s32 %v1721, %v1723
    %v1725 = vrot.slane %v1711, %v1724
    %v1726 = vcombine.low %v1718, %v1725
    %v1728 = vunpack.c.l.s4 1966171168
    %v1729 = vunpack.c.0.s8 %v1728
    %v1730 = vlaneseq
    %v1731 = vshrl.u32 %v1730, 7
    %v1732 = vsub.s32 %v1729, %v1731
    %v1733 = vrot.slane %v1726, %v1732
    %v1735 = vadd.f32 %v1623, %v1733
    %v1736 = vxor.u32 %v1735, 2147483648
    %v1737 = vmul.f32 %v1736, 1.442695
    %v1738 = vpow.pop %v1737
    %v1739 = vadd.f32 %v1738, 1.0
    %v1740 = vrcp.pop %v1739
    %v1741 = vmul.f32 1.0, %v1740
    %v1743 = vrot.slane %v1735, 1
    %v1745 = vxor.u32 %v1743, 2147483648
    %v1746 = vmul.f32 %v1745, 1.442695
    %v1747 = vpow.pop %v1746
    %v1748 = vadd.f32 %v1747, 1.0
    %v1749 = vrcp.pop %v1748
    %v1750 = vmul.f32 1.0, %v1749
    %v1751 = vrot.slane %v1735, 2
    %v1753 = vtanh.pop %v1751
    %v1754 = vrot.slane %v1735, 3
    %v1756 = vxor.u32 %v1754, 2147483648
    %v1757 = vmul.f32 %v1756, 1.442695
    %v1758 = vpow.pop %v1757
    %v1759 = vadd.f32 %v1758, 1.0
    %v1760 = vrcp.pop %v1759
    %v1761 = vmul.f32 1.0, %v1760
    %v1762 = vmul.f32 %v1750, %v1511
    %v1763 = vmul.f32 %v1741, %v1753
    %v1764 = vadd.f32 %v1762, %v1763
    %v1765 = vtanh.pop %v1764
    %v1766 = vmul.f32 %v1761, %v1765
    %v1767 = vpack.c.bf16 %v1766, %v1766
    %v1768 = vpack.c.bf16 %v1621, %v1621
    %1769 = vmatprep.subr.bf16.mxu0 %v698
    %1770 = vmatpush1.bf16.msra.mxu0 %v697
    %1771 = vmatprep.subr.bf16.mxu0 %v694
    %1772 = vmatpush1.bf16.msra.mxu0 %v693
    %1773 = vmatprep.subr.bf16.mxu0 %v690
    %1774 = vmatpush1.bf16.msra.mxu0 %v689
    %1775 = vmatprep.subr.bf16.mxu0 %v686
    %1776 = vmatpush1.bf16.msra.mxu0 %v685
    %1777 = vmatprep.subr.bf16.mxu0 %v682
    %1778 = vmatpush1.bf16.msra.mxu0 %v681
    %1779 = vmatprep.subr.bf16.mxu0 %v678
    %1780 = vmatpush1.bf16.msra.mxu0 %v677
    %1781 = vmatprep.subr.bf16.mxu0 %v674
    %1782 = vmatpush1.bf16.msra.mxu0 %v673
    %1783 = vmatprep.subr.bf16.mxu0 %v670
    %1784 = vmatpush1.bf16.msra.mxu0 %v669
    %1785 = vmatprep.subr.bf16.mxu0 %v730
    %1786 = vmatpush2.bf16.msra.mxu0 %v729
    %1787 = vmatprep.subr.bf16.mxu0 %v726
    %1788 = vmatpush2.bf16.msra.mxu0 %v725
    %1789 = vmatprep.subr.bf16.mxu0 %v722
    %1790 = vmatpush2.bf16.msra.mxu0 %v721
    %1791 = vmatprep.subr.bf16.mxu0 %v718
    %1792 = vmatpush2.bf16.msra.mxu0 %v717
    %1793 = vmatprep.subr.bf16.mxu0 %v714
    %1794 = vmatpush2.bf16.msra.mxu0 %v713
    %1795 = vmatprep.subr.bf16.mxu0 %v710
    %1796 = vmatpush2.bf16.msra.mxu0 %v709
    %1797 = vmatprep.subr.bf16.mxu0 %v706
    %1798 = vmatpush2.bf16.msra.mxu0 %v705
    %1799 = vmatprep.subr.bf16.mxu0 %v702
    %1800 = vmatpush2.bf16.msra.mxu0 %v701
    %1801 = vmatprep.mubr.bf16.mxu0 %v1768
    %1802 = vmatmul.mubr.bf16.gmra.mxu0 %v1767
    %v1803 = vpop.f32.mrf.mxu0
    %v1804 = vadd.f32 %v801, %v1803
    %v1805 = vpop.f32.mrf.mxu0
    %v1806 = vadd.f32 %v805, %v1805
    %v1807 = vpop.f32.mrf.mxu0
    %v1808 = vpop.f32.mrf.mxu0
    %1809 = vdwg.mxu0
    %1810 = vmatprep.subr.bf16.mxu0 %v700
    %1811 = vmatpush1.bf16.msra.mxu0 %v699
    %1812 = vmatprep.subr.bf16.mxu0 %v696
    %1813 = vmatpush1.bf16.msra.mxu0 %v695
    %1814 = vmatprep.subr.bf16.mxu0 %v692
    %1815 = vmatpush1.bf16.msra.mxu0 %v691
    %1816 = vmatprep.subr.bf16.mxu0 %v688
    %1817 = vmatpush1.bf16.msra.mxu0 %v687
    %1818 = vmatprep.subr.bf16.mxu0 %v684
    %1819 = vmatpush1.bf16.msra.mxu0 %v683
    %1820 = vmatprep.subr.bf16.mxu0 %v680
    %1821 = vmatpush1.bf16.msra.mxu0 %v679
    %1822 = vmatprep.subr.bf16.mxu0 %v676
    %1823 = vmatpush1.bf16.msra.mxu0 %v675
    %1824 = vmatprep.subr.bf16.mxu0 %v672
    %1825 = vmatpush1.bf16.msra.mxu0 %v671
    %1826 = vmatprep.subr.bf16.mxu0 %v732
    %1827 = vmatpush2.bf16.msra.mxu0 %v731
    %1828 = vmatprep.subr.bf16.mxu0 %v728
    %1829 = vmatpush2.bf16.msra.mxu0 %v727
    %1830 = vmatprep.subr.bf16.mxu0 %v724
    %1831 = vmatpush2.bf16.msra.mxu0 %v723
    %1832 = vmatprep.subr.bf16.mxu0 %v720
    %1833 = vmatpush2.bf16.msra.mxu0 %v719
    %1834 = vmatprep.subr.bf16.mxu0 %v716
    %1835 = vmatpush2.bf16.msra.mxu0 %v715
    %1836 = vmatprep.subr.bf16.mxu0 %v712
    %1837 = vmatpush2.bf16.msra.mxu0 %v711
    %1838 = vmatprep.subr.bf16.mxu0 %v708
    %1839 = vmatpush2.bf16.msra.mxu0 %v707
    %1840 = vmatprep.subr.bf16.mxu0 %v704
    %1841 = vmatpush2.bf16.msra.mxu0 %v703
    %1842 = vmatprep.mubr.bf16.mxu0 %v1768
    %1843 = vmatmul.mubr.bf16.gmra.mxu0 %v1767
    %v1844 = vpop.f32.mrf.mxu0
    %v1845 = vadd.f32 %v809, %v1844
    %v1846 = vpop.f32.mrf.mxu0
    %v1847 = vadd.f32 %v813, %v1846
    %v1848 = vpop.f32.mrf.mxu0
    %v1849 = vpop.f32.mrf.mxu0
    %1850 = vdwg.mxu0
    %v1851 = vxor.u32 %v1804, 2147483648
    %v1852 = vmul.f32 %v1851, 1.442695
    %v1853 = vpow.pop %v1852
    %v1854 = vadd.f32 %v1853, 1.0
    %v1855 = vrcp.pop %v1854
    %v1856 = vmul.f32 1.0, %v1855
    %v1857 = vxor.u32 %v1806, 2147483648
    %v1858 = vmul.f32 %v1857, 1.442695
    %v1859 = vpow.pop %v1858
    %v1860 = vadd.f32 %v1859, 1.0
    %v1861 = vrcp.pop %v1860
    %v1862 = vmul.f32 1.0, %v1861
    %v1863 = vtanh.pop %v1845
    %v1864 = vxor.u32 %v1847, 2147483648
    %v1865 = vmul.f32 %v1864, 1.442695
    %v1866 = vpow.pop %v1865
    %v1867 = vadd.f32 %v1866, 1.0
    %v1868 = vrcp.pop %v1867
    %v1869 = vmul.f32 1.0, %v1868
    %v1870 = vmul.f32 %v1862, %v1619
    %v1871 = vmul.f32 %v1856, %v1863
    %v1872 = vadd.f32 %v1870, %v1871
    %v1873 = vtanh.pop %v1872
    %v1874 = vmul.f32 %v1869, %v1873
    %s1875 = scalar_lea.vmem [#allocation2], 4
    %v1876 = vld [vmem:[%s1875] ss:$8 sm:$0xf]
    %1877 = vmatprep.subr.bf16.mxu0 %v1083
    %1878 = vmatpush1.bf16.msra.mxu0 %v1082
    %1879 = vmatprep.subr.bf16.mxu0 %v1079
    %1880 = vmatpush1.bf16.msra.mxu0 %v1078
    %1881 = vmatprep.subr.bf16.mxu0 %v1075
    %1882 = vmatpush1.bf16.msra.mxu0 %v1074
    %1883 = vmatprep.subr.bf16.mxu0 %v1071
    %1884 = vmatpush1.bf16.msra.mxu0 %v1070
    %1885 = vmatprep.subr.bf16.mxu0 %v1067
    %1886 = vmatpush1.bf16.msra.mxu0 %v1066
    %1887 = vmatprep.subr.bf16.mxu0 %v1063
    %1888 = vmatpush1.bf16.msra.mxu0 %v1062
    %1889 = vmatprep.subr.bf16.mxu0 %v1059
    %1890 = vmatpush1.bf16.msra.mxu0 %v1058
    %1891 = vmatprep.subr.bf16.mxu0 %v1055
    %1892 = vmatpush1.bf16.msra.mxu0 %v1054
    %1893 = vmatprep.subr.bf16.mxu0 0
    %1894 = vmatpush2.bf16.msra.mxu0 0
    %1895 = vmatprep.subr.bf16.mxu0 0
    %1896 = vmatpush2.bf16.msra.mxu0 0
    %1897 = vmatprep.subr.bf16.mxu0 0
    %1898 = vmatpush2.bf16.msra.mxu0 0
    %1899 = vmatprep.subr.bf16.mxu0 0
    %1900 = vmatpush2.bf16.msra.mxu0 0
    %1901 = vmatprep.subr.bf16.mxu0 0
    %1902 = vmatpush2.bf16.msra.mxu0 0
    %1903 = vmatprep.subr.bf16.mxu0 0
    %1904 = vmatpush2.bf16.msra.mxu0 0
    %1905 = vmatprep.subr.bf16.mxu0 0
    %1906 = vmatpush2.bf16.msra.mxu0 0
    %1907 = vmatprep.subr.bf16.mxu0 0
    %1908 = vmatpush2.bf16.msra.mxu0 0
    %1909 = vmatprep.mubr.bf16.mxu0 0
    %1910 = vmatmul.mubr.bf16.gmra.mxu0 %v1767
    %v1911 = vpop.f32.mrf.mxu0
    %v1912 = vadd.f32 0.0, %v1911
    %v1913 = vpop.f32.mrf.mxu0
    %v1914 = vadd.f32 0.0, %v1913
    %v1915 = vpop.f32.mrf.mxu0
    %v1916 = vpop.f32.mrf.mxu0
    %1917 = vdwg.mxu0
    %1918 = vmatprep.subr.bf16.mxu0 %v1085
    %1919 = vmatpush1.bf16.msra.mxu0 %v1084
    %1920 = vmatprep.subr.bf16.mxu0 %v1081
    %1921 = vmatpush1.bf16.msra.mxu0 %v1080
    %1922 = vmatprep.subr.bf16.mxu0 %v1077
    %1923 = vmatpush1.bf16.msra.mxu0 %v1076
    %1924 = vmatprep.subr.bf16.mxu0 %v1073
    %1925 = vmatpush1.bf16.msra.mxu0 %v1072
    %1926 = vmatprep.subr.bf16.mxu0 %v1069
    %1927 = vmatpush1.bf16.msra.mxu0 %v1068
    %1928 = vmatprep.subr.bf16.mxu0 %v1065
    %1929 = vmatpush1.bf16.msra.mxu0 %v1064
    %1930 = vmatprep.subr.bf16.mxu0 %v1061
    %1931 = vmatpush1.bf16.msra.mxu0 %v1060
    %1932 = vmatprep.subr.bf16.mxu0 %v1057
    %1933 = vmatpush1.bf16.msra.mxu0 %v1056
    %1934 = vmatprep.subr.bf16.mxu0 0
    %1935 = vmatpush2.bf16.msra.mxu0 0
    %1936 = vmatprep.subr.bf16.mxu0 0
    %1937 = vmatpush2.bf16.msra.mxu0 0
    %1938 = vmatprep.subr.bf16.mxu0 0
    %1939 = vmatpush2.bf16.msra.mxu0 0
    %1940 = vmatprep.subr.bf16.mxu0 0
    %1941 = vmatpush2.bf16.msra.mxu0 0
    %1942 = vmatprep.subr.bf16.mxu0 0
    %1943 = vmatpush2.bf16.msra.mxu0 0
    %1944 = vmatprep.subr.bf16.mxu0 0
    %1945 = vmatpush2.bf16.msra.mxu0 0
    %1946 = vmatprep.subr.bf16.mxu0 0
    %1947 = vmatpush2.bf16.msra.mxu0 0
    %1948 = vmatprep.subr.bf16.mxu0 0
    %1949 = vmatpush2.bf16.msra.mxu0 0
    %1950 = vmatprep.mubr.bf16.mxu0 0
    %1951 = vmatmul.mubr.bf16.gmra.mxu0 %v1767
    %v1952 = vpop.f32.mrf.mxu0
    %v1953 = vadd.f32 0.0, %v1952
    %v1954 = vpop.f32.mrf.mxu0
    %v1955 = vadd.f32 0.0, %v1954
    %v1956 = vpop.f32.mrf.mxu0
    %v1957 = vpop.f32.mrf.mxu0
    %1958 = vdwg.mxu0
    %v1963 = vcombine.low %v1912, %v1914
    %v1964 = vcombine.low %v1953, %v1955
    %v1966 = vunpack.c.l.s4 1966171168
    %v1967 = vunpack.c.0.s8 %v1966
    %v1968 = vlaneseq
    %v1969 = vshrl.u32 %v1968, 7
    %v1970 = vsub.s32 %v1967, %v1969
    %v1971 = vrot.slane %v1963, %v1970
    %v1973 = vunpack.c.l.s4 1966171168
    %v1974 = vunpack.c.0.s8 %v1973
    %v1975 = vlaneseq
    %v1976 = vshrl.u32 %v1975, 7
    %v1977 = vsub.s32 %v1974, %v1976
    %v1978 = vrot.slane %v1964, %v1977
    %v1979 = vcombine.low %v1971, %v1978
    %v1981 = vunpack.c.l.s4 1966171168
    %v1982 = vunpack.c.0.s8 %v1981
    %v1983 = vlaneseq
    %v1984 = vshrl.u32 %v1983, 7
    %v1985 = vsub.s32 %v1982, %v1984
    %v1986 = vrot.slane %v1979, %v1985
    %v1988 = vadd.f32 %v1876, %v1986
    %v1989 = vxor.u32 %v1988, 2147483648
    %v1990 = vmul.f32 %v1989, 1.442695
    %v1991 = vpow.pop %v1990
    %v1992 = vadd.f32 %v1991, 1.0
    %v1993 = vrcp.pop %v1992
    %v1994 = vmul.f32 1.0, %v1993
    %v1996 = vrot.slane %v1988, 1
    %v1998 = vxor.u32 %v1996, 2147483648
    %v1999 = vmul.f32 %v1998, 1.442695
    %v2000 = vpow.pop %v1999
    %v2001 = vadd.f32 %v2000, 1.0
    %v2002 = vrcp.pop %v2001
    %v2003 = vmul.f32 1.0, %v2002
    %v2004 = vrot.slane %v1988, 2
    %v2006 = vtanh.pop %v2004
    %v2007 = vrot.slane %v1988, 3
    %v2009 = vxor.u32 %v2007, 2147483648
    %v2010 = vmul.f32 %v2009, 1.442695
    %v2011 = vpow.pop %v2010
    %v2012 = vadd.f32 %v2011, 1.0
    %v2013 = vrcp.pop %v2012
    %v2014 = vmul.f32 1.0, %v2013
    %v2015 = vmul.f32 %v2003, %v1764
    %v2016 = vmul.f32 %v1994, %v2006
    %v2017 = vadd.f32 %v2015, %v2016
    %v2018 = vtanh.pop %v2017
    %v2019 = vmul.f32 %v2014, %v2018
    %v2020 = vpack.c.bf16 %v2019, %v2019
    %v2021 = vpack.c.bf16 %v1874, %v1874
    %2022 = vmatprep.subr.bf16.mxu0 %v698
    %2023 = vmatpush1.bf16.msra.mxu0 %v697
    %2024 = vmatprep.subr.bf16.mxu0 %v694
    %2025 = vmatpush1.bf16.msra.mxu0 %v693
    %2026 = vmatprep.subr.bf16.mxu0 %v690
    %2027 = vmatpush1.bf16.msra.mxu0 %v689
    %2028 = vmatprep.subr.bf16.mxu0 %v686
    %2029 = vmatpush1.bf16.msra.mxu0 %v685
    %2030 = vmatprep.subr.bf16.mxu0 %v682
    %2031 = vmatpush1.bf16.msra.mxu0 %v681
    %2032 = vmatprep.subr.bf16.mxu0 %v678
    %2033 = vmatpush1.bf16.msra.mxu0 %v677
    %2034 = vmatprep.subr.bf16.mxu0 %v674
    %2035 = vmatpush1.bf16.msra.mxu0 %v673
    %2036 = vmatprep.subr.bf16.mxu0 %v670
    %2037 = vmatpush1.bf16.msra.mxu0 %v669
    %2038 = vmatprep.subr.bf16.mxu0 %v730
    %2039 = vmatpush2.bf16.msra.mxu0 %v729
    %2040 = vmatprep.subr.bf16.mxu0 %v726
    %2041 = vmatpush2.bf16.msra.mxu0 %v725
    %2042 = vmatprep.subr.bf16.mxu0 %v722
    %2043 = vmatpush2.bf16.msra.mxu0 %v721
    %2044 = vmatprep.subr.bf16.mxu0 %v718
    %2045 = vmatpush2.bf16.msra.mxu0 %v717
    %2046 = vmatprep.subr.bf16.mxu0 %v714
    %2047 = vmatpush2.bf16.msra.mxu0 %v713
    %2048 = vmatprep.subr.bf16.mxu0 %v710
    %2049 = vmatpush2.bf16.msra.mxu0 %v709
    %2050 = vmatprep.subr.bf16.mxu0 %v706
    %2051 = vmatpush2.bf16.msra.mxu0 %v705
    %2052 = vmatprep.subr.bf16.mxu0 %v702
    %2053 = vmatpush2.bf16.msra.mxu0 %v701
    %2054 = vmatprep.mubr.bf16.mxu0 %v2021
    %2055 = vmatmul.mubr.bf16.gmra.mxu0 %v2020
    %v2056 = vpop.f32.mrf.mxu0
    %v2057 = vadd.f32 %v801, %v2056
    %v2058 = vpop.f32.mrf.mxu0
    %v2059 = vadd.f32 %v805, %v2058
    %v2060 = vpop.f32.mrf.mxu0
    %v2061 = vpop.f32.mrf.mxu0
    %2062 = vdwg.mxu0
    %2063 = vmatprep.subr.bf16.mxu0 %v700
    %2064 = vmatpush1.bf16.msra.mxu0 %v699
    %2065 = vmatprep.subr.bf16.mxu0 %v696
    %2066 = vmatpush1.bf16.msra.mxu0 %v695
    %2067 = vmatprep.subr.bf16.mxu0 %v692
    %2068 = vmatpush1.bf16.msra.mxu0 %v691
    %2069 = vmatprep.subr.bf16.mxu0 %v688
    %2070 = vmatpush1.bf16.msra.mxu0 %v687
    %2071 = vmatprep.subr.bf16.mxu0 %v684
    %2072 = vmatpush1.bf16.msra.mxu0 %v683
    %2073 = vmatprep.subr.bf16.mxu0 %v680
    %2074 = vmatpush1.bf16.msra.mxu0 %v679
    %2075 = vmatprep.subr.bf16.mxu0 %v676
    %2076 = vmatpush1.bf16.msra.mxu0 %v675
    %2077 = vmatprep.subr.bf16.mxu0 %v672
    %2078 = vmatpush1.bf16.msra.mxu0 %v671
    %2079 = vmatprep.subr.bf16.mxu0 %v732
    %2080 = vmatpush2.bf16.msra.mxu0 %v731
    %2081 = vmatprep.subr.bf16.mxu0 %v728
    %2082 = vmatpush2.bf16.msra.mxu0 %v727
    %2083 = vmatprep.subr.bf16.mxu0 %v724
    %2084 = vmatpush2.bf16.msra.mxu0 %v723
    %2085 = vmatprep.subr.bf16.mxu0 %v720
    %2086 = vmatpush2.bf16.msra.mxu0 %v719
    %2087 = vmatprep.subr.bf16.mxu0 %v716
    %2088 = vmatpush2.bf16.msra.mxu0 %v715
    %2089 = vmatprep.subr.bf16.mxu0 %v712
    %2090 = vmatpush2.bf16.msra.mxu0 %v711
    %2091 = vmatprep.subr.bf16.mxu0 %v708
    %2092 = vmatpush2.bf16.msra.mxu0 %v707
    %2093 = vmatprep.subr.bf16.mxu0 %v704
    %2094 = vmatpush2.bf16.msra.mxu0 %v703
    %2095 = vmatprep.mubr.bf16.mxu0 %v2021
    %2096 = vmatmul.mubr.bf16.gmra.mxu0 %v2020
    %v2097 = vpop.f32.mrf.mxu0
    %v2098 = vadd.f32 %v809, %v2097
    %v2099 = vpop.f32.mrf.mxu0
    %v2100 = vadd.f32 %v813, %v2099
    %v2101 = vpop.f32.mrf.mxu0
    %v2102 = vpop.f32.mrf.mxu0
    %2103 = vdwg.mxu0
    %v2104 = vxor.u32 %v2057, 2147483648
    %v2105 = vmul.f32 %v2104, 1.442695
    %v2106 = vpow.pop %v2105
    %v2107 = vadd.f32 %v2106, 1.0
    %v2108 = vrcp.pop %v2107
    %v2109 = vmul.f32 1.0, %v2108
    %v2110 = vxor.u32 %v2059, 2147483648
    %v2111 = vmul.f32 %v2110, 1.442695
    %v2112 = vpow.pop %v2111
    %v2113 = vadd.f32 %v2112, 1.0
    %v2114 = vrcp.pop %v2113
    %v2115 = vmul.f32 1.0, %v2114
    %v2116 = vtanh.pop %v2098
    %v2117 = vxor.u32 %v2100, 2147483648
    %v2118 = vmul.f32 %v2117, 1.442695
    %v2119 = vpow.pop %v2118
    %v2120 = vadd.f32 %v2119, 1.0
    %v2121 = vrcp.pop %v2120
    %v2122 = vmul.f32 1.0, %v2121
    %v2123 = vmul.f32 %v2115, %v1872
    %v2124 = vmul.f32 %v2109, %v2116
    %v2125 = vadd.f32 %v2123, %v2124
    %v2126 = vtanh.pop %v2125
    %v2127 = vmul.f32 %v2122, %v2126
    %s2128 = scalar_lea.vmem [#allocation2], 5
    %v2129 = vld [vmem:[%s2128] ss:$8 sm:$0xf]
    %2130 = vmatprep.subr.bf16.mxu0 %v1083
    %2131 = vmatpush1.bf16.msra.mxu0 %v1082
    %2132 = vmatprep.subr.bf16.mxu0 %v1079
    %2133 = vmatpush1.bf16.msra.mxu0 %v1078
    %2134 = vmatprep.subr.bf16.mxu0 %v1075
    %2135 = vmatpush1.bf16.msra.mxu0 %v1074
    %2136 = vmatprep.subr.bf16.mxu0 %v1071
    %2137 = vmatpush1.bf16.msra.mxu0 %v1070
    %2138 = vmatprep.subr.bf16.mxu0 %v1067
    %2139 = vmatpush1.bf16.msra.mxu0 %v1066
    %2140 = vmatprep.subr.bf16.mxu0 %v1063
    %2141 = vmatpush1.bf16.msra.mxu0 %v1062
    %2142 = vmatprep.subr.bf16.mxu0 %v1059
    %2143 = vmatpush1.bf16.msra.mxu0 %v1058
    %2144 = vmatprep.subr.bf16.mxu0 %v1055
    %2145 = vmatpush1.bf16.msra.mxu0 %v1054
    %2146 = vmatprep.subr.bf16.mxu0 0
    %2147 = vmatpush2.bf16.msra.mxu0 0
    %2148 = vmatprep.subr.bf16.mxu0 0
    %2149 = vmatpush2.bf16.msra.mxu0 0
    %2150 = vmatprep.subr.bf16.mxu0 0
    %2151 = vmatpush2.bf16.msra.mxu0 0
    %2152 = vmatprep.subr.bf16.mxu0 0
    %2153 = vmatpush2.bf16.msra.mxu0 0
    %2154 = vmatprep.subr.bf16.mxu0 0
    %2155 = vmatpush2.bf16.msra.mxu0 0
    %2156 = vmatprep.subr.bf16.mxu0 0
    %2157 = vmatpush2.bf16.msra.mxu0 0
    %2158 = vmatprep.subr.bf16.mxu0 0
    %2159 = vmatpush2.bf16.msra.mxu0 0
    %2160 = vmatprep.subr.bf16.mxu0 0
    %2161 = vmatpush2.bf16.msra.mxu0 0
    %2162 = vmatprep.mubr.bf16.mxu0 0
    %2163 = vmatmul.mubr.bf16.gmra.mxu0 %v2020
    %v2164 = vpop.f32.mrf.mxu0
    %v2165 = vadd.f32 0.0, %v2164
    %v2166 = vpop.f32.mrf.mxu0
    %v2167 = vadd.f32 0.0, %v2166
    %v2168 = vpop.f32.mrf.mxu0
    %v2169 = vpop.f32.mrf.mxu0
    %2170 = vdwg.mxu0
    %2171 = vmatprep.subr.bf16.mxu0 %v1085
    %2172 = vmatpush1.bf16.msra.mxu0 %v1084
    %2173 = vmatprep.subr.bf16.mxu0 %v1081
    %2174 = vmatpush1.bf16.msra.mxu0 %v1080
    %2175 = vmatprep.subr.bf16.mxu0 %v1077
    %2176 = vmatpush1.bf16.msra.mxu0 %v1076
    %2177 = vmatprep.subr.bf16.mxu0 %v1073
    %2178 = vmatpush1.bf16.msra.mxu0 %v1072
    %2179 = vmatprep.subr.bf16.mxu0 %v1069
    %2180 = vmatpush1.bf16.msra.mxu0 %v1068
    %2181 = vmatprep.subr.bf16.mxu0 %v1065
    %2182 = vmatpush1.bf16.msra.mxu0 %v1064
    %2183 = vmatprep.subr.bf16.mxu0 %v1061
    %2184 = vmatpush1.bf16.msra.mxu0 %v1060
    %2185 = vmatprep.subr.bf16.mxu0 %v1057
    %2186 = vmatpush1.bf16.msra.mxu0 %v1056
    %2187 = vmatprep.subr.bf16.mxu0 0
    %2188 = vmatpush2.bf16.msra.mxu0 0
    %2189 = vmatprep.subr.bf16.mxu0 0
    %2190 = vmatpush2.bf16.msra.mxu0 0
    %2191 = vmatprep.subr.bf16.mxu0 0
    %2192 = vmatpush2.bf16.msra.mxu0 0
    %2193 = vmatprep.subr.bf16.mxu0 0
    %2194 = vmatpush2.bf16.msra.mxu0 0
    %2195 = vmatprep.subr.bf16.mxu0 0
    %2196 = vmatpush2.bf16.msra.mxu0 0
    %2197 = vmatprep.subr.bf16.mxu0 0
    %2198 = vmatpush2.bf16.msra.mxu0 0
    %2199 = vmatprep.subr.bf16.mxu0 0
    %2200 = vmatpush2.bf16.msra.mxu0 0
    %2201 = vmatprep.subr.bf16.mxu0 0
    %2202 = vmatpush2.bf16.msra.mxu0 0
    %2203 = vmatprep.mubr.bf16.mxu0 0
    %2204 = vmatmul.mubr.bf16.gmra.mxu0 %v2020
    %v2205 = vpop.f32.mrf.mxu0
    %v2206 = vadd.f32 0.0, %v2205
    %v2207 = vpop.f32.mrf.mxu0
    %v2208 = vadd.f32 0.0, %v2207
    %v2209 = vpop.f32.mrf.mxu0
    %v2210 = vpop.f32.mrf.mxu0
    %2211 = vdwg.mxu0
    %v2216 = vcombine.low %v2165, %v2167
    %v2217 = vcombine.low %v2206, %v2208
    %v2219 = vunpack.c.l.s4 1966171168
    %v2220 = vunpack.c.0.s8 %v2219
    %v2221 = vlaneseq
    %v2222 = vshrl.u32 %v2221, 7
    %v2223 = vsub.s32 %v2220, %v2222
    %v2224 = vrot.slane %v2216, %v2223
    %v2226 = vunpack.c.l.s4 1966171168
    %v2227 = vunpack.c.0.s8 %v2226
    %v2228 = vlaneseq
    %v2229 = vshrl.u32 %v2228, 7
    %v2230 = vsub.s32 %v2227, %v2229
    %v2231 = vrot.slane %v2217, %v2230
    %v2232 = vcombine.low %v2224, %v2231
    %v2234 = vunpack.c.l.s4 1966171168
    %v2235 = vunpack.c.0.s8 %v2234
    %v2236 = vlaneseq
    %v2237 = vshrl.u32 %v2236, 7
    %v2238 = vsub.s32 %v2235, %v2237
    %v2239 = vrot.slane %v2232, %v2238
    %v2241 = vadd.f32 %v2129, %v2239
    %v2242 = vxor.u32 %v2241, 2147483648
    %v2243 = vmul.f32 %v2242, 1.442695
    %v2244 = vpow.pop %v2243
    %v2245 = vadd.f32 %v2244, 1.0
    %v2246 = vrcp.pop %v2245
    %v2247 = vmul.f32 1.0, %v2246
    %v2249 = vrot.slane %v2241, 1
    %v2251 = vxor.u32 %v2249, 2147483648
    %v2252 = vmul.f32 %v2251, 1.442695
    %v2253 = vpow.pop %v2252
    %v2254 = vadd.f32 %v2253, 1.0
    %v2255 = vrcp.pop %v2254
    %v2256 = vmul.f32 1.0, %v2255
    %v2257 = vrot.slane %v2241, 2
    %v2259 = vtanh.pop %v2257
    %v2260 = vrot.slane %v2241, 3
    %v2262 = vxor.u32 %v2260, 2147483648
    %v2263 = vmul.f32 %v2262, 1.442695
    %v2264 = vpow.pop %v2263
    %v2265 = vadd.f32 %v2264, 1.0
    %v2266 = vrcp.pop %v2265
    %v2267 = vmul.f32 1.0, %v2266
    %v2268 = vmul.f32 %v2256, %v2017
    %v2269 = vmul.f32 %v2247, %v2259
    %v2270 = vadd.f32 %v2268, %v2269
    %v2271 = vtanh.pop %v2270
    %v2272 = vmul.f32 %v2267, %v2271
    %v2273 = vpack.c.bf16 %v2272, %v2272
    %v2274 = vpack.c.bf16 %v2127, %v2127
    %2275 = vmatprep.subr.bf16.mxu0 %v698
    %2276 = vmatpush1.bf16.msra.mxu0 %v697
    %2277 = vmatprep.subr.bf16.mxu0 %v694
    %2278 = vmatpush1.bf16.msra.mxu0 %v693
    %2279 = vmatprep.subr.bf16.mxu0 %v690
    %2280 = vmatpush1.bf16.msra.mxu0 %v689
    %2281 = vmatprep.subr.bf16.mxu0 %v686
    %2282 = vmatpush1.bf16.msra.mxu0 %v685
    %2283 = vmatprep.subr.bf16.mxu0 %v682
    %2284 = vmatpush1.bf16.msra.mxu0 %v681
    %2285 = vmatprep.subr.bf16.mxu0 %v678
    %2286 = vmatpush1.bf16.msra.mxu0 %v677
    %2287 = vmatprep.subr.bf16.mxu0 %v674
    %2288 = vmatpush1.bf16.msra.mxu0 %v673
    %2289 = vmatprep.subr.bf16.mxu0 %v670
    %2290 = vmatpush1.bf16.msra.mxu0 %v669
    %2291 = vmatprep.subr.bf16.mxu0 %v730
    %2292 = vmatpush2.bf16.msra.mxu0 %v729
    %2293 = vmatprep.subr.bf16.mxu0 %v726
    %2294 = vmatpush2.bf16.msra.mxu0 %v725
    %2295 = vmatprep.subr.bf16.mxu0 %v722
    %2296 = vmatpush2.bf16.msra.mxu0 %v721
    %2297 = vmatprep.subr.bf16.mxu0 %v718
    %2298 = vmatpush2.bf16.msra.mxu0 %v717
    %2299 = vmatprep.subr.bf16.mxu0 %v714
    %2300 = vmatpush2.bf16.msra.mxu0 %v713
    %2301 = vmatprep.subr.bf16.mxu0 %v710
    %2302 = vmatpush2.bf16.msra.mxu0 %v709
    %2303 = vmatprep.subr.bf16.mxu0 %v706
    %2304 = vmatpush2.bf16.msra.mxu0 %v705
    %2305 = vmatprep.subr.bf16.mxu0 %v702
    %2306 = vmatpush2.bf16.msra.mxu0 %v701
    %2307 = vmatprep.mubr.bf16.mxu0 %v2274
    %2308 = vmatmul.mubr.bf16.gmra.mxu0 %v2273
    %v2309 = vpop.f32.mrf.mxu0
    %v2310 = vadd.f32 %v801, %v2309
    %v2311 = vpop.f32.mrf.mxu0
    %v2312 = vadd.f32 %v805, %v2311
    %v2313 = vpop.f32.mrf.mxu0
    %v2314 = vpop.f32.mrf.mxu0
    %2315 = vdwg.mxu0
    %2316 = vmatprep.subr.bf16.mxu0 %v700
    %2317 = vmatpush1.bf16.msra.mxu0 %v699
    %2318 = vmatprep.subr.bf16.mxu0 %v696
    %2319 = vmatpush1.bf16.msra.mxu0 %v695
    %2320 = vmatprep.subr.bf16.mxu0 %v692
    %2321 = vmatpush1.bf16.msra.mxu0 %v691
    %2322 = vmatprep.subr.bf16.mxu0 %v688
    %2323 = vmatpush1.bf16.msra.mxu0 %v687
    %2324 = vmatprep.subr.bf16.mxu0 %v684
    %2325 = vmatpush1.bf16.msra.mxu0 %v683
    %2326 = vmatprep.subr.bf16.mxu0 %v680
    %2327 = vmatpush1.bf16.msra.mxu0 %v679
    %2328 = vmatprep.subr.bf16.mxu0 %v676
    %2329 = vmatpush1.bf16.msra.mxu0 %v675
    %2330 = vmatprep.subr.bf16.mxu0 %v672
    %2331 = vmatpush1.bf16.msra.mxu0 %v671
    %2332 = vmatprep.subr.bf16.mxu0 %v732
    %2333 = vmatpush2.bf16.msra.mxu0 %v731
    %2334 = vmatprep.subr.bf16.mxu0 %v728
    %2335 = vmatpush2.bf16.msra.mxu0 %v727
    %2336 = vmatprep.subr.bf16.mxu0 %v724
    %2337 = vmatpush2.bf16.msra.mxu0 %v723
    %2338 = vmatprep.subr.bf16.mxu0 %v720
    %2339 = vmatpush2.bf16.msra.mxu0 %v719
    %2340 = vmatprep.subr.bf16.mxu0 %v716
    %2341 = vmatpush2.bf16.msra.mxu0 %v715
    %2342 = vmatprep.subr.bf16.mxu0 %v712
    %2343 = vmatpush2.bf16.msra.mxu0 %v711
    %2344 = vmatprep.subr.bf16.mxu0 %v708
    %2345 = vmatpush2.bf16.msra.mxu0 %v707
    %2346 = vmatprep.subr.bf16.mxu0 %v704
    %2347 = vmatpush2.bf16.msra.mxu0 %v703
    %2348 = vmatprep.mubr.bf16.mxu0 %v2274
    %2349 = vmatmul.mubr.bf16.gmra.mxu0 %v2273
    %v2350 = vpop.f32.mrf.mxu0
    %v2351 = vadd.f32 %v809, %v2350
    %v2352 = vpop.f32.mrf.mxu0
    %v2353 = vadd.f32 %v813, %v2352
    %v2354 = vpop.f32.mrf.mxu0
    %v2355 = vpop.f32.mrf.mxu0
    %2356 = vdwg.mxu0
    %v2357 = vxor.u32 %v2310, 2147483648
    %v2358 = vmul.f32 %v2357, 1.442695
    %v2359 = vpow.pop %v2358
    %v2360 = vadd.f32 %v2359, 1.0
    %v2361 = vrcp.pop %v2360
    %v2362 = vmul.f32 1.0, %v2361
    %v2363 = vxor.u32 %v2312, 2147483648
    %v2364 = vmul.f32 %v2363, 1.442695
    %v2365 = vpow.pop %v2364
    %v2366 = vadd.f32 %v2365, 1.0
    %v2367 = vrcp.pop %v2366
    %v2368 = vmul.f32 1.0, %v2367
    %v2369 = vtanh.pop %v2351
    %v2370 = vxor.u32 %v2353, 2147483648
    %v2371 = vmul.f32 %v2370, 1.442695
    %v2372 = vpow.pop %v2371
    %v2373 = vadd.f32 %v2372, 1.0
    %v2374 = vrcp.pop %v2373
    %v2375 = vmul.f32 1.0, %v2374
    %v2376 = vmul.f32 %v2368, %v2125
    %v2377 = vmul.f32 %v2362, %v2369
    %v2378 = vadd.f32 %v2376, %v2377
    %v2379 = vtanh.pop %v2378
    %v2380 = vmul.f32 %v2375, %v2379
    %2381 = vst [vmem:[#allocation11] sm:$0x1] %v2380
    %s2382 = scalar_lea.vmem [#allocation2], 6
    %v2383 = vld [vmem:[%s2382] ss:$8 sm:$0xf]
    %v2384 = vld [vmem:[#allocation10] sm:$0xff]
    %v2385 = vld [vmem:[#allocation10 + $0x8] sm:$0xff]
    %v2386 = vld [vmem:[#allocation10 + $0x10] sm:$0xff]
    %v2387 = vld [vmem:[#allocation10 + $0x18] sm:$0xff]
    %v2388 = vld [vmem:[#allocation10 + $0x20] sm:$0xff]
    %v2389 = vld [vmem:[#allocation10 + $0x28] sm:$0xff]
    %v2390 = vld [vmem:[#allocation10 + $0x30] sm:$0xff]
    %v2391 = vld [vmem:[#allocation10 + $0x38] sm:$0xff]
    %v2392 = vld [vmem:[#allocation10 + $0x40] sm:$0xff]
    %v2393 = vld [vmem:[#allocation10 + $0x48] sm:$0xff]
    %v2394 = vld [vmem:[#allocation10 + $0x50] sm:$0xff]
    %v2395 = vld [vmem:[#allocation10 + $0x58] sm:$0xff]
    %v2396 = vld [vmem:[#allocation10 + $0x60] sm:$0xff]
    %v2397 = vld [vmem:[#allocation10 + $0x68] sm:$0xff]
    %v2398 = vld [vmem:[#allocation10 + $0x70] sm:$0xff]
    %v2399 = vld [vmem:[#allocation10 + $0x78] sm:$0xff]
    %v2400 = vld [vmem:[#allocation10 + $0x80] sm:$0xff]
    %v2401 = vld [vmem:[#allocation10 + $0x88] sm:$0xff]
    %v2402 = vld [vmem:[#allocation10 + $0x90] sm:$0xff]
    %v2403 = vld [vmem:[#allocation10 + $0x98] sm:$0xff]
    %v2404 = vld [vmem:[#allocation10 + $0xa0] sm:$0xff]
    %v2405 = vld [vmem:[#allocation10 + $0xa8] sm:$0xff]
    %v2406 = vld [vmem:[#allocation10 + $0xb0] sm:$0xff]
    %v2407 = vld [vmem:[#allocation10 + $0xb8] sm:$0xff]
    %v2408 = vld [vmem:[#allocation10 + $0xc0] sm:$0xff]
    %v2409 = vld [vmem:[#allocation10 + $0xc8] sm:$0xff]
    %v2410 = vld [vmem:[#allocation10 + $0xd0] sm:$0xff]
    %v2411 = vld [vmem:[#allocation10 + $0xd8] sm:$0xff]
    %v2412 = vld [vmem:[#allocation10 + $0xe0] sm:$0xff]
    %v2413 = vld [vmem:[#allocation10 + $0xe8] sm:$0xff]
    %v2414 = vld [vmem:[#allocation10 + $0xf0] sm:$0xff]
    %v2415 = vld [vmem:[#allocation10 + $0xf8] sm:$0xff]
    %v2448 = vunpack.c.l.b16 %v2384
    %v2449 = vunpack.c.h.b16 %v2384
    %v2450 = vunpack.c.l.b16 %v2385
    %v2451 = vunpack.c.h.b16 %v2385
    %v2452 = vunpack.c.l.b16 %v2386
    %v2453 = vunpack.c.h.b16 %v2386
    %v2454 = vunpack.c.l.b16 %v2387
    %v2455 = vunpack.c.h.b16 %v2387
    %v2456 = vunpack.c.l.b16 %v2388
    %v2457 = vunpack.c.h.b16 %v2388
    %v2458 = vunpack.c.l.b16 %v2389
    %v2459 = vunpack.c.h.b16 %v2389
    %v2460 = vunpack.c.l.b16 %v2390
    %v2461 = vunpack.c.h.b16 %v2390
    %v2462 = vunpack.c.l.b16 %v2391
    %v2463 = vunpack.c.h.b16 %v2391
    %v2464 = vunpack.c.l.b16 %v2392
    %v2465 = vunpack.c.h.b16 %v2392
    %v2466 = vunpack.c.l.b16 %v2393
    %v2467 = vunpack.c.h.b16 %v2393
    %v2468 = vunpack.c.l.b16 %v2394
    %v2469 = vunpack.c.h.b16 %v2394
    %v2470 = vunpack.c.l.b16 %v2395
    %v2471 = vunpack.c.h.b16 %v2395
    %v2472 = vunpack.c.l.b16 %v2396
    %v2473 = vunpack.c.h.b16 %v2396
    %v2474 = vunpack.c.l.b16 %v2397
    %v2475 = vunpack.c.h.b16 %v2397
    %v2476 = vunpack.c.l.b16 %v2398
    %v2477 = vunpack.c.h.b16 %v2398
    %v2478 = vunpack.c.l.b16 %v2399
    %v2479 = vunpack.c.h.b16 %v2399
    %v2480 = vunpack.c.l.b16 %v2400
    %v2481 = vunpack.c.h.b16 %v2400
    %v2482 = vunpack.c.l.b16 %v2401
    %v2483 = vunpack.c.h.b16 %v2401
    %v2484 = vunpack.c.l.b16 %v2402
    %v2485 = vunpack.c.h.b16 %v2402
    %v2486 = vunpack.c.l.b16 %v2403
    %v2487 = vunpack.c.h.b16 %v2403
    %v2488 = vunpack.c.l.b16 %v2404
    %v2489 = vunpack.c.h.b16 %v2404
    %v2490 = vunpack.c.l.b16 %v2405
    %v2491 = vunpack.c.h.b16 %v2405
    %v2492 = vunpack.c.l.b16 %v2406
    %v2493 = vunpack.c.h.b16 %v2406
    %v2494 = vunpack.c.l.b16 %v2407
    %v2495 = vunpack.c.h.b16 %v2407
    %v2496 = vunpack.c.l.b16 %v2408
    %v2497 = vunpack.c.h.b16 %v2408
    %v2498 = vunpack.c.l.b16 %v2409
    %v2499 = vunpack.c.h.b16 %v2409
    %v2500 = vunpack.c.l.b16 %v2410
    %v2501 = vunpack.c.h.b16 %v2410
    %v2502 = vunpack.c.l.b16 %v2411
    %v2503 = vunpack.c.h.b16 %v2411
    %v2504 = vunpack.c.l.b16 %v2412
    %v2505 = vunpack.c.h.b16 %v2412
    %v2506 = vunpack.c.l.b16 %v2413
    %v2507 = vunpack.c.h.b16 %v2413
    %v2508 = vunpack.c.l.b16 %v2414
    %v2509 = vunpack.c.h.b16 %v2414
    %v2510 = vunpack.c.l.b16 %v2415
    %v2511 = vunpack.c.h.b16 %v2415
    %v2512 = vpack.c.b16 %v2452, %v2448
    %v2513 = vpack.c.b16 %v2453, %v2449
    %v2514 = vpack.c.b16 %v2454, %v2450
    %v2515 = vpack.c.b16 %v2455, %v2451
    %v2516 = vpack.c.b16 %v2460, %v2456
    %v2517 = vpack.c.b16 %v2461, %v2457
    %v2518 = vpack.c.b16 %v2462, %v2458
    %v2519 = vpack.c.b16 %v2463, %v2459
    %v2520 = vpack.c.b16 %v2468, %v2464
    %v2521 = vpack.c.b16 %v2469, %v2465
    %v2522 = vpack.c.b16 %v2470, %v2466
    %v2523 = vpack.c.b16 %v2471, %v2467
    %v2524 = vpack.c.b16 %v2476, %v2472
    %v2525 = vpack.c.b16 %v2477, %v2473
    %v2526 = vpack.c.b16 %v2478, %v2474
    %v2527 = vpack.c.b16 %v2479, %v2475
    %v2528 = vpack.c.b16 %v2484, %v2480
    %v2529 = vpack.c.b16 %v2485, %v2481
    %v2530 = vpack.c.b16 %v2486, %v2482
    %v2531 = vpack.c.b16 %v2487, %v2483
    %v2532 = vpack.c.b16 %v2492, %v2488
    %v2533 = vpack.c.b16 %v2493, %v2489
    %v2534 = vpack.c.b16 %v2494, %v2490
    %v2535 = vpack.c.b16 %v2495, %v2491
    %v2536 = vpack.c.b16 %v2500, %v2496
    %v2537 = vpack.c.b16 %v2501, %v2497
    %v2538 = vpack.c.b16 %v2502, %v2498
    %v2539 = vpack.c.b16 %v2503, %v2499
    %v2540 = vpack.c.b16 %v2508, %v2504
    %v2541 = vpack.c.b16 %v2509, %v2505
    %v2542 = vpack.c.b16 %v2510, %v2506
    %v2543 = vpack.c.b16 %v2511, %v2507
    %2576 = vmatprep.subr.bf16.mxu0 %v2541
    %2577 = vmatpush1.bf16.msra.mxu0 %v2540
    %2578 = vmatprep.subr.bf16.mxu0 %v2537
    %2579 = vmatpush1.bf16.msra.mxu0 %v2536
    %2580 = vmatprep.subr.bf16.mxu0 %v2533
    %2581 = vmatpush1.bf16.msra.mxu0 %v2532
    %2582 = vmatprep.subr.bf16.mxu0 %v2529
    %2583 = vmatpush1.bf16.msra.mxu0 %v2528
    %2584 = vmatprep.subr.bf16.mxu0 %v2525
    %2585 = vmatpush1.bf16.msra.mxu0 %v2524
    %2586 = vmatprep.subr.bf16.mxu0 %v2521
    %2587 = vmatpush1.bf16.msra.mxu0 %v2520
    %2588 = vmatprep.subr.bf16.mxu0 %v2517
    %2589 = vmatpush1.bf16.msra.mxu0 %v2516
    %2590 = vmatprep.subr.bf16.mxu0 %v2513
    %2591 = vmatpush1.bf16.msra.mxu0 %v2512
    %2592 = vmatprep.subr.bf16.mxu0 0
    %2593 = vmatpush2.bf16.msra.mxu0 0
    %2594 = vmatprep.subr.bf16.mxu0 0
    %2595 = vmatpush2.bf16.msra.mxu0 0
    %2596 = vmatprep.subr.bf16.mxu0 0
    %2597 = vmatpush2.bf16.msra.mxu0 0
    %2598 = vmatprep.subr.bf16.mxu0 0
    %2599 = vmatpush2.bf16.msra.mxu0 0
    %2600 = vmatprep.subr.bf16.mxu0 0
    %2601 = vmatpush2.bf16.msra.mxu0 0
    %2602 = vmatprep.subr.bf16.mxu0 0
    %2603 = vmatpush2.bf16.msra.mxu0 0
    %2604 = vmatprep.subr.bf16.mxu0 0
    %2605 = vmatpush2.bf16.msra.mxu0 0
    %2606 = vmatprep.subr.bf16.mxu0 0
    %2607 = vmatpush2.bf16.msra.mxu0 0
    %2608 = vmatprep.mubr.bf16.mxu0 0
    %2609 = vmatmul.mubr.bf16.gmra.mxu0 %v2273
    %v2610 = vpop.f32.mrf.mxu0
    %v2611 = vadd.f32 0.0, %v2610
    %v2612 = vpop.f32.mrf.mxu0
    %v2613 = vadd.f32 0.0, %v2612
    %v2614 = vpop.f32.mrf.mxu0
    %v2615 = vpop.f32.mrf.mxu0
    %2616 = vdwg.mxu0
    %2617 = vmatprep.subr.bf16.mxu0 %v2543
    %2618 = vmatpush1.bf16.msra.mxu0 %v2542
    %2619 = vmatprep.subr.bf16.mxu0 %v2539
    %2620 = vmatpush1.bf16.msra.mxu0 %v2538
    %2621 = vmatprep.subr.bf16.mxu0 %v2535
    %2622 = vmatpush1.bf16.msra.mxu0 %v2534
    %2623 = vmatprep.subr.bf16.mxu0 %v2531
    %2624 = vmatpush1.bf16.msra.mxu0 %v2530
    %2625 = vmatprep.subr.bf16.mxu0 %v2527
    %2626 = vmatpush1.bf16.msra.mxu0 %v2526
    %2627 = vmatprep.subr.bf16.mxu0 %v2523
    %2628 = vmatpush1.bf16.msra.mxu0 %v2522
    %2629 = vmatprep.subr.bf16.mxu0 %v2519
    %2630 = vmatpush1.bf16.msra.mxu0 %v2518
    %2631 = vmatprep.subr.bf16.mxu0 %v2515
    %2632 = vmatpush1.bf16.msra.mxu0 %v2514
    %2633 = vmatprep.subr.bf16.mxu0 0
    %2634 = vmatpush2.bf16.msra.mxu0 0
    %2635 = vmatprep.subr.bf16.mxu0 0
    %2636 = vmatpush2.bf16.msra.mxu0 0
    %2637 = vmatprep.subr.bf16.mxu0 0
    %2638 = vmatpush2.bf16.msra.mxu0 0
    %2639 = vmatprep.subr.bf16.mxu0 0
    %2640 = vmatpush2.bf16.msra.mxu0 0
    %2641 = vmatprep.subr.bf16.mxu0 0
    %2642 = vmatpush2.bf16.msra.mxu0 0
    %2643 = vmatprep.subr.bf16.mxu0 0
    %2644 = vmatpush2.bf16.msra.mxu0 0
    %2645 = vmatprep.subr.bf16.mxu0 0
    %2646 = vmatpush2.bf16.msra.mxu0 0
    %2647 = vmatprep.subr.bf16.mxu0 0
    %2648 = vmatpush2.bf16.msra.mxu0 0
    %2649 = vmatprep.mubr.bf16.mxu0 0
    %2650 = vmatmul.mubr.bf16.gmra.mxu0 %v2273
    %v2651 = vpop.f32.mrf.mxu0
    %v2652 = vadd.f32 0.0, %v2651
    %v2653 = vpop.f32.mrf.mxu0
    %v2654 = vadd.f32 0.0, %v2653
    %v2655 = vpop.f32.mrf.mxu0
    %v2656 = vpop.f32.mrf.mxu0
    %2657 = vdwg.mxu0
    %v2662 = vcombine.low %v2611, %v2613
    %v2663 = vcombine.low %v2652, %v2654
    %v2665 = vunpack.c.l.s4 1966171168
    %v2666 = vunpack.c.0.s8 %v2665
    %v2667 = vlaneseq
    %v2668 = vshrl.u32 %v2667, 7
    %v2669 = vsub.s32 %v2666, %v2668
    %v2670 = vrot.slane %v2662, %v2669
    %v2672 = vunpack.c.l.s4 1966171168
    %v2673 = vunpack.c.0.s8 %v2672
    %v2674 = vlaneseq
    %v2675 = vshrl.u32 %v2674, 7
    %v2676 = vsub.s32 %v2673, %v2675
    %v2677 = vrot.slane %v2663, %v2676
    %v2678 = vcombine.low %v2670, %v2677
    %v2680 = vunpack.c.l.s4 1966171168
    %v2681 = vunpack.c.0.s8 %v2680
    %v2682 = vlaneseq
    %v2683 = vshrl.u32 %v2682, 7
    %v2684 = vsub.s32 %v2681, %v2683
    %v2685 = vrot.slane %v2678, %v2684
    %v2687 = vadd.f32 %v2383, %v2685
    %v2688 = vxor.u32 %v2687, 2147483648
    %v2689 = vmul.f32 %v2688, 1.442695
    %v2690 = vpow.pop %v2689
    %v2691 = vadd.f32 %v2690, 1.0
    %v2692 = vrcp.pop %v2691
    %v2693 = vmul.f32 1.0, %v2692
    %v2695 = vrot.slane %v2687, 1
    %v2697 = vxor.u32 %v2695, 2147483648
    %v2698 = vmul.f32 %v2697, 1.442695
    %v2699 = vpow.pop %v2698
    %v2700 = vadd.f32 %v2699, 1.0
    %v2701 = vrcp.pop %v2700
    %v2702 = vmul.f32 1.0, %v2701
    %v2703 = vrot.slane %v2687, 2
    %v2705 = vtanh.pop %v2703
    %v2706 = vrot.slane %v2687, 3
    %v2708 = vxor.u32 %v2706, 2147483648
    %v2709 = vmul.f32 %v2708, 1.442695
    %v2710 = vpow.pop %v2709
    %v2711 = vadd.f32 %v2710, 1.0
    %v2712 = vrcp.pop %v2711
    %v2713 = vmul.f32 1.0, %v2712
    %v2714 = vmul.f32 %v2702, %v2270
    %v2715 = vmul.f32 %v2693, %v2705
    %v2716 = vadd.f32 %v2714, %v2715
    %v2717 = vtanh.pop %v2716
    %v2718 = vmul.f32 %v2713, %v2717
    %v2719 = vpack.c.bf16 %v2718, %v2718
    %v2720 = vpack.c.bf16 %v2380, %v2380
    %v2721 = vld [vmem:[#allocation3] sm:$0xff]
    %v2722 = vld [vmem:[#allocation3 + $0x8] sm:$0xff]
    %v2723 = vld [vmem:[#allocation3 + $0x10] sm:$0xff]
    %v2724 = vld [vmem:[#allocation3 + $0x18] sm:$0xff]
    %v2725 = vld [vmem:[#allocation3 + $0x20] sm:$0xff]
    %v2726 = vld [vmem:[#allocation3 + $0x28] sm:$0xff]
    %v2727 = vld [vmem:[#allocation3 + $0x30] sm:$0xff]
    %v2728 = vld [vmem:[#allocation3 + $0x38] sm:$0xff]
    %v2729 = vld [vmem:[#allocation3 + $0x40] sm:$0xff]
    %v2730 = vld [vmem:[#allocation3 + $0x48] sm:$0xff]
    %v2731 = vld [vmem:[#allocation3 + $0x50] sm:$0xff]
    %v2732 = vld [vmem:[#allocation3 + $0x58] sm:$0xff]
    %v2733 = vld [vmem:[#allocation3 + $0x60] sm:$0xff]
    %v2734 = vld [vmem:[#allocation3 + $0x68] sm:$0xff]
    %v2735 = vld [vmem:[#allocation3 + $0x70] sm:$0xff]
    %v2736 = vld [vmem:[#allocation3 + $0x78] sm:$0xff]
    %v2737 = vld [vmem:[#allocation3 + $0x80] sm:$0xff]
    %v2738 = vld [vmem:[#allocation3 + $0x88] sm:$0xff]
    %v2739 = vld [vmem:[#allocation3 + $0x90] sm:$0xff]
    %v2740 = vld [vmem:[#allocation3 + $0x98] sm:$0xff]
    %v2741 = vld [vmem:[#allocation3 + $0xa0] sm:$0xff]
    %v2742 = vld [vmem:[#allocation3 + $0xa8] sm:$0xff]
    %v2743 = vld [vmem:[#allocation3 + $0xb0] sm:$0xff]
    %v2744 = vld [vmem:[#allocation3 + $0xb8] sm:$0xff]
    %v2745 = vld [vmem:[#allocation3 + $0xc0] sm:$0xff]
    %v2746 = vld [vmem:[#allocation3 + $0xc8] sm:$0xff]
    %v2747 = vld [vmem:[#allocation3 + $0xd0] sm:$0xff]
    %v2748 = vld [vmem:[#allocation3 + $0xd8] sm:$0xff]
    %v2749 = vld [vmem:[#allocation3 + $0xe0] sm:$0xff]
    %v2750 = vld [vmem:[#allocation3 + $0xe8] sm:$0xff]
    %v2751 = vld [vmem:[#allocation3 + $0xf0] sm:$0xff]
    %v2752 = vld [vmem:[#allocation3 + $0xf8] sm:$0xff]
    %v2753 = vld [vmem:[#allocation3 + $0x100] sm:$0xff]
    %v2754 = vld [vmem:[#allocation3 + $0x108] sm:$0xff]
    %v2755 = vld [vmem:[#allocation3 + $0x110] sm:$0xff]
    %v2756 = vld [vmem:[#allocation3 + $0x118] sm:$0xff]
    %v2757 = vld [vmem:[#allocation3 + $0x120] sm:$0xff]
    %v2758 = vld [vmem:[#allocation3 + $0x128] sm:$0xff]
    %v2759 = vld [vmem:[#allocation3 + $0x130] sm:$0xff]
    %v2760 = vld [vmem:[#allocation3 + $0x138] sm:$0xff]
    %v2761 = vld [vmem:[#allocation3 + $0x140] sm:$0xff]
    %v2762 = vld [vmem:[#allocation3 + $0x148] sm:$0xff]
    %v2763 = vld [vmem:[#allocation3 + $0x150] sm:$0xff]
    %v2764 = vld [vmem:[#allocation3 + $0x158] sm:$0xff]
    %v2765 = vld [vmem:[#allocation3 + $0x160] sm:$0xff]
    %v2766 = vld [vmem:[#allocation3 + $0x168] sm:$0xff]
    %v2767 = vld [vmem:[#allocation3 + $0x170] sm:$0xff]
    %v2768 = vld [vmem:[#allocation3 + $0x178] sm:$0xff]
    %v2769 = vld [vmem:[#allocation3 + $0x180] sm:$0xff]
    %v2770 = vld [vmem:[#allocation3 + $0x188] sm:$0xff]
    %v2771 = vld [vmem:[#allocation3 + $0x190] sm:$0xff]
    %v2772 = vld [vmem:[#allocation3 + $0x198] sm:$0xff]
    %v2773 = vld [vmem:[#allocation3 + $0x1a0] sm:$0xff]
    %v2774 = vld [vmem:[#allocation3 + $0x1a8] sm:$0xff]
    %v2775 = vld [vmem:[#allocation3 + $0x1b0] sm:$0xff]
    %v2776 = vld [vmem:[#allocation3 + $0x1b8] sm:$0xff]
    %v2777 = vld [vmem:[#allocation3 + $0x1c0] sm:$0xff]
    %v2778 = vld [vmem:[#allocation3 + $0x1c8] sm:$0xff]
    %v2779 = vld [vmem:[#allocation3 + $0x1d0] sm:$0xff]
    %v2780 = vld [vmem:[#allocation3 + $0x1d8] sm:$0xff]
    %v2781 = vld [vmem:[#allocation3 + $0x1e0] sm:$0xff]
    %v2782 = vld [vmem:[#allocation3 + $0x1e8] sm:$0xff]
    %v2783 = vld [vmem:[#allocation3 + $0x1f0] sm:$0xff]
    %v2784 = vld [vmem:[#allocation3 + $0x1f8] sm:$0xff]
    %v2785 = vld [vmem:[%s5] sm:$0xf]
    %v2850 = vunpack.c.l.b16 %v2721
    %v2851 = vunpack.c.h.b16 %v2721
    %v2852 = vunpack.c.l.b16 %v2722
    %v2853 = vunpack.c.h.b16 %v2722
    %v2854 = vunpack.c.l.b16 %v2723
    %v2855 = vunpack.c.h.b16 %v2723
    %v2856 = vunpack.c.l.b16 %v2724
    %v2857 = vunpack.c.h.b16 %v2724
    %v2858 = vunpack.c.l.b16 %v2725
    %v2859 = vunpack.c.h.b16 %v2725
    %v2860 = vunpack.c.l.b16 %v2726
    %v2861 = vunpack.c.h.b16 %v2726
    %v2862 = vunpack.c.l.b16 %v2727
    %v2863 = vunpack.c.h.b16 %v2727
    %v2864 = vunpack.c.l.b16 %v2728
    %v2865 = vunpack.c.h.b16 %v2728
    %v2866 = vunpack.c.l.b16 %v2729
    %v2867 = vunpack.c.h.b16 %v2729
    %v2868 = vunpack.c.l.b16 %v2730
    %v2869 = vunpack.c.h.b16 %v2730
    %v2870 = vunpack.c.l.b16 %v2731
    %v2871 = vunpack.c.h.b16 %v2731
    %v2872 = vunpack.c.l.b16 %v2732
    %v2873 = vunpack.c.h.b16 %v2732
    %v2874 = vunpack.c.l.b16 %v2733
    %v2875 = vunpack.c.h.b16 %v2733
    %v2876 = vunpack.c.l.b16 %v2734
    %v2877 = vunpack.c.h.b16 %v2734
    %v2878 = vunpack.c.l.b16 %v2735
    %v2879 = vunpack.c.h.b16 %v2735
    %v2880 = vunpack.c.l.b16 %v2736
    %v2881 = vunpack.c.h.b16 %v2736
    %v2882 = vunpack.c.l.b16 %v2737
    %v2883 = vunpack.c.h.b16 %v2737
    %v2884 = vunpack.c.l.b16 %v2738
    %v2885 = vunpack.c.h.b16 %v2738
    %v2886 = vunpack.c.l.b16 %v2739
    %v2887 = vunpack.c.h.b16 %v2739
    %v2888 = vunpack.c.l.b16 %v2740
    %v2889 = vunpack.c.h.b16 %v2740
    %v2890 = vunpack.c.l.b16 %v2741
    %v2891 = vunpack.c.h.b16 %v2741
    %v2892 = vunpack.c.l.b16 %v2742
    %v2893 = vunpack.c.h.b16 %v2742
    %v2894 = vunpack.c.l.b16 %v2743
    %v2895 = vunpack.c.h.b16 %v2743
    %v2896 = vunpack.c.l.b16 %v2744
    %v2897 = vunpack.c.h.b16 %v2744
    %v2898 = vunpack.c.l.b16 %v2745
    %v2899 = vunpack.c.h.b16 %v2745
    %v2900 = vunpack.c.l.b16 %v2746
    %v2901 = vunpack.c.h.b16 %v2746
    %v2902 = vunpack.c.l.b16 %v2747
    %v2903 = vunpack.c.h.b16 %v2747
    %v2904 = vunpack.c.l.b16 %v2748
    %v2905 = vunpack.c.h.b16 %v2748
    %v2906 = vunpack.c.l.b16 %v2749
    %v2907 = vunpack.c.h.b16 %v2749
    %v2908 = vunpack.c.l.b16 %v2750
    %v2909 = vunpack.c.h.b16 %v2750
    %v2910 = vunpack.c.l.b16 %v2751
    %v2911 = vunpack.c.h.b16 %v2751
    %v2912 = vunpack.c.l.b16 %v2752
    %v2913 = vunpack.c.h.b16 %v2752
    %v2914 = vunpack.c.l.b16 %v2753
    %v2915 = vunpack.c.h.b16 %v2753
    %v2916 = vunpack.c.l.b16 %v2754
    %v2917 = vunpack.c.h.b16 %v2754
    %v2918 = vunpack.c.l.b16 %v2755
    %v2919 = vunpack.c.h.b16 %v2755
    %v2920 = vunpack.c.l.b16 %v2756
    %v2921 = vunpack.c.h.b16 %v2756
    %v2922 = vunpack.c.l.b16 %v2757
    %v2923 = vunpack.c.h.b16 %v2757
    %v2924 = vunpack.c.l.b16 %v2758
    %v2925 = vunpack.c.h.b16 %v2758
    %v2926 = vunpack.c.l.b16 %v2759
    %v2927 = vunpack.c.h.b16 %v2759
    %v2928 = vunpack.c.l.b16 %v2760
    %v2929 = vunpack.c.h.b16 %v2760
    %v2930 = vunpack.c.l.b16 %v2761
    %v2931 = vunpack.c.h.b16 %v2761
    %v2932 = vunpack.c.l.b16 %v2762
    %v2933 = vunpack.c.h.b16 %v2762
    %v2934 = vunpack.c.l.b16 %v2763
    %v2935 = vunpack.c.h.b16 %v2763
    %v2936 = vunpack.c.l.b16 %v2764
    %v2937 = vunpack.c.h.b16 %v2764
    %v2938 = vunpack.c.l.b16 %v2765
    %v2939 = vunpack.c.h.b16 %v2765
    %v2940 = vunpack.c.l.b16 %v2766
    %v2941 = vunpack.c.h.b16 %v2766
    %v2942 = vunpack.c.l.b16 %v2767
    %v2943 = vunpack.c.h.b16 %v2767
    %v2944 = vunpack.c.l.b16 %v2768
    %v2945 = vunpack.c.h.b16 %v2768
    %v2946 = vunpack.c.l.b16 %v2769
    %v2947 = vunpack.c.h.b16 %v2769
    %v2948 = vunpack.c.l.b16 %v2770
    %v2949 = vunpack.c.h.b16 %v2770
    %v2950 = vunpack.c.l.b16 %v2771
    %v2951 = vunpack.c.h.b16 %v2771
    %v2952 = vunpack.c.l.b16 %v2772
    %v2953 = vunpack.c.h.b16 %v2772
    %v2954 = vunpack.c.l.b16 %v2773
    %v2955 = vunpack.c.h.b16 %v2773
    %v2956 = vunpack.c.l.b16 %v2774
    %v2957 = vunpack.c.h.b16 %v2774
    %v2958 = vunpack.c.l.b16 %v2775
    %v2959 = vunpack.c.h.b16 %v2775
    %v2960 = vunpack.c.l.b16 %v2776
    %v2961 = vunpack.c.h.b16 %v2776
    %v2962 = vunpack.c.l.b16 %v2777
    %v2963 = vunpack.c.h.b16 %v2777
    %v2964 = vunpack.c.l.b16 %v2778
    %v2965 = vunpack.c.h.b16 %v2778
    %v2966 = vunpack.c.l.b16 %v2779
    %v2967 = vunpack.c.h.b16 %v2779
    %v2968 = vunpack.c.l.b16 %v2780
    %v2969 = vunpack.c.h.b16 %v2780
    %v2970 = vunpack.c.l.b16 %v2781
    %v2971 = vunpack.c.h.b16 %v2781
    %v2972 = vunpack.c.l.b16 %v2782
    %v2973 = vunpack.c.h.b16 %v2782
    %v2974 = vunpack.c.l.b16 %v2783
    %v2975 = vunpack.c.h.b16 %v2783
    %v2976 = vunpack.c.l.b16 %v2784
    %v2977 = vunpack.c.h.b16 %v2784
    %v2978 = vpack.c.b16 %v2854, %v2850
    %v2979 = vpack.c.b16 %v2855, %v2851
    %v2980 = vpack.c.b16 %v2856, %v2852
    %v2981 = vpack.c.b16 %v2857, %v2853
    %v2982 = vpack.c.b16 %v2862, %v2858
    %v2983 = vpack.c.b16 %v2863, %v2859
    %v2984 = vpack.c.b16 %v2864, %v2860
    %v2985 = vpack.c.b16 %v2865, %v2861
    %v2986 = vpack.c.b16 %v2870, %v2866
    %v2987 = vpack.c.b16 %v2871, %v2867
    %v2988 = vpack.c.b16 %v2872, %v2868
    %v2989 = vpack.c.b16 %v2873, %v2869
    %v2990 = vpack.c.b16 %v2878, %v2874
    %v2991 = vpack.c.b16 %v2879, %v2875
    %v2992 = vpack.c.b16 %v2880, %v2876
    %v2993 = vpack.c.b16 %v2881, %v2877
    %v2994 = vpack.c.b16 %v2886, %v2882
    %v2995 = vpack.c.b16 %v2887, %v2883
    %v2996 = vpack.c.b16 %v2888, %v2884
    %v2997 = vpack.c.b16 %v2889, %v2885
    %v2998 = vpack.c.b16 %v2894, %v2890
    %v2999 = vpack.c.b16 %v2895, %v2891
    %v3000 = vpack.c.b16 %v2896, %v2892
    %v3001 = vpack.c.b16 %v2897, %v2893
    %v3002 = vpack.c.b16 %v2902, %v2898
    %v3003 = vpack.c.b16 %v2903, %v2899
    %v3004 = vpack.c.b16 %v2904, %v2900
    %v3005 = vpack.c.b16 %v2905, %v2901
    %v3006 = vpack.c.b16 %v2910, %v2906
    %v3007 = vpack.c.b16 %v2911, %v2907
    %v3008 = vpack.c.b16 %v2912, %v2908
    %v3009 = vpack.c.b16 %v2913, %v2909
    %v3010 = vpack.c.b16 %v2918, %v2914
    %v3011 = vpack.c.b16 %v2919, %v2915
    %v3012 = vpack.c.b16 %v2920, %v2916
    %v3013 = vpack.c.b16 %v2921, %v2917
    %v3014 = vpack.c.b16 %v2926, %v2922
    %v3015 = vpack.c.b16 %v2927, %v2923
    %v3016 = vpack.c.b16 %v2928, %v2924
    %v3017 = vpack.c.b16 %v2929, %v2925
    %v3018 = vpack.c.b16 %v2934, %v2930
    %v3019 = vpack.c.b16 %v2935, %v2931
    %v3020 = vpack.c.b16 %v2936, %v2932
    %v3021 = vpack.c.b16 %v2937, %v2933
    %v3022 = vpack.c.b16 %v2942, %v2938
    %v3023 = vpack.c.b16 %v2943, %v2939
    %v3024 = vpack.c.b16 %v2944, %v2940
    %v3025 = vpack.c.b16 %v2945, %v2941
    %v3026 = vpack.c.b16 %v2950, %v2946
    %v3027 = vpack.c.b16 %v2951, %v2947
    %v3028 = vpack.c.b16 %v2952, %v2948
    %v3029 = vpack.c.b16 %v2953, %v2949
    %v3030 = vpack.c.b16 %v2958, %v2954
    %v3031 = vpack.c.b16 %v2959, %v2955
    %v3032 = vpack.c.b16 %v2960, %v2956
    %v3033 = vpack.c.b16 %v2961, %v2957
    %v3034 = vpack.c.b16 %v2966, %v2962
    %v3035 = vpack.c.b16 %v2967, %v2963
    %v3036 = vpack.c.b16 %v2968, %v2964
    %v3037 = vpack.c.b16 %v2969, %v2965
    %v3038 = vpack.c.b16 %v2974, %v2970
    %v3039 = vpack.c.b16 %v2975, %v2971
    %v3040 = vpack.c.b16 %v2976, %v2972
    %v3041 = vpack.c.b16 %v2977, %v2973
    %v3107 = vlaneseq
    %v3108 = vshrl.u32 %v3107, 7
    %v3109 = vsub.s32 0, %v3108
    %v3110 = vrot.slane %v2785, %v3109
    %v3111 = vlaneseq
    %v3112 = vshrl.u32 %v3111, 7
    %v3113 = vsub.s32 1, %v3112
    %v3114 = vrot.slane %v2785, %v3113
    %v3115 = vlaneseq
    %v3116 = vshrl.u32 %v3115, 7
    %v3117 = vsub.s32 2, %v3116
    %v3118 = vrot.slane %v2785, %v3117
    %v3119 = vlaneseq
    %v3120 = vshrl.u32 %v3119, 7
    %v3121 = vsub.s32 3, %v3120
    %v3122 = vrot.slane %v2785, %v3121
    %3127 = vmatprep.subr.bf16.mxu0 %v3007
    %3128 = vmatpush1.bf16.msra.mxu0 %v3006
    %3129 = vmatprep.subr.bf16.mxu0 %v3003
    %3130 = vmatpush1.bf16.msra.mxu0 %v3002
    %3131 = vmatprep.subr.bf16.mxu0 %v2999
    %3132 = vmatpush1.bf16.msra.mxu0 %v2998
    %3133 = vmatprep.subr.bf16.mxu0 %v2995
    %3134 = vmatpush1.bf16.msra.mxu0 %v2994
    %3135 = vmatprep.subr.bf16.mxu0 %v2991
    %3136 = vmatpush1.bf16.msra.mxu0 %v2990
    %3137 = vmatprep.subr.bf16.mxu0 %v2987
    %3138 = vmatpush1.bf16.msra.mxu0 %v2986
    %3139 = vmatprep.subr.bf16.mxu0 %v2983
    %3140 = vmatpush1.bf16.msra.mxu0 %v2982
    %3141 = vmatprep.subr.bf16.mxu0 %v2979
    %3142 = vmatpush1.bf16.msra.mxu0 %v2978
    %3143 = vmatprep.subr.bf16.mxu0 %v3039
    %3144 = vmatpush2.bf16.msra.mxu0 %v3038
    %3145 = vmatprep.subr.bf16.mxu0 %v3035
    %3146 = vmatpush2.bf16.msra.mxu0 %v3034
    %3147 = vmatprep.subr.bf16.mxu0 %v3031
    %3148 = vmatpush2.bf16.msra.mxu0 %v3030
    %3149 = vmatprep.subr.bf16.mxu0 %v3027
    %3150 = vmatpush2.bf16.msra.mxu0 %v3026
    %3151 = vmatprep.subr.bf16.mxu0 %v3023
    %3152 = vmatpush2.bf16.msra.mxu0 %v3022
    %3153 = vmatprep.subr.bf16.mxu0 %v3019
    %3154 = vmatpush2.bf16.msra.mxu0 %v3018
    %3155 = vmatprep.subr.bf16.mxu0 %v3015
    %3156 = vmatpush2.bf16.msra.mxu0 %v3014
    %3157 = vmatprep.subr.bf16.mxu0 %v3011
    %3158 = vmatpush2.bf16.msra.mxu0 %v3010
    %3159 = vmatprep.mubr.bf16.mxu0 %v2720
    %3160 = vmatmul.mubr.bf16.gmra.mxu0 %v2719
    %v3161 = vpop.f32.mrf.mxu0
    %v3162 = vadd.f32 %v3110, %v3161
    %v3163 = vpop.f32.mrf.mxu0
    %v3164 = vadd.f32 %v3114, %v3163
    %v3165 = vpop.f32.mrf.mxu0
    %v3166 = vpop.f32.mrf.mxu0
    %3167 = vdwg.mxu0
    %3168 = vmatprep.subr.bf16.mxu0 %v3009
    %3169 = vmatpush1.bf16.msra.mxu0 %v3008
    %3170 = vmatprep.subr.bf16.mxu0 %v3005
    %3171 = vmatpush1.bf16.msra.mxu0 %v3004
    %3172 = vmatprep.subr.bf16.mxu0 %v3001
    %3173 = vmatpush1.bf16.msra.mxu0 %v3000
    %3174 = vmatprep.subr.bf16.mxu0 %v2997
    %3175 = vmatpush1.bf16.msra.mxu0 %v2996
    %3176 = vmatprep.subr.bf16.mxu0 %v2993
    %3177 = vmatpush1.bf16.msra.mxu0 %v2992
    %3178 = vmatprep.subr.bf16.mxu0 %v2989
    %3179 = vmatpush1.bf16.msra.mxu0 %v2988
    %3180 = vmatprep.subr.bf16.mxu0 %v2985
    %3181 = vmatpush1.bf16.msra.mxu0 %v2984
    %3182 = vmatprep.subr.bf16.mxu0 %v2981
    %3183 = vmatpush1.bf16.msra.mxu0 %v2980
    %3184 = vmatprep.subr.bf16.mxu0 %v3041
    %3185 = vmatpush2.bf16.msra.mxu0 %v3040
    %3186 = vmatprep.subr.bf16.mxu0 %v3037
    %3187 = vmatpush2.bf16.msra.mxu0 %v3036
    %3188 = vmatprep.subr.bf16.mxu0 %v3033
    %3189 = vmatpush2.bf16.msra.mxu0 %v3032
    %3190 = vmatprep.subr.bf16.mxu0 %v3029
    %3191 = vmatpush2.bf16.msra.mxu0 %v3028
    %3192 = vmatprep.subr.bf16.mxu0 %v3025
    %3193 = vmatpush2.bf16.msra.mxu0 %v3024
    %3194 = vmatprep.subr.bf16.mxu0 %v3021
    %3195 = vmatpush2.bf16.msra.mxu0 %v3020
    %3196 = vmatprep.subr.bf16.mxu0 %v3017
    %3197 = vmatpush2.bf16.msra.mxu0 %v3016
    %3198 = vmatprep.subr.bf16.mxu0 %v3013
    %3199 = vmatpush2.bf16.msra.mxu0 %v3012
    %3200 = vmatprep.mubr.bf16.mxu0 %v2720
    %3201 = vmatmul.mubr.bf16.gmra.mxu0 %v2719
    %v3202 = vpop.f32.mrf.mxu0
    %v3203 = vadd.f32 %v3118, %v3202
    %v3204 = vpop.f32.mrf.mxu0
    %v3205 = vadd.f32 %v3122, %v3204
    %v3206 = vpop.f32.mrf.mxu0
    %v3207 = vpop.f32.mrf.mxu0
    %3208 = vdwg.mxu0
    %v3209 = vxor.u32 %v3162, 2147483648
    %v3210 = vmul.f32 %v3209, 1.442695
    %v3211 = vpow.pop %v3210
    %v3212 = vadd.f32 %v3211, 1.0
    %v3213 = vrcp.pop %v3212
    %v3214 = vmul.f32 1.0, %v3213
    %v3215 = vxor.u32 %v3164, 2147483648
    %v3216 = vmul.f32 %v3215, 1.442695
    %v3217 = vpow.pop %v3216
    %v3218 = vadd.f32 %v3217, 1.0
    %v3219 = vrcp.pop %v3218
    %v3220 = vmul.f32 1.0, %v3219
    %v3221 = vtanh.pop %v3203
    %v3222 = vxor.u32 %v3205, 2147483648
    %v3223 = vmul.f32 %v3222, 1.442695
    %v3224 = vpow.pop %v3223
    %v3225 = vadd.f32 %v3224, 1.0
    %v3226 = vrcp.pop %v3225
    %v3227 = vmul.f32 1.0, %v3226
    %v3228 = vmul.f32 %v3220, %v2378
    %v3229 = vmul.f32 %v3214, %v3221
    %v3230 = vadd.f32 %v3228, %v3229
    %v3231 = vtanh.pop %v3230
    %v3232 = vmul.f32 %v3227, %v3231
    %3233 = vst [vmem:[#allocation11 + $0x1] sm:$0x1] %v3232
    %s3234 = scalar_lea.vmem [#allocation2], 7
    %v3235 = vld [vmem:[%s3234] ss:$8 sm:$0xf]
    %v3236 = vld [vmem:[#allocation10] sm:$0xff]
    %v3237 = vld [vmem:[#allocation10 + $0x8] sm:$0xff]
    %v3238 = vld [vmem:[#allocation10 + $0x10] sm:$0xff]
    %v3239 = vld [vmem:[#allocation10 + $0x18] sm:$0xff]
    %v3240 = vld [vmem:[#allocation10 + $0x20] sm:$0xff]
    %v3241 = vld [vmem:[#allocation10 + $0x28] sm:$0xff]
    %v3242 = vld [vmem:[#allocation10 + $0x30] sm:$0xff]
    %v3243 = vld [vmem:[#allocation10 + $0x38] sm:$0xff]
    %v3244 = vld [vmem:[#allocation10 + $0x40] sm:$0xff]
    %v3245 = vld [vmem:[#allocation10 + $0x48] sm:$0xff]
    %v3246 = vld [vmem:[#allocation10 + $0x50] sm:$0xff]
    %v3247 = vld [vmem:[#allocation10 + $0x58] sm:$0xff]
    %v3248 = vld [vmem:[#allocation10 + $0x60] sm:$0xff]
    %v3249 = vld [vmem:[#allocation10 + $0x68] sm:$0xff]
    %v3250 = vld [vmem:[#allocation10 + $0x70] sm:$0xff]
    %v3251 = vld [vmem:[#allocation10 + $0x78] sm:$0xff]
    %v3252 = vld [vmem:[#allocation10 + $0x80] sm:$0xff]
    %v3253 = vld [vmem:[#allocation10 + $0x88] sm:$0xff]
    %v3254 = vld [vmem:[#allocation10 + $0x90] sm:$0xff]
    %v3255 = vld [vmem:[#allocation10 + $0x98] sm:$0xff]
    %v3256 = vld [vmem:[#allocation10 + $0xa0] sm:$0xff]
    %v3257 = vld [vmem:[#allocation10 + $0xa8] sm:$0xff]
    %v3258 = vld [vmem:[#allocation10 + $0xb0] sm:$0xff]
    %v3259 = vld [vmem:[#allocation10 + $0xb8] sm:$0xff]
    %v3260 = vld [vmem:[#allocation10 + $0xc0] sm:$0xff]
    %v3261 = vld [vmem:[#allocation10 + $0xc8] sm:$0xff]
    %v3262 = vld [vmem:[#allocation10 + $0xd0] sm:$0xff]
    %v3263 = vld [vmem:[#allocation10 + $0xd8] sm:$0xff]
    %v3264 = vld [vmem:[#allocation10 + $0xe0] sm:$0xff]
    %v3265 = vld [vmem:[#allocation10 + $0xe8] sm:$0xff]
    %v3266 = vld [vmem:[#allocation10 + $0xf0] sm:$0xff]
    %v3267 = vld [vmem:[#allocation10 + $0xf8] sm:$0xff]
    %v3300 = vunpack.c.l.b16 %v3236
    %v3301 = vunpack.c.h.b16 %v3236
    %v3302 = vunpack.c.l.b16 %v3237
    %v3303 = vunpack.c.h.b16 %v3237
    %v3304 = vunpack.c.l.b16 %v3238
    %v3305 = vunpack.c.h.b16 %v3238
    %v3306 = vunpack.c.l.b16 %v3239
    %v3307 = vunpack.c.h.b16 %v3239
    %v3308 = vunpack.c.l.b16 %v3240
    %v3309 = vunpack.c.h.b16 %v3240
    %v3310 = vunpack.c.l.b16 %v3241
    %v3311 = vunpack.c.h.b16 %v3241
    %v3312 = vunpack.c.l.b16 %v3242
    %v3313 = vunpack.c.h.b16 %v3242
    %v3314 = vunpack.c.l.b16 %v3243
    %v3315 = vunpack.c.h.b16 %v3243
    %v3316 = vunpack.c.l.b16 %v3244
    %v3317 = vunpack.c.h.b16 %v3244
    %v3318 = vunpack.c.l.b16 %v3245
    %v3319 = vunpack.c.h.b16 %v3245
    %v3320 = vunpack.c.l.b16 %v3246
    %v3321 = vunpack.c.h.b16 %v3246
    %v3322 = vunpack.c.l.b16 %v3247
    %v3323 = vunpack.c.h.b16 %v3247
    %v3324 = vunpack.c.l.b16 %v3248
    %v3325 = vunpack.c.h.b16 %v3248
    %v3326 = vunpack.c.l.b16 %v3249
    %v3327 = vunpack.c.h.b16 %v3249
    %v3328 = vunpack.c.l.b16 %v3250
    %v3329 = vunpack.c.h.b16 %v3250
    %v3330 = vunpack.c.l.b16 %v3251
    %v3331 = vunpack.c.h.b16 %v3251
    %v3332 = vunpack.c.l.b16 %v3252
    %v3333 = vunpack.c.h.b16 %v3252
    %v3334 = vunpack.c.l.b16 %v3253
    %v3335 = vunpack.c.h.b16 %v3253
    %v3336 = vunpack.c.l.b16 %v3254
    %v3337 = vunpack.c.h.b16 %v3254
    %v3338 = vunpack.c.l.b16 %v3255
    %v3339 = vunpack.c.h.b16 %v3255
    %v3340 = vunpack.c.l.b16 %v3256
    %v3341 = vunpack.c.h.b16 %v3256
    %v3342 = vunpack.c.l.b16 %v3257
    %v3343 = vunpack.c.h.b16 %v3257
    %v3344 = vunpack.c.l.b16 %v3258
    %v3345 = vunpack.c.h.b16 %v3258
    %v3346 = vunpack.c.l.b16 %v3259
    %v3347 = vunpack.c.h.b16 %v3259
    %v3348 = vunpack.c.l.b16 %v3260
    %v3349 = vunpack.c.h.b16 %v3260
    %v3350 = vunpack.c.l.b16 %v3261
    %v3351 = vunpack.c.h.b16 %v3261
    %v3352 = vunpack.c.l.b16 %v3262
    %v3353 = vunpack.c.h.b16 %v3262
    %v3354 = vunpack.c.l.b16 %v3263
    %v3355 = vunpack.c.h.b16 %v3263
    %v3356 = vunpack.c.l.b16 %v3264
    %v3357 = vunpack.c.h.b16 %v3264
    %v3358 = vunpack.c.l.b16 %v3265
    %v3359 = vunpack.c.h.b16 %v3265
    %v3360 = vunpack.c.l.b16 %v3266
    %v3361 = vunpack.c.h.b16 %v3266
    %v3362 = vunpack.c.l.b16 %v3267
    %v3363 = vunpack.c.h.b16 %v3267
    %v3364 = vpack.c.b16 %v3304, %v3300
    %v3365 = vpack.c.b16 %v3305, %v3301
    %v3366 = vpack.c.b16 %v3306, %v3302
    %v3367 = vpack.c.b16 %v3307, %v3303
    %v3368 = vpack.c.b16 %v3312, %v3308
    %v3369 = vpack.c.b16 %v3313, %v3309
    %v3370 = vpack.c.b16 %v3314, %v3310
    %v3371 = vpack.c.b16 %v3315, %v3311
    %v3372 = vpack.c.b16 %v3320, %v3316
    %v3373 = vpack.c.b16 %v3321, %v3317
    %v3374 = vpack.c.b16 %v3322, %v3318
    %v3375 = vpack.c.b16 %v3323, %v3319
    %v3376 = vpack.c.b16 %v3328, %v3324
    %v3377 = vpack.c.b16 %v3329, %v3325
    %v3378 = vpack.c.b16 %v3330, %v3326
    %v3379 = vpack.c.b16 %v3331, %v3327
    %v3380 = vpack.c.b16 %v3336, %v3332
    %v3381 = vpack.c.b16 %v3337, %v3333
    %v3382 = vpack.c.b16 %v3338, %v3334
    %v3383 = vpack.c.b16 %v3339, %v3335
    %v3384 = vpack.c.b16 %v3344, %v3340
    %v3385 = vpack.c.b16 %v3345, %v3341
    %v3386 = vpack.c.b16 %v3346, %v3342
    %v3387 = vpack.c.b16 %v3347, %v3343
    %v3388 = vpack.c.b16 %v3352, %v3348
    %v3389 = vpack.c.b16 %v3353, %v3349
    %v3390 = vpack.c.b16 %v3354, %v3350
    %v3391 = vpack.c.b16 %v3355, %v3351
    %v3392 = vpack.c.b16 %v3360, %v3356
    %v3393 = vpack.c.b16 %v3361, %v3357
    %v3394 = vpack.c.b16 %v3362, %v3358
    %v3395 = vpack.c.b16 %v3363, %v3359
    %3428 = vmatprep.subr.bf16.mxu0 %v3393
    %3429 = vmatpush1.bf16.msra.mxu0 %v3392
    %3430 = vmatprep.subr.bf16.mxu0 %v3389
    %3431 = vmatpush1.bf16.msra.mxu0 %v3388
    %3432 = vmatprep.subr.bf16.mxu0 %v3385
    %3433 = vmatpush1.bf16.msra.mxu0 %v3384
    %3434 = vmatprep.subr.bf16.mxu0 %v3381
    %3435 = vmatpush1.bf16.msra.mxu0 %v3380
    %3436 = vmatprep.subr.bf16.mxu0 %v3377
    %3437 = vmatpush1.bf16.msra.mxu0 %v3376
    %3438 = vmatprep.subr.bf16.mxu0 %v3373
    %3439 = vmatpush1.bf16.msra.mxu0 %v3372
    %3440 = vmatprep.subr.bf16.mxu0 %v3369
    %3441 = vmatpush1.bf16.msra.mxu0 %v3368
    %3442 = vmatprep.subr.bf16.mxu0 %v3365
    %3443 = vmatpush1.bf16.msra.mxu0 %v3364
    %3444 = vmatprep.subr.bf16.mxu0 0
    %3445 = vmatpush2.bf16.msra.mxu0 0
    %3446 = vmatprep.subr.bf16.mxu0 0
    %3447 = vmatpush2.bf16.msra.mxu0 0
    %3448 = vmatprep.subr.bf16.mxu0 0
    %3449 = vmatpush2.bf16.msra.mxu0 0
    %3450 = vmatprep.subr.bf16.mxu0 0
    %3451 = vmatpush2.bf16.msra.mxu0 0
    %3452 = vmatprep.subr.bf16.mxu0 0
    %3453 = vmatpush2.bf16.msra.mxu0 0
    %3454 = vmatprep.subr.bf16.mxu0 0
    %3455 = vmatpush2.bf16.msra.mxu0 0
    %3456 = vmatprep.subr.bf16.mxu0 0
    %3457 = vmatpush2.bf16.msra.mxu0 0
    %3458 = vmatprep.subr.bf16.mxu0 0
    %3459 = vmatpush2.bf16.msra.mxu0 0
    %3460 = vmatprep.mubr.bf16.mxu0 0
    %3461 = vmatmul.mubr.bf16.gmra.mxu0 %v2719
    %v3462 = vpop.f32.mrf.mxu0
    %v3463 = vadd.f32 0.0, %v3462
    %v3464 = vpop.f32.mrf.mxu0
    %v3465 = vadd.f32 0.0, %v3464
    %v3466 = vpop.f32.mrf.mxu0
    %v3467 = vpop.f32.mrf.mxu0
    %3468 = vdwg.mxu0
    %3469 = vmatprep.subr.bf16.mxu0 %v3395
    %3470 = vmatpush1.bf16.msra.mxu0 %v3394
    %3471 = vmatprep.subr.bf16.mxu0 %v3391
    %3472 = vmatpush1.bf16.msra.mxu0 %v3390
    %3473 = vmatprep.subr.bf16.mxu0 %v3387
    %3474 = vmatpush1.bf16.msra.mxu0 %v3386
    %3475 = vmatprep.subr.bf16.mxu0 %v3383
    %3476 = vmatpush1.bf16.msra.mxu0 %v3382
    %3477 = vmatprep.subr.bf16.mxu0 %v3379
    %3478 = vmatpush1.bf16.msra.mxu0 %v3378
    %3479 = vmatprep.subr.bf16.mxu0 %v3375
    %3480 = vmatpush1.bf16.msra.mxu0 %v3374
    %3481 = vmatprep.subr.bf16.mxu0 %v3371
    %3482 = vmatpush1.bf16.msra.mxu0 %v3370
    %3483 = vmatprep.subr.bf16.mxu0 %v3367
    %3484 = vmatpush1.bf16.msra.mxu0 %v3366
    %3485 = vmatprep.subr.bf16.mxu0 0
    %3486 = vmatpush2.bf16.msra.mxu0 0
    %3487 = vmatprep.subr.bf16.mxu0 0
    %3488 = vmatpush2.bf16.msra.mxu0 0
    %3489 = vmatprep.subr.bf16.mxu0 0
    %3490 = vmatpush2.bf16.msra.mxu0 0
    %3491 = vmatprep.subr.bf16.mxu0 0
    %3492 = vmatpush2.bf16.msra.mxu0 0
    %3493 = vmatprep.subr.bf16.mxu0 0
    %3494 = vmatpush2.bf16.msra.mxu0 0
    %3495 = vmatprep.subr.bf16.mxu0 0
    %3496 = vmatpush2.bf16.msra.mxu0 0
    %3497 = vmatprep.subr.bf16.mxu0 0
    %3498 = vmatpush2.bf16.msra.mxu0 0
    %3499 = vmatprep.subr.bf16.mxu0 0
    %3500 = vmatpush2.bf16.msra.mxu0 0
    %3501 = vmatprep.mubr.bf16.mxu0 0
    %3502 = vmatmul.mubr.bf16.gmra.mxu0 %v2719
    %v3503 = vpop.f32.mrf.mxu0
    %v3504 = vadd.f32 0.0, %v3503
    %v3505 = vpop.f32.mrf.mxu0
    %v3506 = vadd.f32 0.0, %v3505
    %v3507 = vpop.f32.mrf.mxu0
    %v3508 = vpop.f32.mrf.mxu0
    %3509 = vdwg.mxu0
    %v3514 = vcombine.low %v3463, %v3465
    %v3515 = vcombine.low %v3504, %v3506
    %v3517 = vunpack.c.l.s4 1966171168
    %v3518 = vunpack.c.0.s8 %v3517
    %v3519 = vlaneseq
    %v3520 = vshrl.u32 %v3519, 7
    %v3521 = vsub.s32 %v3518, %v3520
    %v3522 = vrot.slane %v3514, %v3521
    %v3524 = vunpack.c.l.s4 1966171168
    %v3525 = vunpack.c.0.s8 %v3524
    %v3526 = vlaneseq
    %v3527 = vshrl.u32 %v3526, 7
    %v3528 = vsub.s32 %v3525, %v3527
    %v3529 = vrot.slane %v3515, %v3528
    %v3530 = vcombine.low %v3522, %v3529
    %v3532 = vunpack.c.l.s4 1966171168
    %v3533 = vunpack.c.0.s8 %v3532
    %v3534 = vlaneseq
    %v3535 = vshrl.u32 %v3534, 7
    %v3536 = vsub.s32 %v3533, %v3535
    %v3537 = vrot.slane %v3530, %v3536
    %v3539 = vadd.f32 %v3235, %v3537
    %v3540 = vxor.u32 %v3539, 2147483648
    %v3541 = vmul.f32 %v3540, 1.442695
    %v3542 = vpow.pop %v3541
    %v3543 = vadd.f32 %v3542, 1.0
    %v3544 = vrcp.pop %v3543
    %v3545 = vmul.f32 1.0, %v3544
    %v3547 = vrot.slane %v3539, 1
    %v3549 = vxor.u32 %v3547, 2147483648
    %v3550 = vmul.f32 %v3549, 1.442695
    %v3551 = vpow.pop %v3550
    %v3552 = vadd.f32 %v3551, 1.0
    %v3553 = vrcp.pop %v3552
    %v3554 = vmul.f32 1.0, %v3553
    %v3555 = vrot.slane %v3539, 2
    %v3557 = vtanh.pop %v3555
    %v3558 = vrot.slane %v3539, 3
    %v3560 = vxor.u32 %v3558, 2147483648
    %v3561 = vmul.f32 %v3560, 1.442695
    %v3562 = vpow.pop %v3561
    %v3563 = vadd.f32 %v3562, 1.0
    %v3564 = vrcp.pop %v3563
    %v3565 = vmul.f32 1.0, %v3564
    %v3566 = vmul.f32 %v3554, %v2716
    %v3567 = vmul.f32 %v3545, %v3557
    %v3568 = vadd.f32 %v3566, %v3567
    %v3569 = vtanh.pop %v3568
    %v3570 = vmul.f32 %v3565, %v3569
    %v3571 = vpack.c.bf16 %v3570, %v3570
    %v3572 = vpack.c.bf16 %v3232, %v3232
    %v3573 = vld [vmem:[#allocation3] sm:$0xff]
    %v3574 = vld [vmem:[#allocation3 + $0x8] sm:$0xff]
    %v3575 = vld [vmem:[#allocation3 + $0x10] sm:$0xff]
    %v3576 = vld [vmem:[#allocation3 + $0x18] sm:$0xff]
    %v3577 = vld [vmem:[#allocation3 + $0x20] sm:$0xff]
    %v3578 = vld [vmem:[#allocation3 + $0x28] sm:$0xff]
    %v3579 = vld [vmem:[#allocation3 + $0x30] sm:$0xff]
    %v3580 = vld [vmem:[#allocation3 + $0x38] sm:$0xff]
    %v3581 = vld [vmem:[#allocation3 + $0x40] sm:$0xff]
    %v3582 = vld [vmem:[#allocation3 + $0x48] sm:$0xff]
    %v3583 = vld [vmem:[#allocation3 + $0x50] sm:$0xff]
    %v3584 = vld [vmem:[#allocation3 + $0x58] sm:$0xff]
    %v3585 = vld [vmem:[#allocation3 + $0x60] sm:$0xff]
    %v3586 = vld [vmem:[#allocation3 + $0x68] sm:$0xff]
    %v3587 = vld [vmem:[#allocation3 + $0x70] sm:$0xff]
    %v3588 = vld [vmem:[#allocation3 + $0x78] sm:$0xff]
    %v3589 = vld [vmem:[#allocation3 + $0x80] sm:$0xff]
    %v3590 = vld [vmem:[#allocation3 + $0x88] sm:$0xff]
    %v3591 = vld [vmem:[#allocation3 + $0x90] sm:$0xff]
    %v3592 = vld [vmem:[#allocation3 + $0x98] sm:$0xff]
    %v3593 = vld [vmem:[#allocation3 + $0xa0] sm:$0xff]
    %v3594 = vld [vmem:[#allocation3 + $0xa8] sm:$0xff]
    %v3595 = vld [vmem:[#allocation3 + $0xb0] sm:$0xff]
    %v3596 = vld [vmem:[#allocation3 + $0xb8] sm:$0xff]
    %v3597 = vld [vmem:[#allocation3 + $0xc0] sm:$0xff]
    %v3598 = vld [vmem:[#allocation3 + $0xc8] sm:$0xff]
    %v3599 = vld [vmem:[#allocation3 + $0xd0] sm:$0xff]
    %v3600 = vld [vmem:[#allocation3 + $0xd8] sm:$0xff]
    %v3601 = vld [vmem:[#allocation3 + $0xe0] sm:$0xff]
    %v3602 = vld [vmem:[#allocation3 + $0xe8] sm:$0xff]
    %v3603 = vld [vmem:[#allocation3 + $0xf0] sm:$0xff]
    %v3604 = vld [vmem:[#allocation3 + $0xf8] sm:$0xff]
    %v3605 = vld [vmem:[#allocation3 + $0x100] sm:$0xff]
    %v3606 = vld [vmem:[#allocation3 + $0x108] sm:$0xff]
    %v3607 = vld [vmem:[#allocation3 + $0x110] sm:$0xff]
    %v3608 = vld [vmem:[#allocation3 + $0x118] sm:$0xff]
    %v3609 = vld [vmem:[#allocation3 + $0x120] sm:$0xff]
    %v3610 = vld [vmem:[#allocation3 + $0x128] sm:$0xff]
    %v3611 = vld [vmem:[#allocation3 + $0x130] sm:$0xff]
    %v3612 = vld [vmem:[#allocation3 + $0x138] sm:$0xff]
    %v3613 = vld [vmem:[#allocation3 + $0x140] sm:$0xff]
    %v3614 = vld [vmem:[#allocation3 + $0x148] sm:$0xff]
    %v3615 = vld [vmem:[#allocation3 + $0x150] sm:$0xff]
    %v3616 = vld [vmem:[#allocation3 + $0x158] sm:$0xff]
    %v3617 = vld [vmem:[#allocation3 + $0x160] sm:$0xff]
    %v3618 = vld [vmem:[#allocation3 + $0x168] sm:$0xff]
    %v3619 = vld [vmem:[#allocation3 + $0x170] sm:$0xff]
    %v3620 = vld [vmem:[#allocation3 + $0x178] sm:$0xff]
    %v3621 = vld [vmem:[#allocation3 + $0x180] sm:$0xff]
    %v3622 = vld [vmem:[#allocation3 + $0x188] sm:$0xff]
    %v3623 = vld [vmem:[#allocation3 + $0x190] sm:$0xff]
    %v3624 = vld [vmem:[#allocation3 + $0x198] sm:$0xff]
    %v3625 = vld [vmem:[#allocation3 + $0x1a0] sm:$0xff]
    %v3626 = vld [vmem:[#allocation3 + $0x1a8] sm:$0xff]
    %v3627 = vld [vmem:[#allocation3 + $0x1b0] sm:$0xff]
    %v3628 = vld [vmem:[#allocation3 + $0x1b8] sm:$0xff]
    %v3629 = vld [vmem:[#allocation3 + $0x1c0] sm:$0xff]
    %v3630 = vld [vmem:[#allocation3 + $0x1c8] sm:$0xff]
    %v3631 = vld [vmem:[#allocation3 + $0x1d0] sm:$0xff]
    %v3632 = vld [vmem:[#allocation3 + $0x1d8] sm:$0xff]
    %v3633 = vld [vmem:[#allocation3 + $0x1e0] sm:$0xff]
    %v3634 = vld [vmem:[#allocation3 + $0x1e8] sm:$0xff]
    %v3635 = vld [vmem:[#allocation3 + $0x1f0] sm:$0xff]
    %v3636 = vld [vmem:[#allocation3 + $0x1f8] sm:$0xff]
    %v3637 = vld [vmem:[%s5] sm:$0xf]
    %v3702 = vunpack.c.l.b16 %v3573
    %v3703 = vunpack.c.h.b16 %v3573
    %v3704 = vunpack.c.l.b16 %v3574
    %v3705 = vunpack.c.h.b16 %v3574
    %v3706 = vunpack.c.l.b16 %v3575
    %v3707 = vunpack.c.h.b16 %v3575
    %v3708 = vunpack.c.l.b16 %v3576
    %v3709 = vunpack.c.h.b16 %v3576
    %v3710 = vunpack.c.l.b16 %v3577
    %v3711 = vunpack.c.h.b16 %v3577
    %v3712 = vunpack.c.l.b16 %v3578
    %v3713 = vunpack.c.h.b16 %v3578
    %v3714 = vunpack.c.l.b16 %v3579
    %v3715 = vunpack.c.h.b16 %v3579
    %v3716 = vunpack.c.l.b16 %v3580
    %v3717 = vunpack.c.h.b16 %v3580
    %v3718 = vunpack.c.l.b16 %v3581
    %v3719 = vunpack.c.h.b16 %v3581
    %v3720 = vunpack.c.l.b16 %v3582
    %v3721 = vunpack.c.h.b16 %v3582
    %v3722 = vunpack.c.l.b16 %v3583
    %v3723 = vunpack.c.h.b16 %v3583
    %v3724 = vunpack.c.l.b16 %v3584
    %v3725 = vunpack.c.h.b16 %v3584
    %v3726 = vunpack.c.l.b16 %v3585
    %v3727 = vunpack.c.h.b16 %v3585
    %v3728 = vunpack.c.l.b16 %v3586
    %v3729 = vunpack.c.h.b16 %v3586
    %v3730 = vunpack.c.l.b16 %v3587
    %v3731 = vunpack.c.h.b16 %v3587
    %v3732 = vunpack.c.l.b16 %v3588
    %v3733 = vunpack.c.h.b16 %v3588
    %v3734 = vunpack.c.l.b16 %v3589
    %v3735 = vunpack.c.h.b16 %v3589
    %v3736 = vunpack.c.l.b16 %v3590
    %v3737 = vunpack.c.h.b16 %v3590
    %v3738 = vunpack.c.l.b16 %v3591
    %v3739 = vunpack.c.h.b16 %v3591
    %v3740 = vunpack.c.l.b16 %v3592
    %v3741 = vunpack.c.h.b16 %v3592
    %v3742 = vunpack.c.l.b16 %v3593
    %v3743 = vunpack.c.h.b16 %v3593
    %v3744 = vunpack.c.l.b16 %v3594
    %v3745 = vunpack.c.h.b16 %v3594
    %v3746 = vunpack.c.l.b16 %v3595
    %v3747 = vunpack.c.h.b16 %v3595
    %v3748 = vunpack.c.l.b16 %v3596
    %v3749 = vunpack.c.h.b16 %v3596
    %v3750 = vunpack.c.l.b16 %v3597
    %v3751 = vunpack.c.h.b16 %v3597
    %v3752 = vunpack.c.l.b16 %v3598
    %v3753 = vunpack.c.h.b16 %v3598
    %v3754 = vunpack.c.l.b16 %v3599
    %v3755 = vunpack.c.h.b16 %v3599
    %v3756 = vunpack.c.l.b16 %v3600
    %v3757 = vunpack.c.h.b16 %v3600
    %v3758 = vunpack.c.l.b16 %v3601
    %v3759 = vunpack.c.h.b16 %v3601
    %v3760 = vunpack.c.l.b16 %v3602
    %v3761 = vunpack.c.h.b16 %v3602
    %v3762 = vunpack.c.l.b16 %v3603
    %v3763 = vunpack.c.h.b16 %v3603
    %v3764 = vunpack.c.l.b16 %v3604
    %v3765 = vunpack.c.h.b16 %v3604
    %v3766 = vunpack.c.l.b16 %v3605
    %v3767 = vunpack.c.h.b16 %v3605
    %v3768 = vunpack.c.l.b16 %v3606
    %v3769 = vunpack.c.h.b16 %v3606
    %v3770 = vunpack.c.l.b16 %v3607
    %v3771 = vunpack.c.h.b16 %v3607
    %v3772 = vunpack.c.l.b16 %v3608
    %v3773 = vunpack.c.h.b16 %v3608
    %v3774 = vunpack.c.l.b16 %v3609
    %v3775 = vunpack.c.h.b16 %v3609
    %v3776 = vunpack.c.l.b16 %v3610
    %v3777 = vunpack.c.h.b16 %v3610
    %v3778 = vunpack.c.l.b16 %v3611
    %v3779 = vunpack.c.h.b16 %v3611
    %v3780 = vunpack.c.l.b16 %v3612
    %v3781 = vunpack.c.h.b16 %v3612
    %v3782 = vunpack.c.l.b16 %v3613
    %v3783 = vunpack.c.h.b16 %v3613
    %v3784 = vunpack.c.l.b16 %v3614
    %v3785 = vunpack.c.h.b16 %v3614
    %v3786 = vunpack.c.l.b16 %v3615
    %v3787 = vunpack.c.h.b16 %v3615
    %v3788 = vunpack.c.l.b16 %v3616
    %v3789 = vunpack.c.h.b16 %v3616
    %v3790 = vunpack.c.l.b16 %v3617
    %v3791 = vunpack.c.h.b16 %v3617
    %v3792 = vunpack.c.l.b16 %v3618
    %v3793 = vunpack.c.h.b16 %v3618
    %v3794 = vunpack.c.l.b16 %v3619
    %v3795 = vunpack.c.h.b16 %v3619
    %v3796 = vunpack.c.l.b16 %v3620
    %v3797 = vunpack.c.h.b16 %v3620
    %v3798 = vunpack.c.l.b16 %v3621
    %v3799 = vunpack.c.h.b16 %v3621
    %v3800 = vunpack.c.l.b16 %v3622
    %v3801 = vunpack.c.h.b16 %v3622
    %v3802 = vunpack.c.l.b16 %v3623
    %v3803 = vunpack.c.h.b16 %v3623
    %v3804 = vunpack.c.l.b16 %v3624
    %v3805 = vunpack.c.h.b16 %v3624
    %v3806 = vunpack.c.l.b16 %v3625
    %v3807 = vunpack.c.h.b16 %v3625
    %v3808 = vunpack.c.l.b16 %v3626
    %v3809 = vunpack.c.h.b16 %v3626
    %v3810 = vunpack.c.l.b16 %v3627
    %v3811 = vunpack.c.h.b16 %v3627
    %v3812 = vunpack.c.l.b16 %v3628
    %v3813 = vunpack.c.h.b16 %v3628
    %v3814 = vunpack.c.l.b16 %v3629
    %v3815 = vunpack.c.h.b16 %v3629
    %v3816 = vunpack.c.l.b16 %v3630
    %v3817 = vunpack.c.h.b16 %v3630
    %v3818 = vunpack.c.l.b16 %v3631
    %v3819 = vunpack.c.h.b16 %v3631
    %v3820 = vunpack.c.l.b16 %v3632
    %v3821 = vunpack.c.h.b16 %v3632
    %v3822 = vunpack.c.l.b16 %v3633
    %v3823 = vunpack.c.h.b16 %v3633
    %v3824 = vunpack.c.l.b16 %v3634
    %v3825 = vunpack.c.h.b16 %v3634
    %v3826 = vunpack.c.l.b16 %v3635
    %v3827 = vunpack.c.h.b16 %v3635
    %v3828 = vunpack.c.l.b16 %v3636
    %v3829 = vunpack.c.h.b16 %v3636
    %v3830 = vpack.c.b16 %v3706, %v3702
    %v3831 = vpack.c.b16 %v3707, %v3703
    %v3832 = vpack.c.b16 %v3708, %v3704
    %v3833 = vpack.c.b16 %v3709, %v3705
    %v3834 = vpack.c.b16 %v3714, %v3710
    %v3835 = vpack.c.b16 %v3715, %v3711
    %v3836 = vpack.c.b16 %v3716, %v3712
    %v3837 = vpack.c.b16 %v3717, %v3713
    %v3838 = vpack.c.b16 %v3722, %v3718
    %v3839 = vpack.c.b16 %v3723, %v3719
    %v3840 = vpack.c.b16 %v3724, %v3720
    %v3841 = vpack.c.b16 %v3725, %v3721
    %v3842 = vpack.c.b16 %v3730, %v3726
    %v3843 = vpack.c.b16 %v3731, %v3727
    %v3844 = vpack.c.b16 %v3732, %v3728
    %v3845 = vpack.c.b16 %v3733, %v3729
    %v3846 = vpack.c.b16 %v3738, %v3734
    %v3847 = vpack.c.b16 %v3739, %v3735
    %v3848 = vpack.c.b16 %v3740, %v3736
    %v3849 = vpack.c.b16 %v3741, %v3737
    %v3850 = vpack.c.b16 %v3746, %v3742
    %v3851 = vpack.c.b16 %v3747, %v3743
    %v3852 = vpack.c.b16 %v3748, %v3744
    %v3853 = vpack.c.b16 %v3749, %v3745
    %v3854 = vpack.c.b16 %v3754, %v3750
    %v3855 = vpack.c.b16 %v3755, %v3751
    %v3856 = vpack.c.b16 %v3756, %v3752
    %v3857 = vpack.c.b16 %v3757, %v3753
    %v3858 = vpack.c.b16 %v3762, %v3758
    %v3859 = vpack.c.b16 %v3763, %v3759
    %v3860 = vpack.c.b16 %v3764, %v3760
    %v3861 = vpack.c.b16 %v3765, %v3761
    %v3862 = vpack.c.b16 %v3770, %v3766
    %v3863 = vpack.c.b16 %v3771, %v3767
    %v3864 = vpack.c.b16 %v3772, %v3768
    %v3865 = vpack.c.b16 %v3773, %v3769
    %v3866 = vpack.c.b16 %v3778, %v3774
    %v3867 = vpack.c.b16 %v3779, %v3775
    %v3868 = vpack.c.b16 %v3780, %v3776
    %v3869 = vpack.c.b16 %v3781, %v3777
    %v3870 = vpack.c.b16 %v3786, %v3782
    %v3871 = vpack.c.b16 %v3787, %v3783
    %v3872 = vpack.c.b16 %v3788, %v3784
    %v3873 = vpack.c.b16 %v3789, %v3785
    %v3874 = vpack.c.b16 %v3794, %v3790
    %v3875 = vpack.c.b16 %v3795, %v3791
    %v3876 = vpack.c.b16 %v3796, %v3792
    %v3877 = vpack.c.b16 %v3797, %v3793
    %v3878 = vpack.c.b16 %v3802, %v3798
    %v3879 = vpack.c.b16 %v3803, %v3799
    %v3880 = vpack.c.b16 %v3804, %v3800
    %v3881 = vpack.c.b16 %v3805, %v3801
    %v3882 = vpack.c.b16 %v3810, %v3806
    %v3883 = vpack.c.b16 %v3811, %v3807
    %v3884 = vpack.c.b16 %v3812, %v3808
    %v3885 = vpack.c.b16 %v3813, %v3809
    %v3886 = vpack.c.b16 %v3818, %v3814
    %v3887 = vpack.c.b16 %v3819, %v3815
    %v3888 = vpack.c.b16 %v3820, %v3816
    %v3889 = vpack.c.b16 %v3821, %v3817
    %v3890 = vpack.c.b16 %v3826, %v3822
    %v3891 = vpack.c.b16 %v3827, %v3823
    %v3892 = vpack.c.b16 %v3828, %v3824
    %v3893 = vpack.c.b16 %v3829, %v3825
    %v3959 = vlaneseq
    %v3960 = vshrl.u32 %v3959, 7
    %v3961 = vsub.s32 0, %v3960
    %v3962 = vrot.slane %v3637, %v3961
    %v3963 = vlaneseq
    %v3964 = vshrl.u32 %v3963, 7
    %v3965 = vsub.s32 1, %v3964
    %v3966 = vrot.slane %v3637, %v3965
    %v3967 = vlaneseq
    %v3968 = vshrl.u32 %v3967, 7
    %v3969 = vsub.s32 2, %v3968
    %v3970 = vrot.slane %v3637, %v3969
    %v3971 = vlaneseq
    %v3972 = vshrl.u32 %v3971, 7
    %v3973 = vsub.s32 3, %v3972
    %v3974 = vrot.slane %v3637, %v3973
    %3979 = vmatprep.subr.bf16.mxu0 %v3859
    %3980 = vmatpush1.bf16.msra.mxu0 %v3858
    %3981 = vmatprep.subr.bf16.mxu0 %v3855
    %3982 = vmatpush1.bf16.msra.mxu0 %v3854
    %3983 = vmatprep.subr.bf16.mxu0 %v3851
    %3984 = vmatpush1.bf16.msra.mxu0 %v3850
    %3985 = vmatprep.subr.bf16.mxu0 %v3847
    %3986 = vmatpush1.bf16.msra.mxu0 %v3846
    %3987 = vmatprep.subr.bf16.mxu0 %v3843
    %3988 = vmatpush1.bf16.msra.mxu0 %v3842
    %3989 = vmatprep.subr.bf16.mxu0 %v3839
    %3990 = vmatpush1.bf16.msra.mxu0 %v3838
    %3991 = vmatprep.subr.bf16.mxu0 %v3835
    %3992 = vmatpush1.bf16.msra.mxu0 %v3834
    %3993 = vmatprep.subr.bf16.mxu0 %v3831
    %3994 = vmatpush1.bf16.msra.mxu0 %v3830
    %3995 = vmatprep.subr.bf16.mxu0 %v3891
    %3996 = vmatpush2.bf16.msra.mxu0 %v3890
    %3997 = vmatprep.subr.bf16.mxu0 %v3887
    %3998 = vmatpush2.bf16.msra.mxu0 %v3886
    %3999 = vmatprep.subr.bf16.mxu0 %v3883
    %4000 = vmatpush2.bf16.msra.mxu0 %v3882
    %4001 = vmatprep.subr.bf16.mxu0 %v3879
    %4002 = vmatpush2.bf16.msra.mxu0 %v3878
    %4003 = vmatprep.subr.bf16.mxu0 %v3875
    %4004 = vmatpush2.bf16.msra.mxu0 %v3874
    %4005 = vmatprep.subr.bf16.mxu0 %v3871
    %4006 = vmatpush2.bf16.msra.mxu0 %v3870
    %4007 = vmatprep.subr.bf16.mxu0 %v3867
    %4008 = vmatpush2.bf16.msra.mxu0 %v3866
    %4009 = vmatprep.subr.bf16.mxu0 %v3863
    %4010 = vmatpush2.bf16.msra.mxu0 %v3862
    %4011 = vmatprep.mubr.bf16.mxu0 %v3572
    %4012 = vmatmul.mubr.bf16.gmra.mxu0 %v3571
    %v4013 = vpop.f32.mrf.mxu0
    %v4014 = vadd.f32 %v3962, %v4013
    %v4015 = vpop.f32.mrf.mxu0
    %v4016 = vadd.f32 %v3966, %v4015
    %v4017 = vpop.f32.mrf.mxu0
    %v4018 = vpop.f32.mrf.mxu0
    %4019 = vdwg.mxu0
    %4020 = vmatprep.subr.bf16.mxu0 %v3861
    %4021 = vmatpush1.bf16.msra.mxu0 %v3860
    %4022 = vmatprep.subr.bf16.mxu0 %v3857
    %4023 = vmatpush1.bf16.msra.mxu0 %v3856
    %4024 = vmatprep.subr.bf16.mxu0 %v3853
    %4025 = vmatpush1.bf16.msra.mxu0 %v3852
    %4026 = vmatprep.subr.bf16.mxu0 %v3849
    %4027 = vmatpush1.bf16.msra.mxu0 %v3848
    %4028 = vmatprep.subr.bf16.mxu0 %v3845
    %4029 = vmatpush1.bf16.msra.mxu0 %v3844
    %4030 = vmatprep.subr.bf16.mxu0 %v3841
    %4031 = vmatpush1.bf16.msra.mxu0 %v3840
    %4032 = vmatprep.subr.bf16.mxu0 %v3837
    %4033 = vmatpush1.bf16.msra.mxu0 %v3836
    %4034 = vmatprep.subr.bf16.mxu0 %v3833
    %4035 = vmatpush1.bf16.msra.mxu0 %v3832
    %4036 = vmatprep.subr.bf16.mxu0 %v3893
    %4037 = vmatpush2.bf16.msra.mxu0 %v3892
    %4038 = vmatprep.subr.bf16.mxu0 %v3889
    %4039 = vmatpush2.bf16.msra.mxu0 %v3888
    %4040 = vmatprep.subr.bf16.mxu0 %v3885
    %4041 = vmatpush2.bf16.msra.mxu0 %v3884
    %4042 = vmatprep.subr.bf16.mxu0 %v3881
    %4043 = vmatpush2.bf16.msra.mxu0 %v3880
    %4044 = vmatprep.subr.bf16.mxu0 %v3877
    %4045 = vmatpush2.bf16.msra.mxu0 %v3876
    %4046 = vmatprep.subr.bf16.mxu0 %v3873
    %4047 = vmatpush2.bf16.msra.mxu0 %v3872
    %4048 = vmatprep.subr.bf16.mxu0 %v3869
    %4049 = vmatpush2.bf16.msra.mxu0 %v3868
    %4050 = vmatprep.subr.bf16.mxu0 %v3865
    %4051 = vmatpush2.bf16.msra.mxu0 %v3864
    %4052 = vmatprep.mubr.bf16.mxu0 %v3572
    %4053 = vmatmul.mubr.bf16.gmra.mxu0 %v3571
    %v4054 = vpop.f32.mrf.mxu0
    %v4055 = vadd.f32 %v3970, %v4054
    %v4056 = vpop.f32.mrf.mxu0
    %v4057 = vadd.f32 %v3974, %v4056
    %v4058 = vpop.f32.mrf.mxu0
    %v4059 = vpop.f32.mrf.mxu0
    %4060 = vdwg.mxu0
    %v4061 = vxor.u32 %v4014, 2147483648
    %v4062 = vmul.f32 %v4061, 1.442695
    %v4063 = vpow.pop %v4062
    %v4064 = vadd.f32 %v4063, 1.0
    %v4065 = vrcp.pop %v4064
    %v4066 = vmul.f32 1.0, %v4065
    %v4067 = vxor.u32 %v4016, 2147483648
    %v4068 = vmul.f32 %v4067, 1.442695
    %v4069 = vpow.pop %v4068
    %v4070 = vadd.f32 %v4069, 1.0
    %v4071 = vrcp.pop %v4070
    %v4072 = vmul.f32 1.0, %v4071
    %v4073 = vtanh.pop %v4055
    %v4074 = vxor.u32 %v4057, 2147483648
    %v4075 = vmul.f32 %v4074, 1.442695
    %v4076 = vpow.pop %v4075
    %v4077 = vadd.f32 %v4076, 1.0
    %v4078 = vrcp.pop %v4077
    %v4079 = vmul.f32 1.0, %v4078
    %v4080 = vmul.f32 %v4072, %v3230
    %v4081 = vmul.f32 %v4066, %v4073
    %v4082 = vadd.f32 %v4080, %v4081
    %v4083 = vtanh.pop %v4082
    %v4084 = vmul.f32 %v4079, %v4083
    %4085 = vst [vmem:[#allocation11 + $0x2] sm:$0x1] %v4084
    // Predicated region
    $region38: #{tpu_custom_call.1} parent=1 // pred_check
      _
    $region39: #{tpu_custom_call.1} parent=1 // pred_check_branch
      %4087 = sbr.rel (0) target = $region41
    $region40: #{tpu_custom_call.1} parent=1 // pred_region
      %s4089 = ssub.s32 64, 64
      %4090 = vsyncadd [#allocation7], %s4089
      %s4092 = sshll.u32 [#allocation11], 4
      %s4093 = int_to_ptr.vmem [resolvable:$true] %s4092
      %4095 = dma.vmem_to_hbm [thread:$0]  %s4093, 64, %s6, [#allocation7]
    $region41: #{tpu_custom_call.1} parent=1 // pred_fallthru
      _
    // Predicated region
    $region42: #{tpu_custom_call.1} parent=1 // pred_check
      _
    $region43: #{tpu_custom_call.1} parent=1 // pred_check_branch
      %4097 = sbr.rel (0) target = $region45
    $region44: #{tpu_custom_call.1} parent=1 // pred_region
      %4098 = dma.done [#allocation7], 64
    $region45: #{tpu_custom_call.1} parent=1 // pred_fallthru
      _
    %4099 = vsyncpa [#allocation6], 1
    %4100 = vsyncpa [#allocation9], 1
    %4101 = vsyncpa [#allocation7], 1
  %4102 = vsyncmov [#allocation4]
  %s4103 = vpop.sfrf %4102
  %p4104 = scmp.eq.s32.totalorder %s4103, 0
  %p4105 = pneg %p4104
  %4107 = shalt.err (%p4105)

</llo_original>
